<compile_context>
chip_gen: v5e
topology: v5e:2x2
jax: 0.10.0
libtpu: 0.0.40
codegen_flags: <defaults>
</compile_context>

<pallas_src>
import functools

import jax
import jax.numpy as jnp
import numpy as np
from jax import lax
from jax.experimental import pallas as pl
from jax.experimental.pallas import tpu as pltpu


# ---------------------------------------------------------------------------
# Fused Pallas kernel: whole Bottleneck for one image per grid step
# ---------------------------------------------------------------------------
def _make_bottleneck_kernel(stride, has_downsample):
    def kernel(*refs):
        # --- unpack (layout depends on stride / downsample flags) ----------
        x_ref, w1_ref, b1_ref, w2_ref, b2_ref = refs[:5]
        i = 5
        if stride > 1:
            a_ref = refs[i]; i += 1
        w3_ref, b3_ref = refs[i], refs[i + 1]; i += 2
        if has_downsample:
            wd_ref, bd_ref = refs[i], refs[i + 1]; i += 2
        o_ref, xp_scr = refs[i], refs[i + 1]

        H, W, Cin = x_ref.shape
        Hp, Wp, P = xp_scr.shape
        Ho, Wo, Co = o_ref.shape

        # --- conv1 (1x1 as matmul, BN scale pre-folded) + bias + ReLU ------
        # written into the interior of a zero-padded VMEM scratch so the 3x3
        # conv can read shifted windows with no jnp.pad / HBM round trip.
        x = x_ref[...].reshape(H * W, Cin)
        y1 = jnp.dot(x, w1_ref[...], preferred_element_type=jnp.float32)
        y1 = jnp.maximum(y1 + b1_ref[...], 0.0)
        xp_scr[...] = jnp.zeros((Hp, Wp, P), jnp.float32)
        xp_scr[1:1 + H, 1:1 + W, :] = y1.reshape(H, W, P)

        # --- conv2 (3x3, pad 1): 9 shifted-window MXU matmuls + bias + ReLU
        acc = jnp.zeros((H * W, P), jnp.float32)
        for k in range(9):                       # static loop: 9 MXU pushes
            kh, kw = k // 3, k % 3
            win = xp_scr[kh:kh + H, kw:kw + W, :].reshape(H * W, P)
            acc = acc + jnp.dot(win, w2_ref[k],
                                preferred_element_type=jnp.float32)
        y2 = jnp.maximum(acc + b2_ref[...], 0.0)

        # --- AvgPool(stride) as pooling matmul, conv3 (1x1) + bias ---------
        if stride > 1:
            y2 = jnp.dot(a_ref[...], y2, preferred_element_type=jnp.float32)
        main = jnp.dot(y2, w3_ref[...],
                       preferred_element_type=jnp.float32) + b3_ref[...]

        # --- residual branch: AvgPool + 1x1 conv + BN, or identity ---------
        xin = x.astype(jnp.float32)
        if stride > 1:
            xin = jnp.dot(a_ref[...], xin, preferred_element_type=jnp.float32)
        if has_downsample:
            ident = jnp.dot(xin, wd_ref[...],
                            preferred_element_type=jnp.float32) + bd_ref[...]
        else:                                     # stride == 1 and Cin == Co
            ident = xin

        out = jnp.maximum(main + ident, 0.0)
        o_ref[...] = out.reshape(Ho, Wo, Co).astype(o_ref.dtype)
    return kernel


# ---------------------------------------------------------------------------
# Wrapper: BN folding, weight layout prep, single pallas_call
# ---------------------------------------------------------------------------
def _fold_bn(bn, eps=1e-5):
    s = bn['gamma'] * lax.rsqrt(bn['var'] + eps)
    b = bn['beta'] - bn['mean'] * s
    return s, b


def prepare_kernel_params(tp):
    """torch-layout params -> lane-dense (Cin, Cout) matmul weights with the
    BatchNorm scale folded in; biases kept as (1, C) rows."""
    planes = tp['conv1_w'].shape[0]
    s1, b1 = _fold_bn(tp['bn1'])
    s2, b2 = _fold_bn(tp['bn2'])
    s3, b3 = _fold_bn(tp['bn3'])
    kp = dict(
        w1=jnp.transpose(tp['conv1_w'][:, :, 0, 0], (1, 0)) * s1[None, :],      # (Cin, P)
        b1=b1.reshape(1, -1),
        w2=(jnp.transpose(tp['conv2_w'], (2, 3, 1, 0))
            .reshape(9, planes, planes)) * s2[None, None, :],                    # (9, P, P)
        b2=b2.reshape(1, -1),
        w3=jnp.transpose(tp['conv3_w'][:, :, 0, 0], (1, 0)) * s3[None, :],       # (P, Co)
        b3=b3.reshape(1, -1),
    )
    if 'ds_conv_w' in tp:
        sd, bd = _fold_bn(tp['bn_ds'])
        kp['wd'] = jnp.transpose(tp['ds_conv_w'][:, :, 0, 0], (1, 0)) * sd[None, :]  # (Cin, Co)
        kp['bd'] = bd.reshape(1, -1)
    return kp


def _make_pool_matrix(H, W, s):
    # A[o, i] = 1/(s*s) where output cell o pools input cell i (row-major H,W).
    Ho, Wo = H // s, W // s
    A = np.zeros((Ho * Wo, H * W), np.float32)
    for oh in range(Ho):
        for ow in range(Wo):
            for di in range(s):
                for dj in range(s):
                    A[oh * Wo + ow, (oh * s + di) * W + (ow * s + dj)] = 1.0 / (s * s)
    return jnp.asarray(A)


@functools.partial(jax.jit, static_argnames=("stride",))
def bottleneck_forward(x_nchw, kp, *, stride):
    B, Cin, H, W = x_nchw.shape
    P = kp['w1'].shape[1]
    Co = kp['w3'].shape[1]
    has_ds = 'wd' in kp
    Ho, Wo = H // stride, W // stride

    xh = jnp.transpose(x_nchw, (0, 2, 3, 1))            # boundary NCHW -> NHWC

    operands = [xh, kp['w1'], kp['b1'], kp['w2'], kp['b2']]
    in_specs = [pl.BlockSpec((None, H, W, Cin), lambda b: (b, 0, 0, 0)),
                pl.BlockSpec((Cin, P), lambda b: (0, 0)),
                pl.BlockSpec((1, P), lambda b: (0, 0)),
                pl.BlockSpec((9, P, P), lambda b: (0, 0, 0)),
                pl.BlockSpec((1, P), lambda b: (0, 0))]
    if stride > 1:
        operands.append(_make_pool_matrix(H, W, stride))
        in_specs.append(pl.BlockSpec((Ho * Wo, H * W), lambda b: (0, 0)))
    operands += [kp['w3'], kp['b3']]
    in_specs += [pl.BlockSpec((P, Co), lambda b: (0, 0)),
                 pl.BlockSpec((1, Co), lambda b: (0, 0))]
    if has_ds:
        operands += [kp['wd'], kp['bd']]
        in_specs += [pl.BlockSpec((Cin, Co), lambda b: (0, 0)),
                     pl.BlockSpec((1, Co), lambda b: (0, 0))]

    out_nhwc = pl.pallas_call(
        _make_bottleneck_kernel(stride, has_ds),
        out_shape=jax.ShapeDtypeStruct((B, Ho, Wo, Co), jnp.float32),
        grid=(B,),
        in_specs=in_specs,
        out_specs=pl.BlockSpec((None, Ho, Wo, Co), lambda b: (b, 0, 0, 0)),
        scratch_shapes=[pltpu.VMEM((H + 2, W + 2, P), jnp.float32)],
        compiler_params=pltpu.CompilerParams(
            dimension_semantics=("parallel",),       # batch axis -> megacore on v7x
            vmem_limit_bytes=32 * 1024 * 1024),      # safe budget on v5e/v6e/v7x
    )(*operands)

    return jnp.transpose(out_nhwc, (0, 3, 1, 2))        # back to NCHW


# ---------------------------------------------------------------------------
# Deterministic parameter init (shapes from the PyTorch __init__)
# ---------------------------------------------------------------------------
def _bn_params(k, c):
    k1, k2, k3, k4 = jax.random.split(k, 4)
    return dict(gamma=1.0 + 0.1 * jax.random.normal(k1, (c,), jnp.float32),
                beta=0.05 * jax.random.normal(k2, (c,), jnp.float32),
                mean=0.1 * jax.random.normal(k3, (c,), jnp.float32),
                var=jnp.abs(1.0 + 0.1 * jax.random.normal(k4, (c,), jnp.float32)))


def init_params(key, inplanes, planes, stride, expansion=4):
    co = planes * expansion
    keys = jax.random.split(key, 8)
    p = dict(
        conv1_w=0.1 * jax.random.normal(keys[0], (planes, inplanes, 1, 1), jnp.float32),
        bn1=_bn_params(keys[1], planes),
        conv2_w=0.1 * jax.random.normal(keys[2], (planes, planes, 3, 3), jnp.float32),
        bn2=_bn_params(keys[3], planes),
        conv3_w=0.1 * jax.random.normal(keys[4], (co, planes, 1, 1), jnp.float32),
        bn3=_bn_params(keys[5], co),
    )
    if stride > 1 or inplanes != co:
        p['ds_conv_w'] = 0.1 * jax.random.normal(keys[6], (co, inplanes, 1, 1), jnp.float32)
        p['bn_ds'] = _bn_params(keys[7], co)
    return p


# ---------------------------------------------------------------------------
# Pure-JAX reference (eval-mode BN) for numerical cross-check
# ---------------------------------------------------------------------------
def ref_bottleneck(x, tp, stride, eps=1e-5):
    def bn(y, p):
        s = p['gamma'] / jnp.sqrt(p['var'] + eps)
        b = p['beta'] - p['mean'] * s
        return y * s[None, :, None, None] + b[None, :, None, None]

    def conv(y, w, pad):
        return lax.conv_general_dilated(
            y, w, (1, 1), [(pad, pad), (pad, pad)],
            dimension_numbers=('NCHW', 'OIHW', 'NCHW'))

    def avgpool(y, s):
        if s == 1:
            return y
        B, C, H, W = y.shape
        return y.reshape(B, C, H // s, s, W // s, s).mean(axis=(3, 5))

    out = jax.nn.relu(bn(conv(x, tp['conv1_w'], 0), tp['bn1']))
    out = jax.nn.relu(bn(conv(out, tp['conv2_w'], 1), tp['bn2']))
    out = avgpool(out, stride)
    out = bn(conv(out, tp['conv3_w'], 0), tp['bn3'])
    if 'ds_conv_w' in tp:
        identity = bn(conv(avgpool(x, stride), tp['ds_conv_w'], 0), tp['bn_ds'])
    else:
        identity = x
    return jax.nn.relu(out + identity)


# ---------------------------------------------------------------------------
if __name__ == "__main__":
    B, H, W = 2, 16, 16
    configs = [
        dict(inplanes=64, planes=32, stride=2),    # downsample + avgpool path
        dict(inplanes=128, planes=32, stride=1),   # identity residual path
    ]

    root = jax.random.PRNGKey(0)
    for i, cfg in enumerate(configs):
        kx, kparam = jax.random.split(jax.random.fold_in(root, i))
        x = jax.random.normal(kx, (B, cfg['inplanes'], H, W), jnp.float32)
        tp = init_params(kparam, cfg['inplanes'], cfg['planes'], cfg['stride'])
        kp = prepare_kernel_params(tp)

        out = jax.block_until_ready(bottleneck_forward(x, kp, stride=cfg['stride']))
        ref = jax.block_until_ready(ref_bottleneck(x, tp, cfg['stride']))

        co = cfg['planes'] * 4
        assert out.shape == (B, co, H // cfg['stride'], W // cfg['stride'])
        np.testing.assert_allclose(np.asarray(out), np.asarray(ref),
                                   rtol=1e-2, atol=1e-2)

    print("KERNEL_OK")
</pallas_src>

<mosaic_0001>
module attributes {stable_mosaic.version = 11 : i64} {
  func.func @kernel(%arg0: i32, %arg1: memref<1x16x16x64xf32, #tpu.memory_space<vmem>>, %arg2: memref<64x32xf32, #tpu.memory_space<vmem>>, %arg3: memref<1x32xf32, #tpu.memory_space<vmem>>, %arg4: memref<9x32x32xf32, #tpu.memory_space<vmem>>, %arg5: memref<1x32xf32, #tpu.memory_space<vmem>>, %arg6: memref<64x256xf32, #tpu.memory_space<vmem>>, %arg7: memref<32x128xf32, #tpu.memory_space<vmem>>, %arg8: memref<1x128xf32, #tpu.memory_space<vmem>>, %arg9: memref<64x128xf32, #tpu.memory_space<vmem>>, %arg10: memref<1x128xf32, #tpu.memory_space<vmem>>, %arg11: memref<1x8x8x128xf32, #tpu.memory_space<vmem>>, %arg12: memref<18x18x32xf32, #tpu.memory_space<vmem>>) attributes {dimension_semantics = [#tpu.dimension_semantics<parallel>], iteration_bounds = array<i64: 2>, scalar_prefetch = 0 : i64, scratch_operands = 1 : i64, tpu.core_type = #tpu.core_type<tc>, window_params = [{transform_indices = @transform_0, window_bounds = array<i64: 1, 16, 16, 64>}, {pipeline_mode = #tpu.pipeline_mode<synchronous>, transform_indices = @transform_1, window_bounds = array<i64: 64, 32>}, {pipeline_mode = #tpu.pipeline_mode<synchronous>, transform_indices = @transform_2, window_bounds = array<i64: 1, 32>}, {pipeline_mode = #tpu.pipeline_mode<synchronous>, transform_indices = @transform_3, window_bounds = array<i64: 9, 32, 32>}, {pipeline_mode = #tpu.pipeline_mode<synchronous>, transform_indices = @transform_4, window_bounds = array<i64: 1, 32>}, {pipeline_mode = #tpu.pipeline_mode<synchronous>, transform_indices = @transform_5, window_bounds = array<i64: 64, 256>}, {pipeline_mode = #tpu.pipeline_mode<synchronous>, transform_indices = @transform_6, window_bounds = array<i64: 32, 128>}, {pipeline_mode = #tpu.pipeline_mode<synchronous>, transform_indices = @transform_7, window_bounds = array<i64: 1, 128>}, {pipeline_mode = #tpu.pipeline_mode<synchronous>, transform_indices = @transform_8, window_bounds = array<i64: 64, 128>}, {pipeline_mode = #tpu.pipeline_mode<synchronous>, transform_indices = @transform_9, window_bounds = array<i64: 1, 128>}, {transform_indices = @transform_10, window_bounds = array<i64: 1, 8, 8, 128>}]} {
    %c0 = arith.constant 0 : index
    %c0_0 = arith.constant 0 : index
    %c0_1 = arith.constant 0 : index
    %c0_2 = arith.constant 0 : index
    %0 = vector.load %arg1[%c0, %c0_0, %c0_1, %c0_2] : memref<1x16x16x64xf32, #tpu.memory_space<vmem>>, vector<1x16x16x64xf32>
    %1 = vector.shape_cast %0 : vector<1x16x16x64xf32> to vector<16x16x64xf32>
    %2 = vector.shape_cast %1 : vector<16x16x64xf32> to vector<256x64xf32>
    %c0_3 = arith.constant 0 : index
    %c0_4 = arith.constant 0 : index
    %3 = vector.load %arg2[%c0_3, %c0_4] : memref<64x32xf32, #tpu.memory_space<vmem>>, vector<64x32xf32>
    %cst = arith.constant dense<0.000000e+00> : vector<256x32xf32>
    %4 = tpu.matmul %2, %3, %cst {dimension_numbers = #tpu.dot_dimension_numbers<[1], [0], [0], [1], [0, 0, 1, 1], [], []>} : vector<256x64xf32>, vector<64x32xf32>, vector<256x32xf32> -> vector<256x32xf32>
    %c0_5 = arith.constant 0 : index
    %c0_6 = arith.constant 0 : index
    %5 = vector.load %arg3[%c0_5, %c0_6] : memref<1x32xf32, #tpu.memory_space<vmem>>, vector<1x32xf32>
    %6 = vector.broadcast %5 : vector<1x32xf32> to vector<256x32xf32>
    %7 = arith.addf %4, %6 : vector<256x32xf32>
    %cst_7 = arith.constant 0.000000e+00 : f32
    %8 = vector.broadcast %cst_7 : f32 to vector<256x32xf32>
    %9 = arith.maximumf %7, %8 : vector<256x32xf32>
    %cst_8 = arith.constant 0.000000e+00 : f32
    %10 = vector.broadcast %cst_8 : f32 to vector<18x18x32xf32>
    %c0_9 = arith.constant 0 : index
    %c0_10 = arith.constant 0 : index
    %c0_11 = arith.constant 0 : index
    %11 = vector.load %arg12[%c0_9, %c0_10, %c0_11] : memref<18x18x32xf32, #tpu.memory_space<vmem>>, vector<18x18x32xf32>
    tpu.vector_store %arg12[%c0_9, %c0_10, %c0_11], %10 {strides = array<i32>} : memref<18x18x32xf32, #tpu.memory_space<vmem>>, vector<18x18x32xf32>,
    %12 = vector.shape_cast %9 : vector<256x32xf32> to vector<16x16x32xf32>
    %c1 = arith.constant 1 : index
    %c1_12 = arith.constant 1 : index
    %c0_13 = arith.constant 0 : index
    %13 = vector.load %arg12[%c1, %c1_12, %c0_13] : memref<18x18x32xf32, #tpu.memory_space<vmem>>, vector<16x16x32xf32>
    tpu.vector_store %arg12[%c1, %c1_12, %c0_13], %12 {strides = array<i32>} : memref<18x18x32xf32, #tpu.memory_space<vmem>>, vector<16x16x32xf32>,
    %cst_14 = arith.constant 0.000000e+00 : f32
    %14 = vector.broadcast %cst_14 : f32 to vector<256x32xf32>
    %c0_15 = arith.constant 0 : index
    %c0_16 = arith.constant 0 : index
    %c0_17 = arith.constant 0 : index
    %15 = vector.load %arg12[%c0_15, %c0_16, %c0_17] : memref<18x18x32xf32, #tpu.memory_space<vmem>>, vector<16x16x32xf32>
    %16 = vector.shape_cast %15 : vector<16x16x32xf32> to vector<256x32xf32>
    %c0_18 = arith.constant 0 : index
    %c0_19 = arith.constant 0 : index
    %c0_20 = arith.constant 0 : index
    %17 = vector.load %arg4[%c0_18, %c0_19, %c0_20] : memref<9x32x32xf32, #tpu.memory_space<vmem>>, vector<1x32x32xf32>
    %18 = vector.shape_cast %17 : vector<1x32x32xf32> to vector<32x32xf32>
    %cst_21 = arith.constant dense<0.000000e+00> : vector<256x32xf32>
    %19 = tpu.matmul %16, %18, %cst_21 {dimension_numbers = #tpu.dot_dimension_numbers<[1], [0], [0], [1], [0, 0, 1, 1], [], []>} : vector<256x32xf32>, vector<32x32xf32>, vector<256x32xf32> -> vector<256x32xf32>
    %20 = arith.addf %14, %19 : vector<256x32xf32>
    %c0_22 = arith.constant 0 : index
    %c1_23 = arith.constant 1 : index
    %c0_24 = arith.constant 0 : index
    %21 = vector.load %arg12[%c0_22, %c1_23, %c0_24] : memref<18x18x32xf32, #tpu.memory_space<vmem>>, vector<16x16x32xf32>
    %22 = vector.shape_cast %21 : vector<16x16x32xf32> to vector<256x32xf32>
    %c1_25 = arith.constant 1 : index
    %c0_26 = arith.constant 0 : index
    %c0_27 = arith.constant 0 : index
    %23 = vector.load %arg4[%c1_25, %c0_26, %c0_27] : memref<9x32x32xf32, #tpu.memory_space<vmem>>, vector<1x32x32xf32>
    %24 = vector.shape_cast %23 : vector<1x32x32xf32> to vector<32x32xf32>
    %cst_28 = arith.constant dense<0.000000e+00> : vector<256x32xf32>
    %25 = tpu.matmul %22, %24, %cst_28 {dimension_numbers = #tpu.dot_dimension_numbers<[1], [0], [0], [1], [0, 0, 1, 1], [], []>} : vector<256x32xf32>, vector<32x32xf32>, vector<256x32xf32> -> vector<256x32xf32>
    %26 = arith.addf %20, %25 : vector<256x32xf32>
    %c0_29 = arith.constant 0 : index
    %c2 = arith.constant 2 : index
    %c0_30 = arith.constant 0 : index
    %27 = vector.load %arg12[%c0_29, %c2, %c0_30] : memref<18x18x32xf32, #tpu.memory_space<vmem>>, vector<16x16x32xf32>
    %28 = vector.shape_cast %27 : vector<16x16x32xf32> to vector<256x32xf32>
    %c2_31 = arith.constant 2 : index
    %c0_32 = arith.constant 0 : index
    %c0_33 = arith.constant 0 : index
    %29 = vector.load %arg4[%c2_31, %c0_32, %c0_33] : memref<9x32x32xf32, #tpu.memory_space<vmem>>, vector<1x32x32xf32>
    %30 = vector.shape_cast %29 : vector<1x32x32xf32> to vector<32x32xf32>
    %cst_34 = arith.constant dense<0.000000e+00> : vector<256x32xf32>
    %31 = tpu.matmul %28, %30, %cst_34 {dimension_numbers = #tpu.dot_dimension_numbers<[1], [0], [0], [1], [0, 0, 1, 1], [], []>} : vector<256x32xf32>, vector<32x32xf32>, vector<256x32xf32> -> vector<256x32xf32>
    %32 = arith.addf %26, %31 : vector<256x32xf32>
    %c1_35 = arith.constant 1 : index
    %c0_36 = arith.constant 0 : index
    %c0_37 = arith.constant 0 : index
    %33 = vector.load %arg12[%c1_35, %c0_36, %c0_37] : memref<18x18x32xf32, #tpu.memory_space<vmem>>, vector<16x16x32xf32>
    %34 = vector.shape_cast %33 : vector<16x16x32xf32> to vector<256x32xf32>
    %c3 = arith.constant 3 : index
    %c0_38 = arith.constant 0 : index
    %c0_39 = arith.constant 0 : index
    %35 = vector.load %arg4[%c3, %c0_38, %c0_39] : memref<9x32x32xf32, #tpu.memory_space<vmem>>, vector<1x32x32xf32>
    %36 = vector.shape_cast %35 : vector<1x32x32xf32> to vector<32x32xf32>
    %cst_40 = arith.constant dense<0.000000e+00> : vector<256x32xf32>
    %37 = tpu.matmul %34, %36, %cst_40 {dimension_numbers = #tpu.dot_dimension_numbers<[1], [0], [0], [1], [0, 0, 1, 1], [], []>} : vector<256x32xf32>, vector<32x32xf32>, vector<256x32xf32> -> vector<256x32xf32>
    %38 = arith.addf %32, %37 : vector<256x32xf32>
    %c1_41 = arith.constant 1 : index
    %c1_42 = arith.constant 1 : index
    %c0_43 = arith.constant 0 : index
    %39 = vector.load %arg12[%c1_41, %c1_42, %c0_43] : memref<18x18x32xf32, #tpu.memory_space<vmem>>, vector<16x16x32xf32>
    %40 = vector.shape_cast %39 : vector<16x16x32xf32> to vector<256x32xf32>
    %c4 = arith.constant 4 : index
    %c0_44 = arith.constant 0 : index
    %c0_45 = arith.constant 0 : index
    %41 = vector.load %arg4[%c4, %c0_44, %c0_45] : memref<9x32x32xf32, #tpu.memory_space<vmem>>, vector<1x32x32xf32>
    %42 = vector.shape_cast %41 : vector<1x32x32xf32> to vector<32x32xf32>
    %cst_46 = arith.constant dense<0.000000e+00> : vector<256x32xf32>
    %43 = tpu.matmul %40, %42, %cst_46 {dimension_numbers = #tpu.dot_dimension_numbers<[1], [0], [0], [1], [0, 0, 1, 1], [], []>} : vector<256x32xf32>, vector<32x32xf32>, vector<256x32xf32> -> vector<256x32xf32>
    %44 = arith.addf %38, %43 : vector<256x32xf32>
    %c1_47 = arith.constant 1 : index
    %c2_48 = arith.constant 2 : index
    %c0_49 = arith.constant 0 : index
    %45 = vector.load %arg12[%c1_47, %c2_48, %c0_49] : memref<18x18x32xf32, #tpu.memory_space<vmem>>, vector<16x16x32xf32>
    %46 = vector.shape_cast %45 : vector<16x16x32xf32> to vector<256x32xf32>
    %c5 = arith.constant 5 : index
    %c0_50 = arith.constant 0 : index
    %c0_51 = arith.constant 0 : index
    %47 = vector.load %arg4[%c5, %c0_50, %c0_51] : memref<9x32x32xf32, #tpu.memory_space<vmem>>, vector<1x32x32xf32>
    %48 = vector.shape_cast %47 : vector<1x32x32xf32> to vector<32x32xf32>
    %cst_52 = arith.constant dense<0.000000e+00> : vector<256x32xf32>
    %49 = tpu.matmul %46, %48, %cst_52 {dimension_numbers = #tpu.dot_dimension_numbers<[1], [0], [0], [1], [0, 0, 1, 1], [], []>} : vector<256x32xf32>, vector<32x32xf32>, vector<256x32xf32> -> vector<256x32xf32>
    %50 = arith.addf %44, %49 : vector<256x32xf32>
    %c2_53 = arith.constant 2 : index
    %c0_54 = arith.constant 0 : index
    %c0_55 = arith.constant 0 : index
    %51 = vector.load %arg12[%c2_53, %c0_54, %c0_55] : memref<18x18x32xf32, #tpu.memory_space<vmem>>, vector<16x16x32xf32>
    %52 = vector.shape_cast %51 : vector<16x16x32xf32> to vector<256x32xf32>
    %c6 = arith.constant 6 : index
    %c0_56 = arith.constant 0 : index
    %c0_57 = arith.constant 0 : index
    %53 = vector.load %arg4[%c6, %c0_56, %c0_57] : memref<9x32x32xf32, #tpu.memory_space<vmem>>, vector<1x32x32xf32>
    %54 = vector.shape_cast %53 : vector<1x32x32xf32> to vector<32x32xf32>
    %cst_58 = arith.constant dense<0.000000e+00> : vector<256x32xf32>
    %55 = tpu.matmul %52, %54, %cst_58 {dimension_numbers = #tpu.dot_dimension_numbers<[1], [0], [0], [1], [0, 0, 1, 1], [], []>} : vector<256x32xf32>, vector<32x32xf32>, vector<256x32xf32> -> vector<256x32xf32>
    %56 = arith.addf %50, %55 : vector<256x32xf32>
    %c2_59 = arith.constant 2 : index
    %c1_60 = arith.constant 1 : index
    %c0_61 = arith.constant 0 : index
    %57 = vector.load %arg12[%c2_59, %c1_60, %c0_61] : memref<18x18x32xf32, #tpu.memory_space<vmem>>, vector<16x16x32xf32>
    %58 = vector.shape_cast %57 : vector<16x16x32xf32> to vector<256x32xf32>
    %c7 = arith.constant 7 : index
    %c0_62 = arith.constant 0 : index
    %c0_63 = arith.constant 0 : index
    %59 = vector.load %arg4[%c7, %c0_62, %c0_63] : memref<9x32x32xf32, #tpu.memory_space<vmem>>, vector<1x32x32xf32>
    %60 = vector.shape_cast %59 : vector<1x32x32xf32> to vector<32x32xf32>
    %cst_64 = arith.constant dense<0.000000e+00> : vector<256x32xf32>
    %61 = tpu.matmul %58, %60, %cst_64 {dimension_numbers = #tpu.dot_dimension_numbers<[1], [0], [0], [1], [0, 0, 1, 1], [], []>} : vector<256x32xf32>, vector<32x32xf32>, vector<256x32xf32> -> vector<256x32xf32>
    %62 = arith.addf %56, %61 : vector<256x32xf32>
    %c2_65 = arith.constant 2 : index
    %c2_66 = arith.constant 2 : index
    %c0_67 = arith.constant 0 : index
    %63 = vector.load %arg12[%c2_65, %c2_66, %c0_67] : memref<18x18x32xf32, #tpu.memory_space<vmem>>, vector<16x16x32xf32>
    %64 = vector.shape_cast %63 : vector<16x16x32xf32> to vector<256x32xf32>
    %c8 = arith.constant 8 : index
    %c0_68 = arith.constant 0 : index
    %c0_69 = arith.constant 0 : index
    %65 = vector.load %arg4[%c8, %c0_68, %c0_69] : memref<9x32x32xf32, #tpu.memory_space<vmem>>, vector<1x32x32xf32>
    %66 = vector.shape_cast %65 : vector<1x32x32xf32> to vector<32x32xf32>
    %cst_70 = arith.constant dense<0.000000e+00> : vector<256x32xf32>
    %67 = tpu.matmul %64, %66, %cst_70 {dimension_numbers = #tpu.dot_dimension_numbers<[1], [0], [0], [1], [0, 0, 1, 1], [], []>} : vector<256x32xf32>, vector<32x32xf32>, vector<256x32xf32> -> vector<256x32xf32>
    %68 = arith.addf %62, %67 : vector<256x32xf32>
    %c0_71 = arith.constant 0 : index
    %c0_72 = arith.constant 0 : index
    %69 = vector.load %arg5[%c0_71, %c0_72] : memref<1x32xf32, #tpu.memory_space<vmem>>, vector<1x32xf32>
    %70 = vector.broadcast %69 : vector<1x32xf32> to vector<256x32xf32>
    %71 = arith.addf %68, %70 : vector<256x32xf32>
    %cst_73 = arith.constant 0.000000e+00 : f32
    %72 = vector.broadcast %cst_73 : f32 to vector<256x32xf32>
    %73 = arith.maximumf %71, %72 : vector<256x32xf32>
    %c0_74 = arith.constant 0 : index
    %c0_75 = arith.constant 0 : index
    %74 = vector.load %arg6[%c0_74, %c0_75] : memref<64x256xf32, #tpu.memory_space<vmem>>, vector<64x256xf32>
    %cst_76 = arith.constant dense<0.000000e+00> : vector<64x32xf32>
    %75 = tpu.matmul %74, %73, %cst_76 {dimension_numbers = #tpu.dot_dimension_numbers<[1], [0], [0], [1], [0, 0, 1, 1], [], []>} : vector<64x256xf32>, vector<256x32xf32>, vector<64x32xf32> -> vector<64x32xf32>
    %c0_77 = arith.constant 0 : index
    %c0_78 = arith.constant 0 : index
    %76 = vector.load %arg7[%c0_77, %c0_78] : memref<32x128xf32, #tpu.memory_space<vmem>>, vector<32x128xf32>
    %cst_79 = arith.constant dense<0.000000e+00> : vector<64x128xf32>
    %77 = tpu.matmul %75, %76, %cst_79 {dimension_numbers = #tpu.dot_dimension_numbers<[1], [0], [0], [1], [0, 0, 1, 1], [], []>} : vector<64x32xf32>, vector<32x128xf32>, vector<64x128xf32> -> vector<64x128xf32>
    %c0_80 = arith.constant 0 : index
    %c0_81 = arith.constant 0 : index
    %78 = vector.load %arg8[%c0_80, %c0_81] : memref<1x128xf32, #tpu.memory_space<vmem>>, vector<1x128xf32>
    %79 = vector.broadcast %78 : vector<1x128xf32> to vector<64x128xf32>
    %80 = arith.addf %77, %79 : vector<64x128xf32>
    %c0_82 = arith.constant 0 : index
    %c0_83 = arith.constant 0 : index
    %81 = vector.load %arg6[%c0_82, %c0_83] : memref<64x256xf32, #tpu.memory_space<vmem>>, vector<64x256xf32>
    %cst_84 = arith.constant dense<0.000000e+00> : vector<64x64xf32>
    %82 = tpu.matmul %81, %2, %cst_84 {dimension_numbers = #tpu.dot_dimension_numbers<[1], [0], [0], [1], [0, 0, 1, 1], [], []>} : vector<64x256xf32>, vector<256x64xf32>, vector<64x64xf32> -> vector<64x64xf32>
    %c0_85 = arith.constant 0 : index
    %c0_86 = arith.constant 0 : index
    %83 = vector.load %arg9[%c0_85, %c0_86] : memref<64x128xf32, #tpu.memory_space<vmem>>, vector<64x128xf32>
    %cst_87 = arith.constant dense<0.000000e+00> : vector<64x128xf32>
    %84 = tpu.matmul %82, %83, %cst_87 {dimension_numbers = #tpu.dot_dimension_numbers<[1], [0], [0], [1], [0, 0, 1, 1], [], []>} : vector<64x64xf32>, vector<64x128xf32>, vector<64x128xf32> -> vector<64x128xf32>
    %c0_88 = arith.constant 0 : index
    %c0_89 = arith.constant 0 : index
    %85 = vector.load %arg10[%c0_88, %c0_89] : memref<1x128xf32, #tpu.memory_space<vmem>>, vector<1x128xf32>
    %86 = vector.broadcast %85 : vector<1x128xf32> to vector<64x128xf32>
    %87 = arith.addf %84, %86 : vector<64x128xf32>
    %88 = arith.addf %80, %87 : vector<64x128xf32>
    %cst_90 = arith.constant 0.000000e+00 : f32
    %89 = vector.broadcast %cst_90 : f32 to vector<64x128xf32>
    %90 = arith.maximumf %88, %89 : vector<64x128xf32>
    %91 = vector.shape_cast %90 : vector<64x128xf32> to vector<8x8x128xf32>
    %c0_91 = arith.constant 0 : index
    %c0_92 = arith.constant 0 : index
    %c0_93 = arith.constant 0 : index
    %c0_94 = arith.constant 0 : index
    %92 = vector.load %arg11[%c0_91, %c0_92, %c0_93, %c0_94] : memref<1x8x8x128xf32, #tpu.memory_space<vmem>>, vector<1x8x8x128xf32>
    %93 = vector.shape_cast %92 : vector<1x8x8x128xf32> to vector<8x8x128xf32>
    %94 = vector.shape_cast %91 : vector<8x8x128xf32> to vector<1x8x8x128xf32>
    tpu.vector_store %arg11[%c0_91, %c0_92, %c0_93, %c0_94], %94 {strides = array<i32>} : memref<1x8x8x128xf32, #tpu.memory_space<vmem>>, vector<1x8x8x128xf32>,
    return
  }
  func.func @transform_0(%arg0: i32) -> (i32, i32, i32, i32) {
    %c0_i32 = arith.constant 0 : i32
    %c0_i32_0 = arith.constant 0 : i32
    %c0_i32_1 = arith.constant 0 : i32
    %c0_i32_2 = arith.constant 0 : i32
    return %arg0, %c0_i32, %c0_i32_0, %c0_i32_1 : i32, i32, i32, i32
  }
  func.func @transform_1(%arg0: i32) -> (i32, i32) {
    %c0_i32 = arith.constant 0 : i32
    %c0_i32_0 = arith.constant 0 : i32
    %c0_i32_1 = arith.constant 0 : i32
    return %c0_i32, %c0_i32_0 : i32, i32
  }
  func.func @transform_2(%arg0: i32) -> (i32, i32) {
    %c0_i32 = arith.constant 0 : i32
    %c0_i32_0 = arith.constant 0 : i32
    %c0_i32_1 = arith.constant 0 : i32
    return %c0_i32, %c0_i32_0 : i32, i32
  }
  func.func @transform_3(%arg0: i32) -> (i32, i32, i32) {
    %c0_i32 = arith.constant 0 : i32
    %c0_i32_0 = arith.constant 0 : i32
    %c0_i32_1 = arith.constant 0 : i32
    %c0_i32_2 = arith.constant 0 : i32
    return %c0_i32, %c0_i32_0, %c0_i32_1 : i32, i32, i32
  }
  func.func @transform_4(%arg0: i32) -> (i32, i32) {
    %c0_i32 = arith.constant 0 : i32
    %c0_i32_0 = arith.constant 0 : i32
    %c0_i32_1 = arith.constant 0 : i32
    return %c0_i32, %c0_i32_0 : i32, i32
  }
  func.func @transform_5(%arg0: i32) -> (i32, i32) {
    %c0_i32 = arith.constant 0 : i32
    %c0_i32_0 = arith.constant 0 : i32
    %c0_i32_1 = arith.constant 0 : i32
    return %c0_i32, %c0_i32_0 : i32, i32
  }
  func.func @transform_6(%arg0: i32) -> (i32, i32) {
    %c0_i32 = arith.constant 0 : i32
    %c0_i32_0 = arith.constant 0 : i32
    %c0_i32_1 = arith.constant 0 : i32
    return %c0_i32, %c0_i32_0 : i32, i32
  }
  func.func @transform_7(%arg0: i32) -> (i32, i32) {
    %c0_i32 = arith.constant 0 : i32
    %c0_i32_0 = arith.constant 0 : i32
    %c0_i32_1 = arith.constant 0 : i32
    return %c0_i32, %c0_i32_0 : i32, i32
  }
  func.func @transform_8(%arg0: i32) -> (i32, i32) {
    %c0_i32 = arith.constant 0 : i32
    %c0_i32_0 = arith.constant 0 : i32
    %c0_i32_1 = arith.constant 0 : i32
    return %c0_i32, %c0_i32_0 : i32, i32
  }
  func.func @transform_9(%arg0: i32) -> (i32, i32) {
    %c0_i32 = arith.constant 0 : i32
    %c0_i32_0 = arith.constant 0 : i32
    %c0_i32_1 = arith.constant 0 : i32
    return %c0_i32, %c0_i32_0 : i32, i32
  }
  func.func @transform_10(%arg0: i32) -> (i32, i32, i32, i32) {
    %c0_i32 = arith.constant 0 : i32
    %c0_i32_0 = arith.constant 0 : i32
    %c0_i32_1 = arith.constant 0 : i32
    %c0_i32_2 = arith.constant 0 : i32
    return %arg0, %c0_i32, %c0_i32_0, %c0_i32_1 : i32, i32, i32, i32
  }
}

</mosaic_0001>

<llo_original>
// kernel: bottleneck_forward.1
$region0: #{bottleneck_forward.1}
  #allocation0 [shape = 'u32[]', space=smem, size = 0x4, offset = 0x4, fixed_abs, tag = 'smem constant byte address 0x4 - core index']
  #allocation1 [shape = 'u32[72,128]{1,0:T(1,128)}', space=vmem, size = 0x9000, scoped, tag = 'internal scratch']
  #allocation2 [shape = 'f32[18,18,32]{2,1,0:T(8,128)}', space=vmem, size = 0x36000, scoped, tag = 'scratch operand']
  %s0 = inlined_call_operand.hbm [shape: f32[2,16,16,64], index: 0, kind: input, shape index: {}]
  %s1 = inlined_call_operand.vmem [shape: f32[64,32], index: 1, kind: input, shape index: {}]
  %s2 = inlined_call_operand.vmem [shape: f32[1,32], index: 2, kind: input, shape index: {}]
  %s3 = inlined_call_operand.hbm [shape: f32[9,32,32], index: 3, kind: input, shape index: {}]
  %s4 = inlined_call_operand.vmem [shape: f32[1,32], index: 4, kind: input, shape index: {}]
  %s5 = inlined_call_operand.hbm [shape: f32[64,256], index: 5, kind: input, shape index: {}]
  %s6 = inlined_call_operand.vmem [shape: f32[32,128], index: 6, kind: input, shape index: {}]
  %s7 = inlined_call_operand.vmem [shape: f32[1,128], index: 7, kind: input, shape index: {}]
  %s8 = inlined_call_operand.vmem [shape: f32[64,128], index: 8, kind: input, shape index: {}]
  %s9 = inlined_call_operand.vmem [shape: f32[1,128], index: 9, kind: input, shape index: {}]
  %s10 = inlined_call_operand.hbm [shape: f32[2,8,8,128], index: 10, kind: output, shape index: {}]
  %s11 = sld [smem:[#allocation0]]
  $region85: #{bottleneck_forward.1} parent=0
    _
  %s13 = ssub.s32 1, %s11
  %s14 = scalar_select 0, %s13, %s11
  $region1: #{bottleneck_forward.1} parent=0
    #allocation3 [shape = 'u8[262144]{0}', space=vmem, size = 0x40000, scoped, tag = 'input window, operand 0']
    #allocation4 [shape = 's32[2]{0}', space=sflag, size = 0x8, scoped, tag = 'scoped memory for bottleneck_forward.1']
    #allocation5 [shape = 's32[2]{0}', space=sflag, size = 0x8, scoped, tag = 'scoped memory for bottleneck_forward.1']
    #allocation6 [shape = 'u8[147456]{0}', space=vmem, size = 0x24000, scoped, tag = 'input window, operand 3, single buffered']
    #allocation7 [shape = 's32[1]{0}', space=sflag, size = 0x4, scoped, tag = 'scoped memory for bottleneck_forward.1']
    #allocation8 [shape = 'u8[65536]{0}', space=vmem, size = 0x10000, scoped, tag = 'input window, operand 5, single buffered']
    #allocation9 [shape = 'u8[65536]{0}', space=vmem, size = 0x10000, scoped, tag = 'output window, operand 0']
    %15 = vsyncpa [#allocation4], 0
    %s16 = scalar_lea.sflag [#allocation4], 1
    %17 = vsyncpa %s16, 0
    %18 = vsyncpa [#allocation7], 0
    %19 = vsyncpa [#allocation5], 0
    %s20 = scalar_lea.sflag [#allocation5], 1
    %21 = vsyncpa %s20, 0
    loop: start=0, step=1, limit=4
    $region2: #{bottleneck_forward.1} parent=1 // loop_pre_header
      _
    $region3: #{bottleneck_forward.1} parent=1 // loop_header
      %s23 = sphi 0, %s27
      %p24 = scmp.ge.s32.totalorder %s23, 4
      %s33 = sphi 0, %s35
      %s36 = sphi 0, %s33
      %s37 = sphi 0, %s36
      %s53 = sphi 0, %s37
      %s57 = sphi 0, %s57
      %s59 = sphi 0, %s57
      %s60 = sphi 0, %s59
      %s74 = sphi 0, %s60
      %s78 = sphi 0, %s78
      %s80 = sphi 0, %s78
      %s81 = sphi 0, %s80
      %s95 = sphi 0, %s81
      %s99 = sphi 0, %s99
      %s101 = sphi 0, %s99
      %s102 = sphi 0, %s101
      %s116 = sphi 0, %s102
      %s120 = sphi 0, %s120
      %s122 = sphi 0, %s120
      %s123 = sphi 0, %s122
      %s137 = sphi 0, %s123
      %s141 = sphi 0, %s141
      %s143 = sphi 0, %s141
      %s144 = sphi 0, %s143
      %s158 = sphi 0, %s144
      %s162 = sphi 0, %s162
      %s164 = sphi 0, %s162
      %s165 = sphi 0, %s164
      %s179 = sphi 0, %s165
      %s183 = sphi 0, %s183
      %s185 = sphi 0, %s183
      %s186 = sphi 0, %s185
      %s200 = sphi 0, %s186
      %s204 = sphi 0, %s204
      %s206 = sphi 0, %s204
      %s207 = sphi 0, %s206
      %s221 = sphi 0, %s207
      %s225 = sphi 0, %s225
      %s227 = sphi 0, %s225
      %s228 = sphi 0, %s227
      %s242 = sphi 0, %s228
      %s248 = sphi 0, %s250
      %s251 = sphi 0, %s248
      %s252 = sphi 0, %s251
      %s268 = sphi 0, %s252
    $region4: #{bottleneck_forward.1} parent=1 // loop_header_branch
      %26 = sbr.rel (%p24) target = $region8
    $region5: #{bottleneck_forward.1} parent=1 // loop_body
      %s28 = ssub.s32 %s23, 1
      %s29 = ssub.s32 %s23, 2
      %s30 = sadd.s32 %s23, 1
      %s31 = ssub.s32 %s23, %s30
      %p32 = scmp.eq.s32.totalorder %s31, 0
      %s34 = sadd.s32 %s33, 1
      %s35 = scalar_select %p32, %s33, %s34
      %p38 = pneg %p32
      %p39 = scmp.eq.s32.totalorder %s23, 1
      %p40 = por %p38, %p39
      %p41 = scmp.ne.s32.totalorder %s33, %s36
      %p42 = scmp.eq.s32.totalorder %s23, 0
      %p43 = por %p41, %p42
      %p44 = scmp.ne.s32.totalorder %s33, %s36
      %p45 = scmp.eq.s32.totalorder %s28, 1
      %p46 = por %p44, %p45
      %p47 = scmp.ne.s32.totalorder %s36, %s37
      %p48 = scmp.eq.s32.totalorder %s28, 0
      %p49 = por %p47, %p48
      %p50 = scmp.ne.s32.totalorder %s36, %s37
      %p51 = scmp.eq.s32.totalorder %s29, 1
      %p52 = por %p50, %p51
      %p54 = scmp.ne.s32.totalorder %s37, %s53
      %p55 = scmp.eq.s32.totalorder %s29, 0
      %p56 = por %p54, %p55
      %s58 = sadd.s32 %s57, 1
      %p61 = scmp.eq.s32.totalorder %s23, 1
      %p62 = scmp.ne.s32.totalorder %s57, %s59
      %p63 = scmp.eq.s32.totalorder %s23, 0
      %p64 = por %p62, %p63
      %p65 = scmp.ne.s32.totalorder %s57, %s59
      %p66 = scmp.eq.s32.totalorder %s28, 1
      %p67 = por %p65, %p66
      %p68 = scmp.ne.s32.totalorder %s59, %s60
      %p69 = scmp.eq.s32.totalorder %s28, 0
      %p70 = por %p68, %p69
      %p71 = scmp.ne.s32.totalorder %s59, %s60
      %p72 = scmp.eq.s32.totalorder %s29, 1
      %p73 = por %p71, %p72
      %p75 = scmp.ne.s32.totalorder %s60, %s74
      %p76 = scmp.eq.s32.totalorder %s29, 0
      %p77 = por %p75, %p76
      %s79 = sadd.s32 %s78, 1
      %p82 = scmp.eq.s32.totalorder %s23, 1
      %p83 = scmp.ne.s32.totalorder %s78, %s80
      %p84 = scmp.eq.s32.totalorder %s23, 0
      %p85 = por %p83, %p84
      %p86 = scmp.ne.s32.totalorder %s78, %s80
      %p87 = scmp.eq.s32.totalorder %s28, 1
      %p88 = por %p86, %p87
      %p89 = scmp.ne.s32.totalorder %s80, %s81
      %p90 = scmp.eq.s32.totalorder %s28, 0
      %p91 = por %p89, %p90
      %p92 = scmp.ne.s32.totalorder %s80, %s81
      %p93 = scmp.eq.s32.totalorder %s29, 1
      %p94 = por %p92, %p93
      %p96 = scmp.ne.s32.totalorder %s81, %s95
      %p97 = scmp.eq.s32.totalorder %s29, 0
      %p98 = por %p96, %p97
      %s100 = sadd.s32 %s99, 1
      %p103 = scmp.eq.s32.totalorder %s23, 1
      %p104 = scmp.ne.s32.totalorder %s99, %s101
      %p105 = scmp.eq.s32.totalorder %s23, 0
      %p106 = por %p104, %p105
      %p107 = scmp.ne.s32.totalorder %s99, %s101
      %p108 = scmp.eq.s32.totalorder %s28, 1
      %p109 = por %p107, %p108
      %p110 = scmp.ne.s32.totalorder %s101, %s102
      %p111 = scmp.eq.s32.totalorder %s28, 0
      %p112 = por %p110, %p111
      %p113 = scmp.ne.s32.totalorder %s101, %s102
      %p114 = scmp.eq.s32.totalorder %s29, 1
      %p115 = por %p113, %p114
      %p117 = scmp.ne.s32.totalorder %s102, %s116
      %p118 = scmp.eq.s32.totalorder %s29, 0
      %p119 = por %p117, %p118
      %s121 = sadd.s32 %s120, 1
      %p124 = scmp.eq.s32.totalorder %s23, 1
      %p125 = scmp.ne.s32.totalorder %s120, %s122
      %p126 = scmp.eq.s32.totalorder %s23, 0
      %p127 = por %p125, %p126
      %p128 = scmp.ne.s32.totalorder %s120, %s122
      %p129 = scmp.eq.s32.totalorder %s28, 1
      %p130 = por %p128, %p129
      %p131 = scmp.ne.s32.totalorder %s122, %s123
      %p132 = scmp.eq.s32.totalorder %s28, 0
      %p133 = por %p131, %p132
      %p134 = scmp.ne.s32.totalorder %s122, %s123
      %p135 = scmp.eq.s32.totalorder %s29, 1
      %p136 = por %p134, %p135
      %p138 = scmp.ne.s32.totalorder %s123, %s137
      %p139 = scmp.eq.s32.totalorder %s29, 0
      %p140 = por %p138, %p139
      %s142 = sadd.s32 %s141, 1
      %p145 = scmp.eq.s32.totalorder %s23, 1
      %p146 = scmp.ne.s32.totalorder %s141, %s143
      %p147 = scmp.eq.s32.totalorder %s23, 0
      %p148 = por %p146, %p147
      %p149 = scmp.ne.s32.totalorder %s141, %s143
      %p150 = scmp.eq.s32.totalorder %s28, 1
      %p151 = por %p149, %p150
      %p152 = scmp.ne.s32.totalorder %s143, %s144
      %p153 = scmp.eq.s32.totalorder %s28, 0
      %p154 = por %p152, %p153
      %p155 = scmp.ne.s32.totalorder %s143, %s144
      %p156 = scmp.eq.s32.totalorder %s29, 1
      %p157 = por %p155, %p156
      %p159 = scmp.ne.s32.totalorder %s144, %s158
      %p160 = scmp.eq.s32.totalorder %s29, 0
      %p161 = por %p159, %p160
      %s163 = sadd.s32 %s162, 1
      %p166 = scmp.eq.s32.totalorder %s23, 1
      %p167 = scmp.ne.s32.totalorder %s162, %s164
      %p168 = scmp.eq.s32.totalorder %s23, 0
      %p169 = por %p167, %p168
      %p170 = scmp.ne.s32.totalorder %s162, %s164
      %p171 = scmp.eq.s32.totalorder %s28, 1
      %p172 = por %p170, %p171
      %p173 = scmp.ne.s32.totalorder %s164, %s165
      %p174 = scmp.eq.s32.totalorder %s28, 0
      %p175 = por %p173, %p174
      %p176 = scmp.ne.s32.totalorder %s164, %s165
      %p177 = scmp.eq.s32.totalorder %s29, 1
      %p178 = por %p176, %p177
      %p180 = scmp.ne.s32.totalorder %s165, %s179
      %p181 = scmp.eq.s32.totalorder %s29, 0
      %p182 = por %p180, %p181
      %s184 = sadd.s32 %s183, 1
      %p187 = scmp.eq.s32.totalorder %s23, 1
      %p188 = scmp.ne.s32.totalorder %s183, %s185
      %p189 = scmp.eq.s32.totalorder %s23, 0
      %p190 = por %p188, %p189
      %p191 = scmp.ne.s32.totalorder %s183, %s185
      %p192 = scmp.eq.s32.totalorder %s28, 1
      %p193 = por %p191, %p192
      %p194 = scmp.ne.s32.totalorder %s185, %s186
      %p195 = scmp.eq.s32.totalorder %s28, 0
      %p196 = por %p194, %p195
      %p197 = scmp.ne.s32.totalorder %s185, %s186
      %p198 = scmp.eq.s32.totalorder %s29, 1
      %p199 = por %p197, %p198
      %p201 = scmp.ne.s32.totalorder %s186, %s200
      %p202 = scmp.eq.s32.totalorder %s29, 0
      %p203 = por %p201, %p202
      %s205 = sadd.s32 %s204, 1
      %p208 = scmp.eq.s32.totalorder %s23, 1
      %p209 = scmp.ne.s32.totalorder %s204, %s206
      %p210 = scmp.eq.s32.totalorder %s23, 0
      %p211 = por %p209, %p210
      %p212 = scmp.ne.s32.totalorder %s204, %s206
      %p213 = scmp.eq.s32.totalorder %s28, 1
      %p214 = por %p212, %p213
      %p215 = scmp.ne.s32.totalorder %s206, %s207
      %p216 = scmp.eq.s32.totalorder %s28, 0
      %p217 = por %p215, %p216
      %p218 = scmp.ne.s32.totalorder %s206, %s207
      %p219 = scmp.eq.s32.totalorder %s29, 1
      %p220 = por %p218, %p219
      %p222 = scmp.ne.s32.totalorder %s207, %s221
      %p223 = scmp.eq.s32.totalorder %s29, 0
      %p224 = por %p222, %p223
      %s226 = sadd.s32 %s225, 1
      %p229 = scmp.eq.s32.totalorder %s23, 1
      %p230 = scmp.ne.s32.totalorder %s225, %s227
      %p231 = scmp.eq.s32.totalorder %s23, 0
      %p232 = por %p230, %p231
      %p233 = scmp.ne.s32.totalorder %s225, %s227
      %p234 = scmp.eq.s32.totalorder %s28, 1
      %p235 = por %p233, %p234
      %p236 = scmp.ne.s32.totalorder %s227, %s228
      %p237 = scmp.eq.s32.totalorder %s28, 0
      %p238 = por %p236, %p237
      %p239 = scmp.ne.s32.totalorder %s227, %s228
      %p240 = scmp.eq.s32.totalorder %s29, 1
      %p241 = por %p239, %p240
      %p243 = scmp.ne.s32.totalorder %s228, %s242
      %p244 = scmp.eq.s32.totalorder %s29, 0
      %p245 = por %p243, %p244
      %s246 = ssub.s32 %s23, %s30
      %p247 = scmp.eq.s32.totalorder %s246, 0
      %s249 = sadd.s32 %s248, 1
      %s250 = scalar_select %p247, %s248, %s249
      %p253 = pneg %p247
      %p254 = scmp.eq.s32.totalorder %s23, 1
      %p255 = por %p253, %p254
      %p256 = scmp.ne.s32.totalorder %s248, %s251
      %p257 = scmp.eq.s32.totalorder %s23, 0
      %p258 = por %p256, %p257
      %p259 = scmp.ne.s32.totalorder %s248, %s251
      %p260 = scmp.eq.s32.totalorder %s28, 1
      %p261 = por %p259, %p260
      %p262 = scmp.ne.s32.totalorder %s251, %s252
      %p263 = scmp.eq.s32.totalorder %s28, 0
      %p264 = por %p262, %p263
      %p265 = scmp.ne.s32.totalorder %s251, %s252
      %p266 = scmp.eq.s32.totalorder %s29, 1
      %p267 = por %p265, %p266
      %p269 = scmp.ne.s32.totalorder %s252, %s268
      %p270 = scmp.eq.s32.totalorder %s29, 0
      %p271 = por %p269, %p270
      %p272 = scmp.le.s32.totalorder 1, %s23
      %p273 = scmp.lt.s32.totalorder %s23, 3
      %p274 = pnand %p272, %p273
      %p275 = pneg %p274
      // Predicated region
      $region9: #{bottleneck_forward.1} parent=5 // pred_check
        _
      $region10: #{bottleneck_forward.1} parent=5 // pred_check_branch
        %277 = sbr.rel (%p274) target = $region12
      $region11: #{bottleneck_forward.1} parent=5 // pred_region
        %s278 = ssub.s32 %s23, 1
        // Predicated region
        $region13: #{bottleneck_forward.1} parent=11 // pred_check
          %p279 = pneg %p70
        $region14: #{bottleneck_forward.1} parent=11 // pred_check_branch
          %281 = sbr.rel (%p279) target = $region16
        $region15: #{bottleneck_forward.1} parent=11 // pred_region
          _
        $region16: #{bottleneck_forward.1} parent=11 // pred_fallthru
          _
        // Predicated region
        $region17: #{bottleneck_forward.1} parent=11 // pred_check
          %p282 = pneg %p91
        $region18: #{bottleneck_forward.1} parent=11 // pred_check_branch
          %284 = sbr.rel (%p282) target = $region20
        $region19: #{bottleneck_forward.1} parent=11 // pred_region
          _
        $region20: #{bottleneck_forward.1} parent=11 // pred_fallthru
          _
        // Predicated region
        $region21: #{bottleneck_forward.1} parent=11 // pred_check
          %p285 = pneg %p112
        $region22: #{bottleneck_forward.1} parent=11 // pred_check_branch
          %287 = sbr.rel (%p285) target = $region24
        $region23: #{bottleneck_forward.1} parent=11 // pred_region
          %289 = vsyncadd [#allocation7], 0
          %s290 = sshll.u32 %s3, 4
          %s291 = int_to_ptr.hbm [resolvable:$true] %s290
          %s292 = sshll.u32 [#allocation6], 4
          %s293 = int_to_ptr.vmem [resolvable:$true] %s292
          %298 = dma.hbm_to_vmem [thread:$0]  %s291, 4608, %s293, [#allocation7], 128, 128, 8
        $region24: #{bottleneck_forward.1} parent=11 // pred_fallthru
          _
        // Predicated region
        $region25: #{bottleneck_forward.1} parent=11 // pred_check
          %p299 = pneg %p133
        $region26: #{bottleneck_forward.1} parent=11 // pred_check_branch
          %301 = sbr.rel (%p299) target = $region28
        $region27: #{bottleneck_forward.1} parent=11 // pred_region
          _
        $region28: #{bottleneck_forward.1} parent=11 // pred_fallthru
          _
        // Predicated region
        $region29: #{bottleneck_forward.1} parent=11 // pred_check
          %p302 = pneg %p154
        $region30: #{bottleneck_forward.1} parent=11 // pred_check_branch
          %304 = sbr.rel (%p302) target = $region32
        $region31: #{bottleneck_forward.1} parent=11 // pred_region
          %306 = vsyncadd [#allocation7], 0
          %s307 = sshll.u32 %s5, 4
          %s308 = int_to_ptr.hbm [resolvable:$true] %s307
          %s309 = sshll.u32 [#allocation8], 4
          %s310 = int_to_ptr.vmem [resolvable:$true] %s309
          %315 = dma.hbm_to_vmem [thread:$0]  %s308, 2048, %s310, [#allocation7], 256, 256, 16
        $region32: #{bottleneck_forward.1} parent=11 // pred_fallthru
          _
        // Predicated region
        $region33: #{bottleneck_forward.1} parent=11 // pred_check
          %p316 = pneg %p175
        $region34: #{bottleneck_forward.1} parent=11 // pred_check_branch
          %318 = sbr.rel (%p316) target = $region36
        $region35: #{bottleneck_forward.1} parent=11 // pred_region
          _
        $region36: #{bottleneck_forward.1} parent=11 // pred_fallthru
          _
        // Predicated region
        $region37: #{bottleneck_forward.1} parent=11 // pred_check
          %p319 = pneg %p196
        $region38: #{bottleneck_forward.1} parent=11 // pred_check_branch
          %321 = sbr.rel (%p319) target = $region40
        $region39: #{bottleneck_forward.1} parent=11 // pred_region
          _
        $region40: #{bottleneck_forward.1} parent=11 // pred_fallthru
          _
        // Predicated region
        $region41: #{bottleneck_forward.1} parent=11 // pred_check
          %p322 = pneg %p217
        $region42: #{bottleneck_forward.1} parent=11 // pred_check_branch
          %324 = sbr.rel (%p322) target = $region44
        $region43: #{bottleneck_forward.1} parent=11 // pred_region
          _
        $region44: #{bottleneck_forward.1} parent=11 // pred_fallthru
          _
        // Predicated region
        $region45: #{bottleneck_forward.1} parent=11 // pred_check
          %p325 = pneg %p238
        $region46: #{bottleneck_forward.1} parent=11 // pred_check_branch
          %327 = sbr.rel (%p325) target = $region48
        $region47: #{bottleneck_forward.1} parent=11 // pred_region
          _
        $region48: #{bottleneck_forward.1} parent=11 // pred_fallthru
          _
      $region12: #{bottleneck_forward.1} parent=5 // pred_fallthru
        _
      %p328 = scmp.lt.s32.totalorder %s23, 2
      // Predicated region
      $region49: #{bottleneck_forward.1} parent=5 // pred_check
        %p329 = pneg %p328
      $region50: #{bottleneck_forward.1} parent=5 // pred_check_branch
        %331 = sbr.rel (%p329) target = $region52
      $region51: #{bottleneck_forward.1} parent=5 // pred_region
        // Predicated region
        $region53: #{bottleneck_forward.1} parent=51 // pred_check
          %p332 = pneg %p43
        $region54: #{bottleneck_forward.1} parent=51 // pred_check_branch
          %334 = sbr.rel (%p332) target = $region56
        $region55: #{bottleneck_forward.1} parent=51 // pred_region
          %s335 = sand.u32 %s33, 1
          %s336 = scalar_lea.sflag [#allocation4], %s335
          %s337 = sand.u32 %s33, 1
          %s338 = smul.addr %s337, 256
          %s339 = scalar_lea.vmem [#allocation3], %s338
          %341 = vsyncadd %s336, 0
          %s342 = smul.addr %s23, 32
          %s343 = smul.addr %s342, 8
          %s344 = scalar_lea.hbm %s0, %s343
          %s345 = sshll.u32 %s344, 4
          %s346 = int_to_ptr.hbm [resolvable:$true] %s345
          %s347 = sshll.u32 %s339, 4
          %s348 = int_to_ptr.vmem [resolvable:$true] %s347
          %353 = dma.hbm_to_vmem [thread:$0]  %s346, 4096, %s348, %s336, 128, 128, 8
        $region56: #{bottleneck_forward.1} parent=51 // pred_fallthru
          _
      $region52: #{bottleneck_forward.1} parent=5 // pred_fallthru
        _
      %p354 = scmp.le.s32.totalorder 1, %s23
      %p355 = scmp.lt.s32.totalorder %s23, 3
      %p356 = pnand %p354, %p355
      %p357 = pneg %p356
      // Predicated region
      $region57: #{bottleneck_forward.1} parent=5 // pred_check
        _
      $region58: #{bottleneck_forward.1} parent=5 // pred_check_branch
        %359 = sbr.rel (%p356) target = $region60
      $region59: #{bottleneck_forward.1} parent=5 // pred_region
        %s360 = ssub.s32 %s23, 1
        %s361 = sand.u32 %s36, 1
        %s362 = scalar_lea.sflag [#allocation4], %s361
        %s363 = sand.u32 %s36, 1
        %s364 = smul.addr %s363, 256
        %s365 = scalar_lea.vmem [#allocation3], %s364
        // Predicated region
        $region61: #{bottleneck_forward.1} parent=59 // pred_check
          %p366 = pneg %p49
        $region62: #{bottleneck_forward.1} parent=59 // pred_check_branch
          %368 = sbr.rel (%p366) target = $region64
        $region63: #{bottleneck_forward.1} parent=59 // pred_region
          %370 = dma.done %s362, 4096
        $region64: #{bottleneck_forward.1} parent=59 // pred_fallthru
          _
        // Predicated region
        $region65: #{bottleneck_forward.1} parent=59 // pred_check
          %p371 = pneg %p112
        $region66: #{bottleneck_forward.1} parent=59 // pred_check_branch
          %373 = sbr.rel (%p371) target = $region68
        $region67: #{bottleneck_forward.1} parent=59 // pred_region
          %375 = dma.done [#allocation7], 4608
        $region68: #{bottleneck_forward.1} parent=59 // pred_fallthru
          _
        // Predicated region
        $region69: #{bottleneck_forward.1} parent=59 // pred_check
          %p376 = pneg %p154
        $region70: #{bottleneck_forward.1} parent=59 // pred_check_branch
          %378 = sbr.rel (%p376) target = $region72
        $region71: #{bottleneck_forward.1} parent=59 // pred_region
          %380 = dma.done [#allocation7], 2048
        $region72: #{bottleneck_forward.1} parent=59 // pred_fallthru
          _
        %s381 = sand.u32 %s36, 1
        %s382 = scalar_lea.sflag [#allocation4], %s381
        %s383 = sand.u32 %s36, 1
        %s384 = smul.addr %s383, 256
        %s385 = scalar_lea.vmem [#allocation3], %s384
        %p386 = pneg %p49
        %p387 = pneg %p46
        %p388 = pneg %p70
        %p389 = pneg %p67
        %p390 = pneg %p91
        %p391 = pneg %p88
        %p392 = pneg %p112
        %p393 = pneg %p109
        %p394 = pneg %p133
        %p395 = pneg %p130
        %p396 = pneg %p154
        %p397 = pneg %p151
        %p398 = pneg %p175
        %p399 = pneg %p172
        %p400 = pneg %p196
        %p401 = pneg %p193
        %p402 = pneg %p217
        %p403 = pneg %p214
        %p404 = pneg %p238
        %p405 = pneg %p235
        %p406 = pneg %p264
        %p407 = pneg %p261
        %s408 = sand.u32 %s251, 1
        %s409 = scalar_lea.sflag [#allocation5], %s408
        %s410 = sand.u32 %s251, 1
        %s411 = smul.addr %s410, 64
        %s412 = scalar_lea.vmem [#allocation9], %s411
        %v413 = vld [vmem:[%s365] sm:$0xff]
        %v414 = vld [vmem:[%s365 + $0x8] sm:$0xff]
        %v415 = vld [vmem:[%s365 + $0x10] sm:$0xff]
        %v416 = vld [vmem:[%s365 + $0x18] sm:$0xff]
        %v417 = vld [vmem:[%s365 + $0x20] sm:$0xff]
        %v418 = vld [vmem:[%s365 + $0x28] sm:$0xff]
        %v419 = vld [vmem:[%s365 + $0x30] sm:$0xff]
        %v420 = vld [vmem:[%s365 + $0x38] sm:$0xff]
        %v421 = vld [vmem:[%s365 + $0x40] sm:$0xff]
        %v422 = vld [vmem:[%s365 + $0x48] sm:$0xff]
        %v423 = vld [vmem:[%s365 + $0x50] sm:$0xff]
        %v424 = vld [vmem:[%s365 + $0x58] sm:$0xff]
        %v425 = vld [vmem:[%s365 + $0x60] sm:$0xff]
        %v426 = vld [vmem:[%s365 + $0x68] sm:$0xff]
        %v427 = vld [vmem:[%s365 + $0x70] sm:$0xff]
        %v428 = vld [vmem:[%s365 + $0x78] sm:$0xff]
        %v429 = vld [vmem:[%s365 + $0x80] sm:$0xff]
        %v430 = vld [vmem:[%s365 + $0x88] sm:$0xff]
        %v431 = vld [vmem:[%s365 + $0x90] sm:$0xff]
        %v432 = vld [vmem:[%s365 + $0x98] sm:$0xff]
        %v433 = vld [vmem:[%s365 + $0xa0] sm:$0xff]
        %v434 = vld [vmem:[%s365 + $0xa8] sm:$0xff]
        %v435 = vld [vmem:[%s365 + $0xb0] sm:$0xff]
        %v436 = vld [vmem:[%s365 + $0xb8] sm:$0xff]
        %v437 = vld [vmem:[%s365 + $0xc0] sm:$0xff]
        %v438 = vld [vmem:[%s365 + $0xc8] sm:$0xff]
        %v439 = vld [vmem:[%s365 + $0xd0] sm:$0xff]
        %v440 = vld [vmem:[%s365 + $0xd8] sm:$0xff]
        %v441 = vld [vmem:[%s365 + $0xe0] sm:$0xff]
        %v442 = vld [vmem:[%s365 + $0xe8] sm:$0xff]
        %v443 = vld [vmem:[%s365 + $0xf0] sm:$0xff]
        %v444 = vld [vmem:[%s365 + $0xf8] sm:$0xff]
        %v445 = vld [vmem:[%s1] sm:$0xff]
        %v446 = vld [vmem:[%s1 + $0x8] sm:$0xff]
        %v447 = vld [vmem:[%s1 + $0x10] sm:$0xff]
        %v448 = vld [vmem:[%s1 + $0x18] sm:$0xff]
        %v449 = vld [vmem:[%s1 + $0x20] sm:$0xff]
        %v450 = vld [vmem:[%s1 + $0x28] sm:$0xff]
        %v451 = vld [vmem:[%s1 + $0x30] sm:$0xff]
        %v452 = vld [vmem:[%s1 + $0x38] sm:$0xff]
        %v453 = vld [vmem:[%s2] sm:$0x1]
        %v455 = vperm.slane %v453, 0
        %vm457 = vcmask 523264
        %v459 = vsel %vm457, %v413, 0
        %v462 = vsel %vm457, %v414, 0
        %v465 = vsel %vm457, %v415, 0
        %v468 = vsel %vm457, %v416, 0
        %v471 = vsel %vm457, %v417, 0
        %v474 = vsel %vm457, %v418, 0
        %v477 = vsel %vm457, %v419, 0
        %v480 = vsel %vm457, %v420, 0
        %v483 = vsel %vm457, %v421, 0
        %v486 = vsel %vm457, %v422, 0
        %v489 = vsel %vm457, %v423, 0
        %v492 = vsel %vm457, %v424, 0
        %v495 = vsel %vm457, %v425, 0
        %v498 = vsel %vm457, %v426, 0
        %v501 = vsel %vm457, %v427, 0
        %v504 = vsel %vm457, %v428, 0
        %v507 = vsel %vm457, %v429, 0
        %v510 = vsel %vm457, %v430, 0
        %v513 = vsel %vm457, %v431, 0
        %v516 = vsel %vm457, %v432, 0
        %v519 = vsel %vm457, %v433, 0
        %v522 = vsel %vm457, %v434, 0
        %v525 = vsel %vm457, %v435, 0
        %v528 = vsel %vm457, %v436, 0
        %v531 = vsel %vm457, %v437, 0
        %v534 = vsel %vm457, %v438, 0
        %v537 = vsel %vm457, %v439, 0
        %v540 = vsel %vm457, %v440, 0
        %v543 = vsel %vm457, %v441, 0
        %v546 = vsel %vm457, %v442, 0
        %v549 = vsel %vm457, %v443, 0
        %v552 = vsel %vm457, %v444, 0
        %554 = vmatpush.msra.mxu0 0.0
        %555 = vmatpush.msra.mxu0 0.0
        %556 = vmatpush.msra.mxu0 0.0
        %557 = vmatpush.msra.mxu0 0.0
        %558 = vmatpush.msra.mxu0 0.0
        %559 = vmatpush.msra.mxu0 0.0
        %560 = vmatpush.msra.mxu0 0.0
        %561 = vmatpush.msra.mxu0 0.0
        %562 = vmatpush.msra.mxu0 %v452
        %563 = vmatpush.msra.mxu0 %v451
        %564 = vmatpush.msra.mxu0 %v450
        %565 = vmatpush.msra.mxu0 %v449
        %566 = vmatpush.msra.mxu0 %v448
        %567 = vmatpush.msra.mxu0 %v447
        %568 = vmatpush.msra.mxu0 %v446
        %569 = vmatpush.msra.mxu0 %v445
        %570 = vmatmul.f32.gmra.mxu0 %v459
        %v571 = vpop.f32.mrf.mxu0
        %v572 = vadd.f32 %v455, %v571
        %573 = vmatmul.f32.gmra.mxu0 %v462
        %v574 = vpop.f32.mrf.mxu0
        %v575 = vadd.f32 %v455, %v574
        %576 = vmatmul.f32.gmra.mxu0 %v465
        %v577 = vpop.f32.mrf.mxu0
        %v578 = vadd.f32 %v455, %v577
        %579 = vmatmul.f32.gmra.mxu0 %v468
        %v580 = vpop.f32.mrf.mxu0
        %v581 = vadd.f32 %v455, %v580
        %582 = vmatmul.f32.gmra.mxu0 %v471
        %v583 = vpop.f32.mrf.mxu0
        %v584 = vadd.f32 %v455, %v583
        %585 = vmatmul.f32.gmra.mxu0 %v474
        %v586 = vpop.f32.mrf.mxu0
        %v587 = vadd.f32 %v455, %v586
        %588 = vmatmul.f32.gmra.mxu0 %v477
        %v589 = vpop.f32.mrf.mxu0
        %v590 = vadd.f32 %v455, %v589
        %591 = vmatmul.f32.gmra.mxu0 %v480
        %v592 = vpop.f32.mrf.mxu0
        %v593 = vadd.f32 %v455, %v592
        %594 = vmatmul.f32.gmra.mxu0 %v483
        %v595 = vpop.f32.mrf.mxu0
        %v596 = vadd.f32 %v455, %v595
        %597 = vmatmul.f32.gmra.mxu0 %v486
        %v598 = vpop.f32.mrf.mxu0
        %v599 = vadd.f32 %v455, %v598
        %600 = vmatmul.f32.gmra.mxu0 %v489
        %v601 = vpop.f32.mrf.mxu0
        %v602 = vadd.f32 %v455, %v601
        %603 = vmatmul.f32.gmra.mxu0 %v492
        %v604 = vpop.f32.mrf.mxu0
        %v605 = vadd.f32 %v455, %v604
        %606 = vmatmul.f32.gmra.mxu0 %v495
        %v607 = vpop.f32.mrf.mxu0
        %v608 = vadd.f32 %v455, %v607
        %609 = vmatmul.f32.gmra.mxu0 %v498
        %v610 = vpop.f32.mrf.mxu0
        %v611 = vadd.f32 %v455, %v610
        %612 = vmatmul.f32.gmra.mxu0 %v501
        %v613 = vpop.f32.mrf.mxu0
        %v614 = vadd.f32 %v455, %v613
        %615 = vmatmul.f32.gmra.mxu0 %v504
        %v616 = vpop.f32.mrf.mxu0
        %v617 = vadd.f32 %v455, %v616
        %618 = vmatmul.f32.gmra.mxu0 %v507
        %v619 = vpop.f32.mrf.mxu0
        %v620 = vadd.f32 %v455, %v619
        %621 = vmatmul.f32.gmra.mxu0 %v510
        %v622 = vpop.f32.mrf.mxu0
        %v623 = vadd.f32 %v455, %v622
        %624 = vmatmul.f32.gmra.mxu0 %v513
        %v625 = vpop.f32.mrf.mxu0
        %v626 = vadd.f32 %v455, %v625
        %627 = vmatmul.f32.gmra.mxu0 %v516
        %v628 = vpop.f32.mrf.mxu0
        %v629 = vadd.f32 %v455, %v628
        %630 = vmatmul.f32.gmra.mxu0 %v519
        %v631 = vpop.f32.mrf.mxu0
        %v632 = vadd.f32 %v455, %v631
        %633 = vmatmul.f32.gmra.mxu0 %v522
        %v634 = vpop.f32.mrf.mxu0
        %v635 = vadd.f32 %v455, %v634
        %636 = vmatmul.f32.gmra.mxu0 %v525
        %v637 = vpop.f32.mrf.mxu0
        %v638 = vadd.f32 %v455, %v637
        %639 = vmatmul.f32.gmra.mxu0 %v528
        %v640 = vpop.f32.mrf.mxu0
        %v641 = vadd.f32 %v455, %v640
        %642 = vmatmul.f32.gmra.mxu0 %v531
        %v643 = vpop.f32.mrf.mxu0
        %v644 = vadd.f32 %v455, %v643
        %645 = vmatmul.f32.gmra.mxu0 %v534
        %v646 = vpop.f32.mrf.mxu0
        %v647 = vadd.f32 %v455, %v646
        %648 = vmatmul.f32.gmra.mxu0 %v537
        %v649 = vpop.f32.mrf.mxu0
        %v650 = vadd.f32 %v455, %v649
        %651 = vmatmul.f32.gmra.mxu0 %v540
        %v652 = vpop.f32.mrf.mxu0
        %v653 = vadd.f32 %v455, %v652
        %654 = vmatmul.f32.gmra.mxu0 %v543
        %v655 = vpop.f32.mrf.mxu0
        %v656 = vadd.f32 %v455, %v655
        %657 = vmatmul.f32.gmra.mxu0 %v546
        %v658 = vpop.f32.mrf.mxu0
        %v659 = vadd.f32 %v455, %v658
        %660 = vmatmul.f32.gmra.mxu0 %v549
        %v661 = vpop.f32.mrf.mxu0
        %v662 = vadd.f32 %v455, %v661
        %663 = vmatmul.f32.gmra.mxu0 %v552
        %v664 = vpop.f32.mrf.mxu0
        %v665 = vadd.f32 %v455, %v664
        %666 = vdwg.mxu0
        %v667 = vmax.f32 %v572, 0.0
        %v668 = vmax.f32 %v575, 0.0
        %v669 = vmax.f32 %v578, 0.0
        %v670 = vmax.f32 %v581, 0.0
        %v671 = vmax.f32 %v584, 0.0
        %v672 = vmax.f32 %v587, 0.0
        %v673 = vmax.f32 %v590, 0.0
        %v674 = vmax.f32 %v593, 0.0
        %v675 = vmax.f32 %v596, 0.0
        %v676 = vmax.f32 %v599, 0.0
        %v677 = vmax.f32 %v602, 0.0
        %v678 = vmax.f32 %v605, 0.0
        %v679 = vmax.f32 %v608, 0.0
        %v680 = vmax.f32 %v611, 0.0
        %v681 = vmax.f32 %v614, 0.0
        %v682 = vmax.f32 %v617, 0.0
        %v683 = vmax.f32 %v620, 0.0
        %v684 = vmax.f32 %v623, 0.0
        %v685 = vmax.f32 %v626, 0.0
        %v686 = vmax.f32 %v629, 0.0
        %v687 = vmax.f32 %v632, 0.0
        %v688 = vmax.f32 %v635, 0.0
        %v689 = vmax.f32 %v638, 0.0
        %v690 = vmax.f32 %v641, 0.0
        %v691 = vmax.f32 %v644, 0.0
        %v692 = vmax.f32 %v647, 0.0
        %v693 = vmax.f32 %v650, 0.0
        %v694 = vmax.f32 %v653, 0.0
        %v695 = vmax.f32 %v656, 0.0
        %v696 = vmax.f32 %v659, 0.0
        %v697 = vmax.f32 %v662, 0.0
        %v698 = vmax.f32 %v665, 0.0
        %vm699 = vcmask 261120
        %700 = vst.msk [vmem:[#allocation2] sm:$0xff] %vm699, 0.0
        %701 = vst.msk [vmem:[#allocation2 + $0x8] sm:$0xff] %vm699, 0.0
        %vm702 = vcmask 254976
        %703 = vst.msk [vmem:[#allocation2 + $0x10] sm:$0x3] %vm702, 0.0
        %704 = vst.msk [vmem:[#allocation2 + $0x18] sm:$0xff] %vm699, 0.0
        %705 = vst.msk [vmem:[#allocation2 + $0x20] sm:$0xff] %vm699, 0.0
        %706 = vst.msk [vmem:[#allocation2 + $0x28] sm:$0x3] %vm702, 0.0
        %707 = vst.msk [vmem:[#allocation2 + $0x30] sm:$0xff] %vm699, 0.0
        %708 = vst.msk [vmem:[#allocation2 + $0x38] sm:$0xff] %vm699, 0.0
        %709 = vst.msk [vmem:[#allocation2 + $0x40] sm:$0x3] %vm702, 0.0
        %710 = vst.msk [vmem:[#allocation2 + $0x48] sm:$0xff] %vm699, 0.0
        %711 = vst.msk [vmem:[#allocation2 + $0x50] sm:$0xff] %vm699, 0.0
        %712 = vst.msk [vmem:[#allocation2 + $0x58] sm:$0x3] %vm702, 0.0
        %713 = vst.msk [vmem:[#allocation2 + $0x60] sm:$0xff] %vm699, 0.0
        %714 = vst.msk [vmem:[#allocation2 + $0x68] sm:$0xff] %vm699, 0.0
        %715 = vst.msk [vmem:[#allocation2 + $0x70] sm:$0x3] %vm702, 0.0
        %716 = vst.msk [vmem:[#allocation2 + $0x78] sm:$0xff] %vm699, 0.0
        %717 = vst.msk [vmem:[#allocation2 + $0x80] sm:$0xff] %vm699, 0.0
        %718 = vst.msk [vmem:[#allocation2 + $0x88] sm:$0x3] %vm702, 0.0
        %719 = vst.msk [vmem:[#allocation2 + $0x90] sm:$0xff] %vm699, 0.0
        %720 = vst.msk [vmem:[#allocation2 + $0x98] sm:$0xff] %vm699, 0.0
        %721 = vst.msk [vmem:[#allocation2 + $0xa0] sm:$0x3] %vm702, 0.0
        %722 = vst.msk [vmem:[#allocation2 + $0xa8] sm:$0xff] %vm699, 0.0
        %723 = vst.msk [vmem:[#allocation2 + $0xb0] sm:$0xff] %vm699, 0.0
        %724 = vst.msk [vmem:[#allocation2 + $0xb8] sm:$0x3] %vm702, 0.0
        %725 = vst.msk [vmem:[#allocation2 + $0xc0] sm:$0xff] %vm699, 0.0
        %726 = vst.msk [vmem:[#allocation2 + $0xc8] sm:$0xff] %vm699, 0.0
        %727 = vst.msk [vmem:[#allocation2 + $0xd0] sm:$0x3] %vm702, 0.0
        %728 = vst.msk [vmem:[#allocation2 + $0xd8] sm:$0xff] %vm699, 0.0
        %729 = vst.msk [vmem:[#allocation2 + $0xe0] sm:$0xff] %vm699, 0.0
        %730 = vst.msk [vmem:[#allocation2 + $0xe8] sm:$0x3] %vm702, 0.0
        %731 = vst.msk [vmem:[#allocation2 + $0xf0] sm:$0xff] %vm699, 0.0
        %732 = vst.msk [vmem:[#allocation2 + $0xf8] sm:$0xff] %vm699, 0.0
        %733 = vst.msk [vmem:[#allocation2 + $0x100] sm:$0x3] %vm702, 0.0
        %734 = vst.msk [vmem:[#allocation2 + $0x108] sm:$0xff] %vm699, 0.0
        %735 = vst.msk [vmem:[#allocation2 + $0x110] sm:$0xff] %vm699, 0.0
        %736 = vst.msk [vmem:[#allocation2 + $0x118] sm:$0x3] %vm702, 0.0
        %737 = vst.msk [vmem:[#allocation2 + $0x120] sm:$0xff] %vm699, 0.0
        %738 = vst.msk [vmem:[#allocation2 + $0x128] sm:$0xff] %vm699, 0.0
        %739 = vst.msk [vmem:[#allocation2 + $0x130] sm:$0x3] %vm702, 0.0
        %740 = vst.msk [vmem:[#allocation2 + $0x138] sm:$0xff] %vm699, 0.0
        %741 = vst.msk [vmem:[#allocation2 + $0x140] sm:$0xff] %vm699, 0.0
        %742 = vst.msk [vmem:[#allocation2 + $0x148] sm:$0x3] %vm702, 0.0
        %743 = vst.msk [vmem:[#allocation2 + $0x150] sm:$0xff] %vm699, 0.0
        %744 = vst.msk [vmem:[#allocation2 + $0x158] sm:$0xff] %vm699, 0.0
        %745 = vst.msk [vmem:[#allocation2 + $0x160] sm:$0x3] %vm702, 0.0
        %746 = vst.msk [vmem:[#allocation2 + $0x168] sm:$0xff] %vm699, 0.0
        %747 = vst.msk [vmem:[#allocation2 + $0x170] sm:$0xff] %vm699, 0.0
        %748 = vst.msk [vmem:[#allocation2 + $0x178] sm:$0x3] %vm702, 0.0
        %749 = vst.msk [vmem:[#allocation2 + $0x180] sm:$0xff] %vm699, 0.0
        %750 = vst.msk [vmem:[#allocation2 + $0x188] sm:$0xff] %vm699, 0.0
        %751 = vst.msk [vmem:[#allocation2 + $0x190] sm:$0x3] %vm702, 0.0
        %752 = vst.msk [vmem:[#allocation2 + $0x198] sm:$0xff] %vm699, 0.0
        %753 = vst.msk [vmem:[#allocation2 + $0x1a0] sm:$0xff] %vm699, 0.0
        %754 = vst.msk [vmem:[#allocation2 + $0x1a8] sm:$0x3] %vm702, 0.0
        %s755 = scalar_lea.vmem [#allocation2], 24
        %756 = vst.msk [vmem:[%s755 + $0x1] sm:$0xff] %vm699, %v667
        %757 = vst.msk [vmem:[%s755 + $0x9] sm:$0xff] %vm699, %v668
        %758 = vst.msk [vmem:[%s755 + $0x19] sm:$0xff] %vm699, %v669
        %759 = vst.msk [vmem:[%s755 + $0x21] sm:$0xff] %vm699, %v670
        %760 = vst.msk [vmem:[%s755 + $0x31] sm:$0xff] %vm699, %v671
        %761 = vst.msk [vmem:[%s755 + $0x39] sm:$0xff] %vm699, %v672
        %762 = vst.msk [vmem:[%s755 + $0x49] sm:$0xff] %vm699, %v673
        %763 = vst.msk [vmem:[%s755 + $0x51] sm:$0xff] %vm699, %v674
        %764 = vst.msk [vmem:[%s755 + $0x61] sm:$0xff] %vm699, %v675
        %765 = vst.msk [vmem:[%s755 + $0x69] sm:$0xff] %vm699, %v676
        %766 = vst.msk [vmem:[%s755 + $0x79] sm:$0xff] %vm699, %v677
        %767 = vst.msk [vmem:[%s755 + $0x81] sm:$0xff] %vm699, %v678
        %768 = vst.msk [vmem:[%s755 + $0x91] sm:$0xff] %vm699, %v679
        %769 = vst.msk [vmem:[%s755 + $0x99] sm:$0xff] %vm699, %v680
        %770 = vst.msk [vmem:[%s755 + $0xa9] sm:$0xff] %vm699, %v681
        %771 = vst.msk [vmem:[%s755 + $0xb1] sm:$0xff] %vm699, %v682
        %772 = vst.msk [vmem:[%s755 + $0xc1] sm:$0xff] %vm699, %v683
        %773 = vst.msk [vmem:[%s755 + $0xc9] sm:$0xff] %vm699, %v684
        %774 = vst.msk [vmem:[%s755 + $0xd9] sm:$0xff] %vm699, %v685
        %775 = vst.msk [vmem:[%s755 + $0xe1] sm:$0xff] %vm699, %v686
        %776 = vst.msk [vmem:[%s755 + $0xf1] sm:$0xff] %vm699, %v687
        %777 = vst.msk [vmem:[%s755 + $0xf9] sm:$0xff] %vm699, %v688
        %778 = vst.msk [vmem:[%s755 + $0x109] sm:$0xff] %vm699, %v689
        %779 = vst.msk [vmem:[%s755 + $0x111] sm:$0xff] %vm699, %v690
        %780 = vst.msk [vmem:[%s755 + $0x121] sm:$0xff] %vm699, %v691
        %781 = vst.msk [vmem:[%s755 + $0x129] sm:$0xff] %vm699, %v692
        %782 = vst.msk [vmem:[%s755 + $0x139] sm:$0xff] %vm699, %v693
        %783 = vst.msk [vmem:[%s755 + $0x141] sm:$0xff] %vm699, %v694
        %784 = vst.msk [vmem:[%s755 + $0x151] sm:$0xff] %vm699, %v695
        %785 = vst.msk [vmem:[%s755 + $0x159] sm:$0xff] %vm699, %v696
        %786 = vst.msk [vmem:[%s755 + $0x169] sm:$0xff] %vm699, %v697
        %787 = vst.msk [vmem:[%s755 + $0x171] sm:$0xff] %vm699, %v698
        %v788 = vld [vmem:[#allocation2] sm:$0xff]
        %v789 = vld [vmem:[#allocation2 + $0x8] sm:$0xff]
        %v790 = vld [vmem:[#allocation2 + $0x18] sm:$0xff]
        %v791 = vld [vmem:[#allocation2 + $0x20] sm:$0xff]
        %v792 = vld [vmem:[#allocation2 + $0x30] sm:$0xff]
        %v793 = vld [vmem:[#allocation2 + $0x38] sm:$0xff]
        %v794 = vld [vmem:[#allocation2 + $0x48] sm:$0xff]
        %v795 = vld [vmem:[#allocation2 + $0x50] sm:$0xff]
        %v796 = vld [vmem:[#allocation2 + $0x60] sm:$0xff]
        %v797 = vld [vmem:[#allocation2 + $0x68] sm:$0xff]
        %v798 = vld [vmem:[#allocation2 + $0x78] sm:$0xff]
        %v799 = vld [vmem:[#allocation2 + $0x80] sm:$0xff]
        %v800 = vld [vmem:[#allocation2 + $0x90] sm:$0xff]
        %v801 = vld [vmem:[#allocation2 + $0x98] sm:$0xff]
        %v802 = vld [vmem:[#allocation2 + $0xa8] sm:$0xff]
        %v803 = vld [vmem:[#allocation2 + $0xb0] sm:$0xff]
        %v804 = vld [vmem:[#allocation2 + $0xc0] sm:$0xff]
        %v805 = vld [vmem:[#allocation2 + $0xc8] sm:$0xff]
        %v806 = vld [vmem:[#allocation2 + $0xd8] sm:$0xff]
        %v807 = vld [vmem:[#allocation2 + $0xe0] sm:$0xff]
        %v808 = vld [vmem:[#allocation2 + $0xf0] sm:$0xff]
        %v809 = vld [vmem:[#allocation2 + $0xf8] sm:$0xff]
        %v810 = vld [vmem:[#allocation2 + $0x108] sm:$0xff]
        %v811 = vld [vmem:[#allocation2 + $0x110] sm:$0xff]
        %v812 = vld [vmem:[#allocation2 + $0x120] sm:$0xff]
        %v813 = vld [vmem:[#allocation2 + $0x128] sm:$0xff]
        %v814 = vld [vmem:[#allocation2 + $0x138] sm:$0xff]
        %v815 = vld [vmem:[#allocation2 + $0x140] sm:$0xff]
        %v816 = vld [vmem:[#allocation2 + $0x150] sm:$0xff]
        %v817 = vld [vmem:[#allocation2 + $0x158] sm:$0xff]
        %v818 = vld [vmem:[#allocation2 + $0x168] sm:$0xff]
        %v819 = vld [vmem:[#allocation2 + $0x170] sm:$0xff]
        %v820 = vld [vmem:[#allocation6] sm:$0xff]
        %v821 = vld [vmem:[#allocation6 + $0x8] sm:$0xff]
        %v822 = vld [vmem:[#allocation6 + $0x10] sm:$0xff]
        %v823 = vld [vmem:[#allocation6 + $0x18] sm:$0xff]
        %v824 = vld [vmem:[#allocation2 + $0x1] sm:$0xff]
        %v825 = vld [vmem:[#allocation2 + $0x9] sm:$0xff]
        %v826 = vld [vmem:[#allocation2 + $0x19] sm:$0xff]
        %v827 = vld [vmem:[#allocation2 + $0x21] sm:$0xff]
        %v828 = vld [vmem:[#allocation2 + $0x31] sm:$0xff]
        %v829 = vld [vmem:[#allocation2 + $0x39] sm:$0xff]
        %v830 = vld [vmem:[#allocation2 + $0x49] sm:$0xff]
        %v831 = vld [vmem:[#allocation2 + $0x51] sm:$0xff]
        %v832 = vld [vmem:[#allocation2 + $0x61] sm:$0xff]
        %v833 = vld [vmem:[#allocation2 + $0x69] sm:$0xff]
        %v834 = vld [vmem:[#allocation2 + $0x79] sm:$0xff]
        %v835 = vld [vmem:[#allocation2 + $0x81] sm:$0xff]
        %v836 = vld [vmem:[#allocation2 + $0x91] sm:$0xff]
        %v837 = vld [vmem:[#allocation2 + $0x99] sm:$0xff]
        %v838 = vld [vmem:[#allocation2 + $0xa9] sm:$0xff]
        %v839 = vld [vmem:[#allocation2 + $0xb1] sm:$0xff]
        %v840 = vld [vmem:[#allocation2 + $0xc1] sm:$0xff]
        %v841 = vld [vmem:[#allocation2 + $0xc9] sm:$0xff]
        %v842 = vld [vmem:[#allocation2 + $0xd9] sm:$0xff]
        %v843 = vld [vmem:[#allocation2 + $0xe1] sm:$0xff]
        %v844 = vld [vmem:[#allocation2 + $0xf1] sm:$0xff]
        %v845 = vld [vmem:[#allocation2 + $0xf9] sm:$0xff]
        %v846 = vld [vmem:[#allocation2 + $0x109] sm:$0xff]
        %v847 = vld [vmem:[#allocation2 + $0x111] sm:$0xff]
        %v848 = vld [vmem:[#allocation2 + $0x121] sm:$0xff]
        %v849 = vld [vmem:[#allocation2 + $0x129] sm:$0xff]
        %v850 = vld [vmem:[#allocation2 + $0x139] sm:$0xff]
        %v851 = vld [vmem:[#allocation2 + $0x141] sm:$0xff]
        %v852 = vld [vmem:[#allocation2 + $0x151] sm:$0xff]
        %v853 = vld [vmem:[#allocation2 + $0x159] sm:$0xff]
        %v854 = vld [vmem:[#allocation2 + $0x169] sm:$0xff]
        %v855 = vld [vmem:[#allocation2 + $0x171] sm:$0xff]
        %s856 = scalar_lea.vmem [#allocation6], 32
        %v857 = vld [vmem:[%s856] sm:$0xff]
        %v858 = vld [vmem:[%s856 + $0x8] sm:$0xff]
        %v859 = vld [vmem:[%s856 + $0x10] sm:$0xff]
        %v860 = vld [vmem:[%s856 + $0x18] sm:$0xff]
        %v862 = vsel %vm699, %v824, 0
        %v865 = vsel %vm699, %v825, 0
        %v868 = vsel %vm699, %v826, 0
        %v871 = vsel %vm699, %v827, 0
        %v874 = vsel %vm699, %v828, 0
        %v877 = vsel %vm699, %v829, 0
        %v880 = vsel %vm699, %v830, 0
        %v883 = vsel %vm699, %v831, 0
        %v886 = vsel %vm699, %v832, 0
        %v889 = vsel %vm699, %v833, 0
        %v892 = vsel %vm699, %v834, 0
        %v895 = vsel %vm699, %v835, 0
        %v898 = vsel %vm699, %v836, 0
        %v901 = vsel %vm699, %v837, 0
        %v904 = vsel %vm699, %v838, 0
        %v907 = vsel %vm699, %v839, 0
        %v910 = vsel %vm699, %v840, 0
        %v913 = vsel %vm699, %v841, 0
        %v916 = vsel %vm699, %v842, 0
        %v919 = vsel %vm699, %v843, 0
        %v922 = vsel %vm699, %v844, 0
        %v925 = vsel %vm699, %v845, 0
        %v928 = vsel %vm699, %v846, 0
        %v931 = vsel %vm699, %v847, 0
        %v934 = vsel %vm699, %v848, 0
        %v937 = vsel %vm699, %v849, 0
        %v940 = vsel %vm699, %v850, 0
        %v943 = vsel %vm699, %v851, 0
        %v946 = vsel %vm699, %v852, 0
        %v949 = vsel %vm699, %v853, 0
        %v952 = vsel %vm699, %v854, 0
        %v955 = vsel %vm699, %v855, 0
        %957 = vmatpush.msra.mxu0 0.0
        %958 = vmatpush.msra.mxu0 0.0
        %959 = vmatpush.msra.mxu0 0.0
        %960 = vmatpush.msra.mxu0 0.0
        %961 = vmatpush.msra.mxu0 0.0
        %962 = vmatpush.msra.mxu0 0.0
        %963 = vmatpush.msra.mxu0 0.0
        %964 = vmatpush.msra.mxu0 0.0
        %965 = vmatpush.msra.mxu0 0.0
        %966 = vmatpush.msra.mxu0 0.0
        %967 = vmatpush.msra.mxu0 0.0
        %968 = vmatpush.msra.mxu0 0.0
        %969 = vmatpush.msra.mxu0 %v860
        %970 = vmatpush.msra.mxu0 %v859
        %971 = vmatpush.msra.mxu0 %v858
        %972 = vmatpush.msra.mxu0 %v857
        %973 = vmatmul.f32.gmra.mxu0 %v862
        %v974 = vpop.f32.mrf.mxu0
        %v975 = vadd.f32 0.0, %v974
        %976 = vmatmul.f32.gmra.mxu0 %v865
        %v977 = vpop.f32.mrf.mxu0
        %v978 = vadd.f32 0.0, %v977
        %979 = vmatmul.f32.gmra.mxu0 %v868
        %v980 = vpop.f32.mrf.mxu0
        %v981 = vadd.f32 0.0, %v980
        %982 = vmatmul.f32.gmra.mxu0 %v871
        %v983 = vpop.f32.mrf.mxu0
        %v984 = vadd.f32 0.0, %v983
        %985 = vmatmul.f32.gmra.mxu0 %v874
        %v986 = vpop.f32.mrf.mxu0
        %v987 = vadd.f32 0.0, %v986
        %988 = vmatmul.f32.gmra.mxu0 %v877
        %v989 = vpop.f32.mrf.mxu0
        %v990 = vadd.f32 0.0, %v989
        %991 = vmatmul.f32.gmra.mxu0 %v880
        %v992 = vpop.f32.mrf.mxu0
        %v993 = vadd.f32 0.0, %v992
        %994 = vmatmul.f32.gmra.mxu0 %v883
        %v995 = vpop.f32.mrf.mxu0
        %v996 = vadd.f32 0.0, %v995
        %997 = vmatmul.f32.gmra.mxu0 %v886
        %v998 = vpop.f32.mrf.mxu0
        %v999 = vadd.f32 0.0, %v998
        %1000 = vmatmul.f32.gmra.mxu0 %v889
        %v1001 = vpop.f32.mrf.mxu0
        %v1002 = vadd.f32 0.0, %v1001
        %1003 = vmatmul.f32.gmra.mxu0 %v892
        %v1004 = vpop.f32.mrf.mxu0
        %v1005 = vadd.f32 0.0, %v1004
        %1006 = vmatmul.f32.gmra.mxu0 %v895
        %v1007 = vpop.f32.mrf.mxu0
        %v1008 = vadd.f32 0.0, %v1007
        %1009 = vmatmul.f32.gmra.mxu0 %v898
        %v1010 = vpop.f32.mrf.mxu0
        %v1011 = vadd.f32 0.0, %v1010
        %1012 = vmatmul.f32.gmra.mxu0 %v901
        %v1013 = vpop.f32.mrf.mxu0
        %v1014 = vadd.f32 0.0, %v1013
        %1015 = vmatmul.f32.gmra.mxu0 %v904
        %v1016 = vpop.f32.mrf.mxu0
        %v1017 = vadd.f32 0.0, %v1016
        %1018 = vmatmul.f32.gmra.mxu0 %v907
        %v1019 = vpop.f32.mrf.mxu0
        %v1020 = vadd.f32 0.0, %v1019
        %1021 = vmatmul.f32.gmra.mxu0 %v910
        %v1022 = vpop.f32.mrf.mxu0
        %v1023 = vadd.f32 0.0, %v1022
        %1024 = vmatmul.f32.gmra.mxu0 %v913
        %v1025 = vpop.f32.mrf.mxu0
        %v1026 = vadd.f32 0.0, %v1025
        %1027 = vmatmul.f32.gmra.mxu0 %v916
        %v1028 = vpop.f32.mrf.mxu0
        %v1029 = vadd.f32 0.0, %v1028
        %1030 = vmatmul.f32.gmra.mxu0 %v919
        %v1031 = vpop.f32.mrf.mxu0
        %v1032 = vadd.f32 0.0, %v1031
        %1033 = vmatmul.f32.gmra.mxu0 %v922
        %v1034 = vpop.f32.mrf.mxu0
        %v1035 = vadd.f32 0.0, %v1034
        %1036 = vmatmul.f32.gmra.mxu0 %v925
        %v1037 = vpop.f32.mrf.mxu0
        %v1038 = vadd.f32 0.0, %v1037
        %1039 = vmatmul.f32.gmra.mxu0 %v928
        %v1040 = vpop.f32.mrf.mxu0
        %v1041 = vadd.f32 0.0, %v1040
        %1042 = vmatmul.f32.gmra.mxu0 %v931
        %v1043 = vpop.f32.mrf.mxu0
        %v1044 = vadd.f32 0.0, %v1043
        %1045 = vmatmul.f32.gmra.mxu0 %v934
        %v1046 = vpop.f32.mrf.mxu0
        %v1047 = vadd.f32 0.0, %v1046
        %1048 = vmatmul.f32.gmra.mxu0 %v937
        %v1049 = vpop.f32.mrf.mxu0
        %v1050 = vadd.f32 0.0, %v1049
        %1051 = vmatmul.f32.gmra.mxu0 %v940
        %v1052 = vpop.f32.mrf.mxu0
        %v1053 = vadd.f32 0.0, %v1052
        %1054 = vmatmul.f32.gmra.mxu0 %v943
        %v1055 = vpop.f32.mrf.mxu0
        %v1056 = vadd.f32 0.0, %v1055
        %1057 = vmatmul.f32.gmra.mxu0 %v946
        %v1058 = vpop.f32.mrf.mxu0
        %v1059 = vadd.f32 0.0, %v1058
        %1060 = vmatmul.f32.gmra.mxu0 %v949
        %v1061 = vpop.f32.mrf.mxu0
        %v1062 = vadd.f32 0.0, %v1061
        %1063 = vmatmul.f32.gmra.mxu0 %v952
        %v1064 = vpop.f32.mrf.mxu0
        %v1065 = vadd.f32 0.0, %v1064
        %1066 = vmatmul.f32.gmra.mxu0 %v955
        %v1067 = vpop.f32.mrf.mxu0
        %v1068 = vadd.f32 0.0, %v1067
        %1069 = vdwg.mxu0
        %v1071 = vsel %vm699, %v788, 0
        %v1074 = vsel %vm699, %v789, 0
        %v1077 = vsel %vm699, %v790, 0
        %v1080 = vsel %vm699, %v791, 0
        %v1083 = vsel %vm699, %v792, 0
        %v1086 = vsel %vm699, %v793, 0
        %v1089 = vsel %vm699, %v794, 0
        %v1092 = vsel %vm699, %v795, 0
        %v1095 = vsel %vm699, %v796, 0
        %v1098 = vsel %vm699, %v797, 0
        %v1101 = vsel %vm699, %v798, 0
        %v1104 = vsel %vm699, %v799, 0
        %v1107 = vsel %vm699, %v800, 0
        %v1110 = vsel %vm699, %v801, 0
        %v1113 = vsel %vm699, %v802, 0
        %v1116 = vsel %vm699, %v803, 0
        %v1119 = vsel %vm699, %v804, 0
        %v1122 = vsel %vm699, %v805, 0
        %v1125 = vsel %vm699, %v806, 0
        %v1128 = vsel %vm699, %v807, 0
        %v1131 = vsel %vm699, %v808, 0
        %v1134 = vsel %vm699, %v809, 0
        %v1137 = vsel %vm699, %v810, 0
        %v1140 = vsel %vm699, %v811, 0
        %v1143 = vsel %vm699, %v812, 0
        %v1146 = vsel %vm699, %v813, 0
        %v1149 = vsel %vm699, %v814, 0
        %v1152 = vsel %vm699, %v815, 0
        %v1155 = vsel %vm699, %v816, 0
        %v1158 = vsel %vm699, %v817, 0
        %v1161 = vsel %vm699, %v818, 0
        %v1164 = vsel %vm699, %v819, 0
        %1166 = vmatpush.msra.mxu0 0.0
        %1167 = vmatpush.msra.mxu0 0.0
        %1168 = vmatpush.msra.mxu0 0.0
        %1169 = vmatpush.msra.mxu0 0.0
        %1170 = vmatpush.msra.mxu0 0.0
        %1171 = vmatpush.msra.mxu0 0.0
        %1172 = vmatpush.msra.mxu0 0.0
        %1173 = vmatpush.msra.mxu0 0.0
        %1174 = vmatpush.msra.mxu0 0.0
        %1175 = vmatpush.msra.mxu0 0.0
        %1176 = vmatpush.msra.mxu0 0.0
        %1177 = vmatpush.msra.mxu0 0.0
        %1178 = vmatpush.msra.mxu0 %v823
        %1179 = vmatpush.msra.mxu0 %v822
        %1180 = vmatpush.msra.mxu0 %v821
        %1181 = vmatpush.msra.mxu0 %v820
        %1182 = vmatmul.f32.gmra.mxu0 %v1071
        %v1183 = vpop.f32.mrf.mxu0
        %v1184 = vadd.f32 %v975, %v1183
        %1185 = vmatmul.f32.gmra.mxu0 %v1074
        %v1186 = vpop.f32.mrf.mxu0
        %v1187 = vadd.f32 %v978, %v1186
        %1188 = vmatmul.f32.gmra.mxu0 %v1077
        %v1189 = vpop.f32.mrf.mxu0
        %v1190 = vadd.f32 %v981, %v1189
        %1191 = vmatmul.f32.gmra.mxu0 %v1080
        %v1192 = vpop.f32.mrf.mxu0
        %v1193 = vadd.f32 %v984, %v1192
        %1194 = vmatmul.f32.gmra.mxu0 %v1083
        %v1195 = vpop.f32.mrf.mxu0
        %v1196 = vadd.f32 %v987, %v1195
        %1197 = vmatmul.f32.gmra.mxu0 %v1086
        %v1198 = vpop.f32.mrf.mxu0
        %v1199 = vadd.f32 %v990, %v1198
        %1200 = vmatmul.f32.gmra.mxu0 %v1089
        %v1201 = vpop.f32.mrf.mxu0
        %v1202 = vadd.f32 %v993, %v1201
        %1203 = vmatmul.f32.gmra.mxu0 %v1092
        %v1204 = vpop.f32.mrf.mxu0
        %v1205 = vadd.f32 %v996, %v1204
        %1206 = vmatmul.f32.gmra.mxu0 %v1095
        %v1207 = vpop.f32.mrf.mxu0
        %v1208 = vadd.f32 %v999, %v1207
        %1209 = vmatmul.f32.gmra.mxu0 %v1098
        %v1210 = vpop.f32.mrf.mxu0
        %v1211 = vadd.f32 %v1002, %v1210
        %1212 = vmatmul.f32.gmra.mxu0 %v1101
        %v1213 = vpop.f32.mrf.mxu0
        %v1214 = vadd.f32 %v1005, %v1213
        %1215 = vmatmul.f32.gmra.mxu0 %v1104
        %v1216 = vpop.f32.mrf.mxu0
        %v1217 = vadd.f32 %v1008, %v1216
        %1218 = vmatmul.f32.gmra.mxu0 %v1107
        %v1219 = vpop.f32.mrf.mxu0
        %v1220 = vadd.f32 %v1011, %v1219
        %1221 = vmatmul.f32.gmra.mxu0 %v1110
        %v1222 = vpop.f32.mrf.mxu0
        %v1223 = vadd.f32 %v1014, %v1222
        %1224 = vmatmul.f32.gmra.mxu0 %v1113
        %v1225 = vpop.f32.mrf.mxu0
        %v1226 = vadd.f32 %v1017, %v1225
        %1227 = vmatmul.f32.gmra.mxu0 %v1116
        %v1228 = vpop.f32.mrf.mxu0
        %v1229 = vadd.f32 %v1020, %v1228
        %1230 = vmatmul.f32.gmra.mxu0 %v1119
        %v1231 = vpop.f32.mrf.mxu0
        %v1232 = vadd.f32 %v1023, %v1231
        %1233 = vmatmul.f32.gmra.mxu0 %v1122
        %v1234 = vpop.f32.mrf.mxu0
        %v1235 = vadd.f32 %v1026, %v1234
        %1236 = vmatmul.f32.gmra.mxu0 %v1125
        %v1237 = vpop.f32.mrf.mxu0
        %v1238 = vadd.f32 %v1029, %v1237
        %1239 = vmatmul.f32.gmra.mxu0 %v1128
        %v1240 = vpop.f32.mrf.mxu0
        %v1241 = vadd.f32 %v1032, %v1240
        %1242 = vmatmul.f32.gmra.mxu0 %v1131
        %v1243 = vpop.f32.mrf.mxu0
        %v1244 = vadd.f32 %v1035, %v1243
        %1245 = vmatmul.f32.gmra.mxu0 %v1134
        %v1246 = vpop.f32.mrf.mxu0
        %v1247 = vadd.f32 %v1038, %v1246
        %1248 = vmatmul.f32.gmra.mxu0 %v1137
        %v1249 = vpop.f32.mrf.mxu0
        %v1250 = vadd.f32 %v1041, %v1249
        %1251 = vmatmul.f32.gmra.mxu0 %v1140
        %v1252 = vpop.f32.mrf.mxu0
        %v1253 = vadd.f32 %v1044, %v1252
        %1254 = vmatmul.f32.gmra.mxu0 %v1143
        %v1255 = vpop.f32.mrf.mxu0
        %v1256 = vadd.f32 %v1047, %v1255
        %1257 = vmatmul.f32.gmra.mxu0 %v1146
        %v1258 = vpop.f32.mrf.mxu0
        %v1259 = vadd.f32 %v1050, %v1258
        %1260 = vmatmul.f32.gmra.mxu0 %v1149
        %v1261 = vpop.f32.mrf.mxu0
        %v1262 = vadd.f32 %v1053, %v1261
        %1263 = vmatmul.f32.gmra.mxu0 %v1152
        %v1264 = vpop.f32.mrf.mxu0
        %v1265 = vadd.f32 %v1056, %v1264
        %1266 = vmatmul.f32.gmra.mxu0 %v1155
        %v1267 = vpop.f32.mrf.mxu0
        %v1268 = vadd.f32 %v1059, %v1267
        %1269 = vmatmul.f32.gmra.mxu0 %v1158
        %v1270 = vpop.f32.mrf.mxu0
        %v1271 = vadd.f32 %v1062, %v1270
        %1272 = vmatmul.f32.gmra.mxu0 %v1161
        %v1273 = vpop.f32.mrf.mxu0
        %v1274 = vadd.f32 %v1065, %v1273
        %1275 = vmatmul.f32.gmra.mxu0 %v1164
        %v1276 = vpop.f32.mrf.mxu0
        %v1277 = vadd.f32 %v1068, %v1276
        %1278 = vdwg.mxu0
        %v1279 = vld [vmem:[#allocation2 + $0x2] sm:$0xff]
        %v1280 = vld [vmem:[#allocation2 + $0xa] sm:$0xff]
        %v1281 = vld [vmem:[#allocation2 + $0x1a] sm:$0xff]
        %v1282 = vld [vmem:[#allocation2 + $0x22] sm:$0xff]
        %v1283 = vld [vmem:[#allocation2 + $0x32] sm:$0xff]
        %v1284 = vld [vmem:[#allocation2 + $0x3a] sm:$0xff]
        %v1285 = vld [vmem:[#allocation2 + $0x4a] sm:$0xff]
        %v1286 = vld [vmem:[#allocation2 + $0x52] sm:$0xff]
        %v1287 = vld [vmem:[#allocation2 + $0x62] sm:$0xff]
        %v1288 = vld [vmem:[#allocation2 + $0x6a] sm:$0xff]
        %v1289 = vld [vmem:[#allocation2 + $0x7a] sm:$0xff]
        %v1290 = vld [vmem:[#allocation2 + $0x82] sm:$0xff]
        %v1291 = vld [vmem:[#allocation2 + $0x92] sm:$0xff]
        %v1292 = vld [vmem:[#allocation2 + $0x9a] sm:$0xff]
        %v1293 = vld [vmem:[#allocation2 + $0xaa] sm:$0xff]
        %v1294 = vld [vmem:[#allocation2 + $0xb2] sm:$0xff]
        %v1295 = vld [vmem:[#allocation2 + $0xc2] sm:$0xff]
        %v1296 = vld [vmem:[#allocation2 + $0xca] sm:$0xff]
        %v1297 = vld [vmem:[#allocation2 + $0xda] sm:$0xff]
        %v1298 = vld [vmem:[#allocation2 + $0xe2] sm:$0xff]
        %v1299 = vld [vmem:[#allocation2 + $0xf2] sm:$0xff]
        %v1300 = vld [vmem:[#allocation2 + $0xfa] sm:$0xff]
        %v1301 = vld [vmem:[#allocation2 + $0x10a] sm:$0xff]
        %v1302 = vld [vmem:[#allocation2 + $0x112] sm:$0xff]
        %v1303 = vld [vmem:[#allocation2 + $0x122] sm:$0xff]
        %v1304 = vld [vmem:[#allocation2 + $0x12a] sm:$0xff]
        %v1305 = vld [vmem:[#allocation2 + $0x13a] sm:$0xff]
        %v1306 = vld [vmem:[#allocation2 + $0x142] sm:$0xff]
        %v1307 = vld [vmem:[#allocation2 + $0x152] sm:$0xff]
        %v1308 = vld [vmem:[#allocation2 + $0x15a] sm:$0xff]
        %v1309 = vld [vmem:[#allocation2 + $0x16a] sm:$0xff]
        %v1310 = vld [vmem:[#allocation2 + $0x172] sm:$0xff]
        %s1311 = scalar_lea.vmem [#allocation6], 64
        %v1312 = vld [vmem:[%s1311] sm:$0xff]
        %v1313 = vld [vmem:[%s1311 + $0x8] sm:$0xff]
        %v1314 = vld [vmem:[%s1311 + $0x10] sm:$0xff]
        %v1315 = vld [vmem:[%s1311 + $0x18] sm:$0xff]
        %v1317 = vsel %vm699, %v1279, 0
        %v1320 = vsel %vm699, %v1280, 0
        %v1323 = vsel %vm699, %v1281, 0
        %v1326 = vsel %vm699, %v1282, 0
        %v1329 = vsel %vm699, %v1283, 0
        %v1332 = vsel %vm699, %v1284, 0
        %v1335 = vsel %vm699, %v1285, 0
        %v1338 = vsel %vm699, %v1286, 0
        %v1341 = vsel %vm699, %v1287, 0
        %v1344 = vsel %vm699, %v1288, 0
        %v1347 = vsel %vm699, %v1289, 0
        %v1350 = vsel %vm699, %v1290, 0
        %v1353 = vsel %vm699, %v1291, 0
        %v1356 = vsel %vm699, %v1292, 0
        %v1359 = vsel %vm699, %v1293, 0
        %v1362 = vsel %vm699, %v1294, 0
        %v1365 = vsel %vm699, %v1295, 0
        %v1368 = vsel %vm699, %v1296, 0
        %v1371 = vsel %vm699, %v1297, 0
        %v1374 = vsel %vm699, %v1298, 0
        %v1377 = vsel %vm699, %v1299, 0
        %v1380 = vsel %vm699, %v1300, 0
        %v1383 = vsel %vm699, %v1301, 0
        %v1386 = vsel %vm699, %v1302, 0
        %v1389 = vsel %vm699, %v1303, 0
        %v1392 = vsel %vm699, %v1304, 0
        %v1395 = vsel %vm699, %v1305, 0
        %v1398 = vsel %vm699, %v1306, 0
        %v1401 = vsel %vm699, %v1307, 0
        %v1404 = vsel %vm699, %v1308, 0
        %v1407 = vsel %vm699, %v1309, 0
        %v1410 = vsel %vm699, %v1310, 0
        %1412 = vmatpush.msra.mxu0 0.0
        %1413 = vmatpush.msra.mxu0 0.0
        %1414 = vmatpush.msra.mxu0 0.0
        %1415 = vmatpush.msra.mxu0 0.0
        %1416 = vmatpush.msra.mxu0 0.0
        %1417 = vmatpush.msra.mxu0 0.0
        %1418 = vmatpush.msra.mxu0 0.0
        %1419 = vmatpush.msra.mxu0 0.0
        %1420 = vmatpush.msra.mxu0 0.0
        %1421 = vmatpush.msra.mxu0 0.0
        %1422 = vmatpush.msra.mxu0 0.0
        %1423 = vmatpush.msra.mxu0 0.0
        %1424 = vmatpush.msra.mxu0 %v1315
        %1425 = vmatpush.msra.mxu0 %v1314
        %1426 = vmatpush.msra.mxu0 %v1313
        %1427 = vmatpush.msra.mxu0 %v1312
        %1428 = vmatmul.f32.gmra.mxu0 %v1317
        %v1429 = vpop.f32.mrf.mxu0
        %v1430 = vadd.f32 0.0, %v1429
        %1431 = vmatmul.f32.gmra.mxu0 %v1320
        %v1432 = vpop.f32.mrf.mxu0
        %v1433 = vadd.f32 0.0, %v1432
        %1434 = vmatmul.f32.gmra.mxu0 %v1323
        %v1435 = vpop.f32.mrf.mxu0
        %v1436 = vadd.f32 0.0, %v1435
        %1437 = vmatmul.f32.gmra.mxu0 %v1326
        %v1438 = vpop.f32.mrf.mxu0
        %v1439 = vadd.f32 0.0, %v1438
        %1440 = vmatmul.f32.gmra.mxu0 %v1329
        %v1441 = vpop.f32.mrf.mxu0
        %v1442 = vadd.f32 0.0, %v1441
        %1443 = vmatmul.f32.gmra.mxu0 %v1332
        %v1444 = vpop.f32.mrf.mxu0
        %v1445 = vadd.f32 0.0, %v1444
        %1446 = vmatmul.f32.gmra.mxu0 %v1335
        %v1447 = vpop.f32.mrf.mxu0
        %v1448 = vadd.f32 0.0, %v1447
        %1449 = vmatmul.f32.gmra.mxu0 %v1338
        %v1450 = vpop.f32.mrf.mxu0
        %v1451 = vadd.f32 0.0, %v1450
        %1452 = vmatmul.f32.gmra.mxu0 %v1341
        %v1453 = vpop.f32.mrf.mxu0
        %v1454 = vadd.f32 0.0, %v1453
        %1455 = vmatmul.f32.gmra.mxu0 %v1344
        %v1456 = vpop.f32.mrf.mxu0
        %v1457 = vadd.f32 0.0, %v1456
        %1458 = vmatmul.f32.gmra.mxu0 %v1347
        %v1459 = vpop.f32.mrf.mxu0
        %v1460 = vadd.f32 0.0, %v1459
        %1461 = vmatmul.f32.gmra.mxu0 %v1350
        %v1462 = vpop.f32.mrf.mxu0
        %v1463 = vadd.f32 0.0, %v1462
        %1464 = vmatmul.f32.gmra.mxu0 %v1353
        %v1465 = vpop.f32.mrf.mxu0
        %v1466 = vadd.f32 0.0, %v1465
        %1467 = vmatmul.f32.gmra.mxu0 %v1356
        %v1468 = vpop.f32.mrf.mxu0
        %v1469 = vadd.f32 0.0, %v1468
        %1470 = vmatmul.f32.gmra.mxu0 %v1359
        %v1471 = vpop.f32.mrf.mxu0
        %v1472 = vadd.f32 0.0, %v1471
        %1473 = vmatmul.f32.gmra.mxu0 %v1362
        %v1474 = vpop.f32.mrf.mxu0
        %v1475 = vadd.f32 0.0, %v1474
        %1476 = vmatmul.f32.gmra.mxu0 %v1365
        %v1477 = vpop.f32.mrf.mxu0
        %v1478 = vadd.f32 0.0, %v1477
        %1479 = vmatmul.f32.gmra.mxu0 %v1368
        %v1480 = vpop.f32.mrf.mxu0
        %v1481 = vadd.f32 0.0, %v1480
        %1482 = vmatmul.f32.gmra.mxu0 %v1371
        %v1483 = vpop.f32.mrf.mxu0
        %v1484 = vadd.f32 0.0, %v1483
        %1485 = vmatmul.f32.gmra.mxu0 %v1374
        %v1486 = vpop.f32.mrf.mxu0
        %v1487 = vadd.f32 0.0, %v1486
        %1488 = vmatmul.f32.gmra.mxu0 %v1377
        %v1489 = vpop.f32.mrf.mxu0
        %v1490 = vadd.f32 0.0, %v1489
        %1491 = vmatmul.f32.gmra.mxu0 %v1380
        %v1492 = vpop.f32.mrf.mxu0
        %v1493 = vadd.f32 0.0, %v1492
        %1494 = vmatmul.f32.gmra.mxu0 %v1383
        %v1495 = vpop.f32.mrf.mxu0
        %v1496 = vadd.f32 0.0, %v1495
        %1497 = vmatmul.f32.gmra.mxu0 %v1386
        %v1498 = vpop.f32.mrf.mxu0
        %v1499 = vadd.f32 0.0, %v1498
        %1500 = vmatmul.f32.gmra.mxu0 %v1389
        %v1501 = vpop.f32.mrf.mxu0
        %v1502 = vadd.f32 0.0, %v1501
        %1503 = vmatmul.f32.gmra.mxu0 %v1392
        %v1504 = vpop.f32.mrf.mxu0
        %v1505 = vadd.f32 0.0, %v1504
        %1506 = vmatmul.f32.gmra.mxu0 %v1395
        %v1507 = vpop.f32.mrf.mxu0
        %v1508 = vadd.f32 0.0, %v1507
        %1509 = vmatmul.f32.gmra.mxu0 %v1398
        %v1510 = vpop.f32.mrf.mxu0
        %v1511 = vadd.f32 0.0, %v1510
        %1512 = vmatmul.f32.gmra.mxu0 %v1401
        %v1513 = vpop.f32.mrf.mxu0
        %v1514 = vadd.f32 0.0, %v1513
        %1515 = vmatmul.f32.gmra.mxu0 %v1404
        %v1516 = vpop.f32.mrf.mxu0
        %v1517 = vadd.f32 0.0, %v1516
        %1518 = vmatmul.f32.gmra.mxu0 %v1407
        %v1519 = vpop.f32.mrf.mxu0
        %v1520 = vadd.f32 0.0, %v1519
        %1521 = vmatmul.f32.gmra.mxu0 %v1410
        %v1522 = vpop.f32.mrf.mxu0
        %v1523 = vadd.f32 0.0, %v1522
        %1524 = vdwg.mxu0
        %v1525 = vadd.f32 %v1184, %v1430
        %v1526 = vadd.f32 %v1187, %v1433
        %v1527 = vadd.f32 %v1190, %v1436
        %v1528 = vadd.f32 %v1193, %v1439
        %v1529 = vadd.f32 %v1196, %v1442
        %v1530 = vadd.f32 %v1199, %v1445
        %v1531 = vadd.f32 %v1202, %v1448
        %v1532 = vadd.f32 %v1205, %v1451
        %v1533 = vadd.f32 %v1208, %v1454
        %v1534 = vadd.f32 %v1211, %v1457
        %v1535 = vadd.f32 %v1214, %v1460
        %v1536 = vadd.f32 %v1217, %v1463
        %v1537 = vadd.f32 %v1220, %v1466
        %v1538 = vadd.f32 %v1223, %v1469
        %v1539 = vadd.f32 %v1226, %v1472
        %v1540 = vadd.f32 %v1229, %v1475
        %v1541 = vadd.f32 %v1232, %v1478
        %v1542 = vadd.f32 %v1235, %v1481
        %v1543 = vadd.f32 %v1238, %v1484
        %v1544 = vadd.f32 %v1241, %v1487
        %v1545 = vadd.f32 %v1244, %v1490
        %v1546 = vadd.f32 %v1247, %v1493
        %v1547 = vadd.f32 %v1250, %v1496
        %v1548 = vadd.f32 %v1253, %v1499
        %v1549 = vadd.f32 %v1256, %v1502
        %v1550 = vadd.f32 %v1259, %v1505
        %v1551 = vadd.f32 %v1262, %v1508
        %v1552 = vadd.f32 %v1265, %v1511
        %v1553 = vadd.f32 %v1268, %v1514
        %v1554 = vadd.f32 %v1271, %v1517
        %v1555 = vadd.f32 %v1274, %v1520
        %v1556 = vadd.f32 %v1277, %v1523
        %v1557 = vld [vmem:[%s755] sm:$0xff]
        %v1558 = vld [vmem:[%s755 + $0x8] sm:$0xff]
        %v1559 = vld [vmem:[%s755 + $0x18] sm:$0xff]
        %v1560 = vld [vmem:[%s755 + $0x20] sm:$0xff]
        %v1561 = vld [vmem:[%s755 + $0x30] sm:$0xff]
        %v1562 = vld [vmem:[%s755 + $0x38] sm:$0xff]
        %v1563 = vld [vmem:[%s755 + $0x48] sm:$0xff]
        %v1564 = vld [vmem:[%s755 + $0x50] sm:$0xff]
        %v1565 = vld [vmem:[%s755 + $0x60] sm:$0xff]
        %v1566 = vld [vmem:[%s755 + $0x68] sm:$0xff]
        %v1567 = vld [vmem:[%s755 + $0x78] sm:$0xff]
        %v1568 = vld [vmem:[%s755 + $0x80] sm:$0xff]
        %v1569 = vld [vmem:[%s755 + $0x90] sm:$0xff]
        %v1570 = vld [vmem:[%s755 + $0x98] sm:$0xff]
        %v1571 = vld [vmem:[%s755 + $0xa8] sm:$0xff]
        %v1572 = vld [vmem:[%s755 + $0xb0] sm:$0xff]
        %v1573 = vld [vmem:[%s755 + $0xc0] sm:$0xff]
        %v1574 = vld [vmem:[%s755 + $0xc8] sm:$0xff]
        %v1575 = vld [vmem:[%s755 + $0xd8] sm:$0xff]
        %v1576 = vld [vmem:[%s755 + $0xe0] sm:$0xff]
        %v1577 = vld [vmem:[%s755 + $0xf0] sm:$0xff]
        %v1578 = vld [vmem:[%s755 + $0xf8] sm:$0xff]
        %v1579 = vld [vmem:[%s755 + $0x108] sm:$0xff]
        %v1580 = vld [vmem:[%s755 + $0x110] sm:$0xff]
        %v1581 = vld [vmem:[%s755 + $0x120] sm:$0xff]
        %v1582 = vld [vmem:[%s755 + $0x128] sm:$0xff]
        %v1583 = vld [vmem:[%s755 + $0x138] sm:$0xff]
        %v1584 = vld [vmem:[%s755 + $0x140] sm:$0xff]
        %v1585 = vld [vmem:[%s755 + $0x150] sm:$0xff]
        %v1586 = vld [vmem:[%s755 + $0x158] sm:$0xff]
        %v1587 = vld [vmem:[%s755 + $0x168] sm:$0xff]
        %v1588 = vld [vmem:[%s755 + $0x170] sm:$0xff]
        %s1589 = scalar_lea.vmem [#allocation6], 96
        %v1590 = vld [vmem:[%s1589] sm:$0xff]
        %v1591 = vld [vmem:[%s1589 + $0x8] sm:$0xff]
        %v1592 = vld [vmem:[%s1589 + $0x10] sm:$0xff]
        %v1593 = vld [vmem:[%s1589 + $0x18] sm:$0xff]
        %v1595 = vsel %vm699, %v1557, 0
        %v1598 = vsel %vm699, %v1558, 0
        %v1601 = vsel %vm699, %v1559, 0
        %v1604 = vsel %vm699, %v1560, 0
        %v1607 = vsel %vm699, %v1561, 0
        %v1610 = vsel %vm699, %v1562, 0
        %v1613 = vsel %vm699, %v1563, 0
        %v1616 = vsel %vm699, %v1564, 0
        %v1619 = vsel %vm699, %v1565, 0
        %v1622 = vsel %vm699, %v1566, 0
        %v1625 = vsel %vm699, %v1567, 0
        %v1628 = vsel %vm699, %v1568, 0
        %v1631 = vsel %vm699, %v1569, 0
        %v1634 = vsel %vm699, %v1570, 0
        %v1637 = vsel %vm699, %v1571, 0
        %v1640 = vsel %vm699, %v1572, 0
        %v1643 = vsel %vm699, %v1573, 0
        %v1646 = vsel %vm699, %v1574, 0
        %v1649 = vsel %vm699, %v1575, 0
        %v1652 = vsel %vm699, %v1576, 0
        %v1655 = vsel %vm699, %v1577, 0
        %v1658 = vsel %vm699, %v1578, 0
        %v1661 = vsel %vm699, %v1579, 0
        %v1664 = vsel %vm699, %v1580, 0
        %v1667 = vsel %vm699, %v1581, 0
        %v1670 = vsel %vm699, %v1582, 0
        %v1673 = vsel %vm699, %v1583, 0
        %v1676 = vsel %vm699, %v1584, 0
        %v1679 = vsel %vm699, %v1585, 0
        %v1682 = vsel %vm699, %v1586, 0
        %v1685 = vsel %vm699, %v1587, 0
        %v1688 = vsel %vm699, %v1588, 0
        %1690 = vmatpush.msra.mxu0 0.0
        %1691 = vmatpush.msra.mxu0 0.0
        %1692 = vmatpush.msra.mxu0 0.0
        %1693 = vmatpush.msra.mxu0 0.0
        %1694 = vmatpush.msra.mxu0 0.0
        %1695 = vmatpush.msra.mxu0 0.0
        %1696 = vmatpush.msra.mxu0 0.0
        %1697 = vmatpush.msra.mxu0 0.0
        %1698 = vmatpush.msra.mxu0 0.0
        %1699 = vmatpush.msra.mxu0 0.0
        %1700 = vmatpush.msra.mxu0 0.0
        %1701 = vmatpush.msra.mxu0 0.0
        %1702 = vmatpush.msra.mxu0 %v1593
        %1703 = vmatpush.msra.mxu0 %v1592
        %1704 = vmatpush.msra.mxu0 %v1591
        %1705 = vmatpush.msra.mxu0 %v1590
        %1706 = vmatmul.f32.gmra.mxu0 %v1595
        %v1707 = vpop.f32.mrf.mxu0
        %v1708 = vadd.f32 0.0, %v1707
        %1709 = vmatmul.f32.gmra.mxu0 %v1598
        %v1710 = vpop.f32.mrf.mxu0
        %v1711 = vadd.f32 0.0, %v1710
        %1712 = vmatmul.f32.gmra.mxu0 %v1601
        %v1713 = vpop.f32.mrf.mxu0
        %v1714 = vadd.f32 0.0, %v1713
        %1715 = vmatmul.f32.gmra.mxu0 %v1604
        %v1716 = vpop.f32.mrf.mxu0
        %v1717 = vadd.f32 0.0, %v1716
        %1718 = vmatmul.f32.gmra.mxu0 %v1607
        %v1719 = vpop.f32.mrf.mxu0
        %v1720 = vadd.f32 0.0, %v1719
        %1721 = vmatmul.f32.gmra.mxu0 %v1610
        %v1722 = vpop.f32.mrf.mxu0
        %v1723 = vadd.f32 0.0, %v1722
        %1724 = vmatmul.f32.gmra.mxu0 %v1613
        %v1725 = vpop.f32.mrf.mxu0
        %v1726 = vadd.f32 0.0, %v1725
        %1727 = vmatmul.f32.gmra.mxu0 %v1616
        %v1728 = vpop.f32.mrf.mxu0
        %v1729 = vadd.f32 0.0, %v1728
        %1730 = vmatmul.f32.gmra.mxu0 %v1619
        %v1731 = vpop.f32.mrf.mxu0
        %v1732 = vadd.f32 0.0, %v1731
        %1733 = vmatmul.f32.gmra.mxu0 %v1622
        %v1734 = vpop.f32.mrf.mxu0
        %v1735 = vadd.f32 0.0, %v1734
        %1736 = vmatmul.f32.gmra.mxu0 %v1625
        %v1737 = vpop.f32.mrf.mxu0
        %v1738 = vadd.f32 0.0, %v1737
        %1739 = vmatmul.f32.gmra.mxu0 %v1628
        %v1740 = vpop.f32.mrf.mxu0
        %v1741 = vadd.f32 0.0, %v1740
        %1742 = vmatmul.f32.gmra.mxu0 %v1631
        %v1743 = vpop.f32.mrf.mxu0
        %v1744 = vadd.f32 0.0, %v1743
        %1745 = vmatmul.f32.gmra.mxu0 %v1634
        %v1746 = vpop.f32.mrf.mxu0
        %v1747 = vadd.f32 0.0, %v1746
        %1748 = vmatmul.f32.gmra.mxu0 %v1637
        %v1749 = vpop.f32.mrf.mxu0
        %v1750 = vadd.f32 0.0, %v1749
        %1751 = vmatmul.f32.gmra.mxu0 %v1640
        %v1752 = vpop.f32.mrf.mxu0
        %v1753 = vadd.f32 0.0, %v1752
        %1754 = vmatmul.f32.gmra.mxu0 %v1643
        %v1755 = vpop.f32.mrf.mxu0
        %v1756 = vadd.f32 0.0, %v1755
        %1757 = vmatmul.f32.gmra.mxu0 %v1646
        %v1758 = vpop.f32.mrf.mxu0
        %v1759 = vadd.f32 0.0, %v1758
        %1760 = vmatmul.f32.gmra.mxu0 %v1649
        %v1761 = vpop.f32.mrf.mxu0
        %v1762 = vadd.f32 0.0, %v1761
        %1763 = vmatmul.f32.gmra.mxu0 %v1652
        %v1764 = vpop.f32.mrf.mxu0
        %v1765 = vadd.f32 0.0, %v1764
        %1766 = vmatmul.f32.gmra.mxu0 %v1655
        %v1767 = vpop.f32.mrf.mxu0
        %v1768 = vadd.f32 0.0, %v1767
        %1769 = vmatmul.f32.gmra.mxu0 %v1658
        %v1770 = vpop.f32.mrf.mxu0
        %v1771 = vadd.f32 0.0, %v1770
        %1772 = vmatmul.f32.gmra.mxu0 %v1661
        %v1773 = vpop.f32.mrf.mxu0
        %v1774 = vadd.f32 0.0, %v1773
        %1775 = vmatmul.f32.gmra.mxu0 %v1664
        %v1776 = vpop.f32.mrf.mxu0
        %v1777 = vadd.f32 0.0, %v1776
        %1778 = vmatmul.f32.gmra.mxu0 %v1667
        %v1779 = vpop.f32.mrf.mxu0
        %v1780 = vadd.f32 0.0, %v1779
        %1781 = vmatmul.f32.gmra.mxu0 %v1670
        %v1782 = vpop.f32.mrf.mxu0
        %v1783 = vadd.f32 0.0, %v1782
        %1784 = vmatmul.f32.gmra.mxu0 %v1673
        %v1785 = vpop.f32.mrf.mxu0
        %v1786 = vadd.f32 0.0, %v1785
        %1787 = vmatmul.f32.gmra.mxu0 %v1676
        %v1788 = vpop.f32.mrf.mxu0
        %v1789 = vadd.f32 0.0, %v1788
        %1790 = vmatmul.f32.gmra.mxu0 %v1679
        %v1791 = vpop.f32.mrf.mxu0
        %v1792 = vadd.f32 0.0, %v1791
        %1793 = vmatmul.f32.gmra.mxu0 %v1682
        %v1794 = vpop.f32.mrf.mxu0
        %v1795 = vadd.f32 0.0, %v1794
        %1796 = vmatmul.f32.gmra.mxu0 %v1685
        %v1797 = vpop.f32.mrf.mxu0
        %v1798 = vadd.f32 0.0, %v1797
        %1799 = vmatmul.f32.gmra.mxu0 %v1688
        %v1800 = vpop.f32.mrf.mxu0
        %v1801 = vadd.f32 0.0, %v1800
        %1802 = vdwg.mxu0
        %v1803 = vadd.f32 %v1525, %v1708
        %v1804 = vadd.f32 %v1526, %v1711
        %v1805 = vadd.f32 %v1527, %v1714
        %v1806 = vadd.f32 %v1528, %v1717
        %v1807 = vadd.f32 %v1529, %v1720
        %v1808 = vadd.f32 %v1530, %v1723
        %v1809 = vadd.f32 %v1531, %v1726
        %v1810 = vadd.f32 %v1532, %v1729
        %v1811 = vadd.f32 %v1533, %v1732
        %v1812 = vadd.f32 %v1534, %v1735
        %v1813 = vadd.f32 %v1535, %v1738
        %v1814 = vadd.f32 %v1536, %v1741
        %v1815 = vadd.f32 %v1537, %v1744
        %v1816 = vadd.f32 %v1538, %v1747
        %v1817 = vadd.f32 %v1539, %v1750
        %v1818 = vadd.f32 %v1540, %v1753
        %v1819 = vadd.f32 %v1541, %v1756
        %v1820 = vadd.f32 %v1542, %v1759
        %v1821 = vadd.f32 %v1543, %v1762
        %v1822 = vadd.f32 %v1544, %v1765
        %v1823 = vadd.f32 %v1545, %v1768
        %v1824 = vadd.f32 %v1546, %v1771
        %v1825 = vadd.f32 %v1547, %v1774
        %v1826 = vadd.f32 %v1548, %v1777
        %v1827 = vadd.f32 %v1549, %v1780
        %v1828 = vadd.f32 %v1550, %v1783
        %v1829 = vadd.f32 %v1551, %v1786
        %v1830 = vadd.f32 %v1552, %v1789
        %v1831 = vadd.f32 %v1553, %v1792
        %v1832 = vadd.f32 %v1554, %v1795
        %v1833 = vadd.f32 %v1555, %v1798
        %v1834 = vadd.f32 %v1556, %v1801
        %v1835 = vld [vmem:[%s755 + $0x1] sm:$0xff]
        %v1836 = vld [vmem:[%s755 + $0x9] sm:$0xff]
        %v1837 = vld [vmem:[%s755 + $0x19] sm:$0xff]
        %v1838 = vld [vmem:[%s755 + $0x21] sm:$0xff]
        %v1839 = vld [vmem:[%s755 + $0x31] sm:$0xff]
        %v1840 = vld [vmem:[%s755 + $0x39] sm:$0xff]
        %v1841 = vld [vmem:[%s755 + $0x49] sm:$0xff]
        %v1842 = vld [vmem:[%s755 + $0x51] sm:$0xff]
        %v1843 = vld [vmem:[%s755 + $0x61] sm:$0xff]
        %v1844 = vld [vmem:[%s755 + $0x69] sm:$0xff]
        %v1845 = vld [vmem:[%s755 + $0x79] sm:$0xff]
        %v1846 = vld [vmem:[%s755 + $0x81] sm:$0xff]
        %v1847 = vld [vmem:[%s755 + $0x91] sm:$0xff]
        %v1848 = vld [vmem:[%s755 + $0x99] sm:$0xff]
        %v1849 = vld [vmem:[%s755 + $0xa9] sm:$0xff]
        %v1850 = vld [vmem:[%s755 + $0xb1] sm:$0xff]
        %v1851 = vld [vmem:[%s755 + $0xc1] sm:$0xff]
        %v1852 = vld [vmem:[%s755 + $0xc9] sm:$0xff]
        %v1853 = vld [vmem:[%s755 + $0xd9] sm:$0xff]
        %v1854 = vld [vmem:[%s755 + $0xe1] sm:$0xff]
        %v1855 = vld [vmem:[%s755 + $0xf1] sm:$0xff]
        %v1856 = vld [vmem:[%s755 + $0xf9] sm:$0xff]
        %v1857 = vld [vmem:[%s755 + $0x109] sm:$0xff]
        %v1858 = vld [vmem:[%s755 + $0x111] sm:$0xff]
        %v1859 = vld [vmem:[%s755 + $0x121] sm:$0xff]
        %v1860 = vld [vmem:[%s755 + $0x129] sm:$0xff]
        %v1861 = vld [vmem:[%s755 + $0x139] sm:$0xff]
        %v1862 = vld [vmem:[%s755 + $0x141] sm:$0xff]
        %v1863 = vld [vmem:[%s755 + $0x151] sm:$0xff]
        %v1864 = vld [vmem:[%s755 + $0x159] sm:$0xff]
        %v1865 = vld [vmem:[%s755 + $0x169] sm:$0xff]
        %v1866 = vld [vmem:[%s755 + $0x171] sm:$0xff]
        %s1867 = scalar_lea.vmem [#allocation6], 128
        %v1868 = vld [vmem:[%s1867] sm:$0xff]
        %v1869 = vld [vmem:[%s1867 + $0x8] sm:$0xff]
        %v1870 = vld [vmem:[%s1867 + $0x10] sm:$0xff]
        %v1871 = vld [vmem:[%s1867 + $0x18] sm:$0xff]
        %v1873 = vsel %vm699, %v1835, 0
        %v1876 = vsel %vm699, %v1836, 0
        %v1879 = vsel %vm699, %v1837, 0
        %v1882 = vsel %vm699, %v1838, 0
        %v1885 = vsel %vm699, %v1839, 0
        %v1888 = vsel %vm699, %v1840, 0
        %v1891 = vsel %vm699, %v1841, 0
        %v1894 = vsel %vm699, %v1842, 0
        %v1897 = vsel %vm699, %v1843, 0
        %v1900 = vsel %vm699, %v1844, 0
        %v1903 = vsel %vm699, %v1845, 0
        %v1906 = vsel %vm699, %v1846, 0
        %v1909 = vsel %vm699, %v1847, 0
        %v1912 = vsel %vm699, %v1848, 0
        %v1915 = vsel %vm699, %v1849, 0
        %v1918 = vsel %vm699, %v1850, 0
        %v1921 = vsel %vm699, %v1851, 0
        %v1924 = vsel %vm699, %v1852, 0
        %v1927 = vsel %vm699, %v1853, 0
        %v1930 = vsel %vm699, %v1854, 0
        %v1933 = vsel %vm699, %v1855, 0
        %v1936 = vsel %vm699, %v1856, 0
        %v1939 = vsel %vm699, %v1857, 0
        %v1942 = vsel %vm699, %v1858, 0
        %v1945 = vsel %vm699, %v1859, 0
        %v1948 = vsel %vm699, %v1860, 0
        %v1951 = vsel %vm699, %v1861, 0
        %v1954 = vsel %vm699, %v1862, 0
        %v1957 = vsel %vm699, %v1863, 0
        %v1960 = vsel %vm699, %v1864, 0
        %v1963 = vsel %vm699, %v1865, 0
        %v1966 = vsel %vm699, %v1866, 0
        %1968 = vmatpush.msra.mxu0 0.0
        %1969 = vmatpush.msra.mxu0 0.0
        %1970 = vmatpush.msra.mxu0 0.0
        %1971 = vmatpush.msra.mxu0 0.0
        %1972 = vmatpush.msra.mxu0 0.0
        %1973 = vmatpush.msra.mxu0 0.0
        %1974 = vmatpush.msra.mxu0 0.0
        %1975 = vmatpush.msra.mxu0 0.0
        %1976 = vmatpush.msra.mxu0 0.0
        %1977 = vmatpush.msra.mxu0 0.0
        %1978 = vmatpush.msra.mxu0 0.0
        %1979 = vmatpush.msra.mxu0 0.0
        %1980 = vmatpush.msra.mxu0 %v1871
        %1981 = vmatpush.msra.mxu0 %v1870
        %1982 = vmatpush.msra.mxu0 %v1869
        %1983 = vmatpush.msra.mxu0 %v1868
        %1984 = vmatmul.f32.gmra.mxu0 %v1873
        %v1985 = vpop.f32.mrf.mxu0
        %v1986 = vadd.f32 0.0, %v1985
        %1987 = vmatmul.f32.gmra.mxu0 %v1876
        %v1988 = vpop.f32.mrf.mxu0
        %v1989 = vadd.f32 0.0, %v1988
        %1990 = vmatmul.f32.gmra.mxu0 %v1879
        %v1991 = vpop.f32.mrf.mxu0
        %v1992 = vadd.f32 0.0, %v1991
        %1993 = vmatmul.f32.gmra.mxu0 %v1882
        %v1994 = vpop.f32.mrf.mxu0
        %v1995 = vadd.f32 0.0, %v1994
        %1996 = vmatmul.f32.gmra.mxu0 %v1885
        %v1997 = vpop.f32.mrf.mxu0
        %v1998 = vadd.f32 0.0, %v1997
        %1999 = vmatmul.f32.gmra.mxu0 %v1888
        %v2000 = vpop.f32.mrf.mxu0
        %v2001 = vadd.f32 0.0, %v2000
        %2002 = vmatmul.f32.gmra.mxu0 %v1891
        %v2003 = vpop.f32.mrf.mxu0
        %v2004 = vadd.f32 0.0, %v2003
        %2005 = vmatmul.f32.gmra.mxu0 %v1894
        %v2006 = vpop.f32.mrf.mxu0
        %v2007 = vadd.f32 0.0, %v2006
        %2008 = vmatmul.f32.gmra.mxu0 %v1897
        %v2009 = vpop.f32.mrf.mxu0
        %v2010 = vadd.f32 0.0, %v2009
        %2011 = vmatmul.f32.gmra.mxu0 %v1900
        %v2012 = vpop.f32.mrf.mxu0
        %v2013 = vadd.f32 0.0, %v2012
        %2014 = vmatmul.f32.gmra.mxu0 %v1903
        %v2015 = vpop.f32.mrf.mxu0
        %v2016 = vadd.f32 0.0, %v2015
        %2017 = vmatmul.f32.gmra.mxu0 %v1906
        %v2018 = vpop.f32.mrf.mxu0
        %v2019 = vadd.f32 0.0, %v2018
        %2020 = vmatmul.f32.gmra.mxu0 %v1909
        %v2021 = vpop.f32.mrf.mxu0
        %v2022 = vadd.f32 0.0, %v2021
        %2023 = vmatmul.f32.gmra.mxu0 %v1912
        %v2024 = vpop.f32.mrf.mxu0
        %v2025 = vadd.f32 0.0, %v2024
        %2026 = vmatmul.f32.gmra.mxu0 %v1915
        %v2027 = vpop.f32.mrf.mxu0
        %v2028 = vadd.f32 0.0, %v2027
        %2029 = vmatmul.f32.gmra.mxu0 %v1918
        %v2030 = vpop.f32.mrf.mxu0
        %v2031 = vadd.f32 0.0, %v2030
        %2032 = vmatmul.f32.gmra.mxu0 %v1921
        %v2033 = vpop.f32.mrf.mxu0
        %v2034 = vadd.f32 0.0, %v2033
        %2035 = vmatmul.f32.gmra.mxu0 %v1924
        %v2036 = vpop.f32.mrf.mxu0
        %v2037 = vadd.f32 0.0, %v2036
        %2038 = vmatmul.f32.gmra.mxu0 %v1927
        %v2039 = vpop.f32.mrf.mxu0
        %v2040 = vadd.f32 0.0, %v2039
        %2041 = vmatmul.f32.gmra.mxu0 %v1930
        %v2042 = vpop.f32.mrf.mxu0
        %v2043 = vadd.f32 0.0, %v2042
        %2044 = vmatmul.f32.gmra.mxu0 %v1933
        %v2045 = vpop.f32.mrf.mxu0
        %v2046 = vadd.f32 0.0, %v2045
        %2047 = vmatmul.f32.gmra.mxu0 %v1936
        %v2048 = vpop.f32.mrf.mxu0
        %v2049 = vadd.f32 0.0, %v2048
        %2050 = vmatmul.f32.gmra.mxu0 %v1939
        %v2051 = vpop.f32.mrf.mxu0
        %v2052 = vadd.f32 0.0, %v2051
        %2053 = vmatmul.f32.gmra.mxu0 %v1942
        %v2054 = vpop.f32.mrf.mxu0
        %v2055 = vadd.f32 0.0, %v2054
        %2056 = vmatmul.f32.gmra.mxu0 %v1945
        %v2057 = vpop.f32.mrf.mxu0
        %v2058 = vadd.f32 0.0, %v2057
        %2059 = vmatmul.f32.gmra.mxu0 %v1948
        %v2060 = vpop.f32.mrf.mxu0
        %v2061 = vadd.f32 0.0, %v2060
        %2062 = vmatmul.f32.gmra.mxu0 %v1951
        %v2063 = vpop.f32.mrf.mxu0
        %v2064 = vadd.f32 0.0, %v2063
        %2065 = vmatmul.f32.gmra.mxu0 %v1954
        %v2066 = vpop.f32.mrf.mxu0
        %v2067 = vadd.f32 0.0, %v2066
        %2068 = vmatmul.f32.gmra.mxu0 %v1957
        %v2069 = vpop.f32.mrf.mxu0
        %v2070 = vadd.f32 0.0, %v2069
        %2071 = vmatmul.f32.gmra.mxu0 %v1960
        %v2072 = vpop.f32.mrf.mxu0
        %v2073 = vadd.f32 0.0, %v2072
        %2074 = vmatmul.f32.gmra.mxu0 %v1963
        %v2075 = vpop.f32.mrf.mxu0
        %v2076 = vadd.f32 0.0, %v2075
        %2077 = vmatmul.f32.gmra.mxu0 %v1966
        %v2078 = vpop.f32.mrf.mxu0
        %v2079 = vadd.f32 0.0, %v2078
        %2080 = vdwg.mxu0
        %v2081 = vadd.f32 %v1803, %v1986
        %v2082 = vadd.f32 %v1804, %v1989
        %v2083 = vadd.f32 %v1805, %v1992
        %v2084 = vadd.f32 %v1806, %v1995
        %v2085 = vadd.f32 %v1807, %v1998
        %v2086 = vadd.f32 %v1808, %v2001
        %v2087 = vadd.f32 %v1809, %v2004
        %v2088 = vadd.f32 %v1810, %v2007
        %v2089 = vadd.f32 %v1811, %v2010
        %v2090 = vadd.f32 %v1812, %v2013
        %v2091 = vadd.f32 %v1813, %v2016
        %v2092 = vadd.f32 %v1814, %v2019
        %v2093 = vadd.f32 %v1815, %v2022
        %v2094 = vadd.f32 %v1816, %v2025
        %v2095 = vadd.f32 %v1817, %v2028
        %v2096 = vadd.f32 %v1818, %v2031
        %v2097 = vadd.f32 %v1819, %v2034
        %v2098 = vadd.f32 %v1820, %v2037
        %v2099 = vadd.f32 %v1821, %v2040
        %v2100 = vadd.f32 %v1822, %v2043
        %v2101 = vadd.f32 %v1823, %v2046
        %v2102 = vadd.f32 %v1824, %v2049
        %v2103 = vadd.f32 %v1825, %v2052
        %v2104 = vadd.f32 %v1826, %v2055
        %v2105 = vadd.f32 %v1827, %v2058
        %v2106 = vadd.f32 %v1828, %v2061
        %v2107 = vadd.f32 %v1829, %v2064
        %v2108 = vadd.f32 %v1830, %v2067
        %v2109 = vadd.f32 %v1831, %v2070
        %v2110 = vadd.f32 %v1832, %v2073
        %v2111 = vadd.f32 %v1833, %v2076
        %v2112 = vadd.f32 %v1834, %v2079
        %v2113 = vld [vmem:[%s755 + $0x2] sm:$0xff]
        %v2114 = vld [vmem:[%s755 + $0xa] sm:$0xff]
        %v2115 = vld [vmem:[%s755 + $0x1a] sm:$0xff]
        %v2116 = vld [vmem:[%s755 + $0x22] sm:$0xff]
        %v2117 = vld [vmem:[%s755 + $0x32] sm:$0xff]
        %v2118 = vld [vmem:[%s755 + $0x3a] sm:$0xff]
        %v2119 = vld [vmem:[%s755 + $0x4a] sm:$0xff]
        %v2120 = vld [vmem:[%s755 + $0x52] sm:$0xff]
        %v2121 = vld [vmem:[%s755 + $0x62] sm:$0xff]
        %v2122 = vld [vmem:[%s755 + $0x6a] sm:$0xff]
        %v2123 = vld [vmem:[%s755 + $0x7a] sm:$0xff]
        %v2124 = vld [vmem:[%s755 + $0x82] sm:$0xff]
        %v2125 = vld [vmem:[%s755 + $0x92] sm:$0xff]
        %v2126 = vld [vmem:[%s755 + $0x9a] sm:$0xff]
        %v2127 = vld [vmem:[%s755 + $0xaa] sm:$0xff]
        %v2128 = vld [vmem:[%s755 + $0xb2] sm:$0xff]
        %v2129 = vld [vmem:[%s755 + $0xc2] sm:$0xff]
        %v2130 = vld [vmem:[%s755 + $0xca] sm:$0xff]
        %v2131 = vld [vmem:[%s755 + $0xda] sm:$0xff]
        %v2132 = vld [vmem:[%s755 + $0xe2] sm:$0xff]
        %v2133 = vld [vmem:[%s755 + $0xf2] sm:$0xff]
        %v2134 = vld [vmem:[%s755 + $0xfa] sm:$0xff]
        %v2135 = vld [vmem:[%s755 + $0x10a] sm:$0xff]
        %v2136 = vld [vmem:[%s755 + $0x112] sm:$0xff]
        %v2137 = vld [vmem:[%s755 + $0x122] sm:$0xff]
        %v2138 = vld [vmem:[%s755 + $0x12a] sm:$0xff]
        %v2139 = vld [vmem:[%s755 + $0x13a] sm:$0xff]
        %v2140 = vld [vmem:[%s755 + $0x142] sm:$0xff]
        %v2141 = vld [vmem:[%s755 + $0x152] sm:$0xff]
        %v2142 = vld [vmem:[%s755 + $0x15a] sm:$0xff]
        %v2143 = vld [vmem:[%s755 + $0x16a] sm:$0xff]
        %v2144 = vld [vmem:[%s755 + $0x172] sm:$0xff]
        %s2145 = scalar_lea.vmem [#allocation6], 160
        %v2146 = vld [vmem:[%s2145] sm:$0xff]
        %v2147 = vld [vmem:[%s2145 + $0x8] sm:$0xff]
        %v2148 = vld [vmem:[%s2145 + $0x10] sm:$0xff]
        %v2149 = vld [vmem:[%s2145 + $0x18] sm:$0xff]
        %v2151 = vsel %vm699, %v2113, 0
        %v2154 = vsel %vm699, %v2114, 0
        %v2157 = vsel %vm699, %v2115, 0
        %v2160 = vsel %vm699, %v2116, 0
        %v2163 = vsel %vm699, %v2117, 0
        %v2166 = vsel %vm699, %v2118, 0
        %v2169 = vsel %vm699, %v2119, 0
        %v2172 = vsel %vm699, %v2120, 0
        %v2175 = vsel %vm699, %v2121, 0
        %v2178 = vsel %vm699, %v2122, 0
        %v2181 = vsel %vm699, %v2123, 0
        %v2184 = vsel %vm699, %v2124, 0
        %v2187 = vsel %vm699, %v2125, 0
        %v2190 = vsel %vm699, %v2126, 0
        %v2193 = vsel %vm699, %v2127, 0
        %v2196 = vsel %vm699, %v2128, 0
        %v2199 = vsel %vm699, %v2129, 0
        %v2202 = vsel %vm699, %v2130, 0
        %v2205 = vsel %vm699, %v2131, 0
        %v2208 = vsel %vm699, %v2132, 0
        %v2211 = vsel %vm699, %v2133, 0
        %v2214 = vsel %vm699, %v2134, 0
        %v2217 = vsel %vm699, %v2135, 0
        %v2220 = vsel %vm699, %v2136, 0
        %v2223 = vsel %vm699, %v2137, 0
        %v2226 = vsel %vm699, %v2138, 0
        %v2229 = vsel %vm699, %v2139, 0
        %v2232 = vsel %vm699, %v2140, 0
        %v2235 = vsel %vm699, %v2141, 0
        %v2238 = vsel %vm699, %v2142, 0
        %v2241 = vsel %vm699, %v2143, 0
        %v2244 = vsel %vm699, %v2144, 0
        %2246 = vmatpush.msra.mxu0 0.0
        %2247 = vmatpush.msra.mxu0 0.0
        %2248 = vmatpush.msra.mxu0 0.0
        %2249 = vmatpush.msra.mxu0 0.0
        %2250 = vmatpush.msra.mxu0 0.0
        %2251 = vmatpush.msra.mxu0 0.0
        %2252 = vmatpush.msra.mxu0 0.0
        %2253 = vmatpush.msra.mxu0 0.0
        %2254 = vmatpush.msra.mxu0 0.0
        %2255 = vmatpush.msra.mxu0 0.0
        %2256 = vmatpush.msra.mxu0 0.0
        %2257 = vmatpush.msra.mxu0 0.0
        %2258 = vmatpush.msra.mxu0 %v2149
        %2259 = vmatpush.msra.mxu0 %v2148
        %2260 = vmatpush.msra.mxu0 %v2147
        %2261 = vmatpush.msra.mxu0 %v2146
        %2262 = vmatmul.f32.gmra.mxu0 %v2151
        %v2263 = vpop.f32.mrf.mxu0
        %v2264 = vadd.f32 0.0, %v2263
        %2265 = vmatmul.f32.gmra.mxu0 %v2154
        %v2266 = vpop.f32.mrf.mxu0
        %v2267 = vadd.f32 0.0, %v2266
        %2268 = vmatmul.f32.gmra.mxu0 %v2157
        %v2269 = vpop.f32.mrf.mxu0
        %v2270 = vadd.f32 0.0, %v2269
        %2271 = vmatmul.f32.gmra.mxu0 %v2160
        %v2272 = vpop.f32.mrf.mxu0
        %v2273 = vadd.f32 0.0, %v2272
        %2274 = vmatmul.f32.gmra.mxu0 %v2163
        %v2275 = vpop.f32.mrf.mxu0
        %v2276 = vadd.f32 0.0, %v2275
        %2277 = vmatmul.f32.gmra.mxu0 %v2166
        %v2278 = vpop.f32.mrf.mxu0
        %v2279 = vadd.f32 0.0, %v2278
        %2280 = vmatmul.f32.gmra.mxu0 %v2169
        %v2281 = vpop.f32.mrf.mxu0
        %v2282 = vadd.f32 0.0, %v2281
        %2283 = vmatmul.f32.gmra.mxu0 %v2172
        %v2284 = vpop.f32.mrf.mxu0
        %v2285 = vadd.f32 0.0, %v2284
        %2286 = vmatmul.f32.gmra.mxu0 %v2175
        %v2287 = vpop.f32.mrf.mxu0
        %v2288 = vadd.f32 0.0, %v2287
        %2289 = vmatmul.f32.gmra.mxu0 %v2178
        %v2290 = vpop.f32.mrf.mxu0
        %v2291 = vadd.f32 0.0, %v2290
        %2292 = vmatmul.f32.gmra.mxu0 %v2181
        %v2293 = vpop.f32.mrf.mxu0
        %v2294 = vadd.f32 0.0, %v2293
        %2295 = vmatmul.f32.gmra.mxu0 %v2184
        %v2296 = vpop.f32.mrf.mxu0
        %v2297 = vadd.f32 0.0, %v2296
        %2298 = vmatmul.f32.gmra.mxu0 %v2187
        %v2299 = vpop.f32.mrf.mxu0
        %v2300 = vadd.f32 0.0, %v2299
        %2301 = vmatmul.f32.gmra.mxu0 %v2190
        %v2302 = vpop.f32.mrf.mxu0
        %v2303 = vadd.f32 0.0, %v2302
        %2304 = vmatmul.f32.gmra.mxu0 %v2193
        %v2305 = vpop.f32.mrf.mxu0
        %v2306 = vadd.f32 0.0, %v2305
        %2307 = vmatmul.f32.gmra.mxu0 %v2196
        %v2308 = vpop.f32.mrf.mxu0
        %v2309 = vadd.f32 0.0, %v2308
        %2310 = vmatmul.f32.gmra.mxu0 %v2199
        %v2311 = vpop.f32.mrf.mxu0
        %v2312 = vadd.f32 0.0, %v2311
        %2313 = vmatmul.f32.gmra.mxu0 %v2202
        %v2314 = vpop.f32.mrf.mxu0
        %v2315 = vadd.f32 0.0, %v2314
        %2316 = vmatmul.f32.gmra.mxu0 %v2205
        %v2317 = vpop.f32.mrf.mxu0
        %v2318 = vadd.f32 0.0, %v2317
        %2319 = vmatmul.f32.gmra.mxu0 %v2208
        %v2320 = vpop.f32.mrf.mxu0
        %v2321 = vadd.f32 0.0, %v2320
        %2322 = vmatmul.f32.gmra.mxu0 %v2211
        %v2323 = vpop.f32.mrf.mxu0
        %v2324 = vadd.f32 0.0, %v2323
        %2325 = vmatmul.f32.gmra.mxu0 %v2214
        %v2326 = vpop.f32.mrf.mxu0
        %v2327 = vadd.f32 0.0, %v2326
        %2328 = vmatmul.f32.gmra.mxu0 %v2217
        %v2329 = vpop.f32.mrf.mxu0
        %v2330 = vadd.f32 0.0, %v2329
        %2331 = vmatmul.f32.gmra.mxu0 %v2220
        %v2332 = vpop.f32.mrf.mxu0
        %v2333 = vadd.f32 0.0, %v2332
        %2334 = vmatmul.f32.gmra.mxu0 %v2223
        %v2335 = vpop.f32.mrf.mxu0
        %v2336 = vadd.f32 0.0, %v2335
        %2337 = vmatmul.f32.gmra.mxu0 %v2226
        %v2338 = vpop.f32.mrf.mxu0
        %v2339 = vadd.f32 0.0, %v2338
        %2340 = vmatmul.f32.gmra.mxu0 %v2229
        %v2341 = vpop.f32.mrf.mxu0
        %v2342 = vadd.f32 0.0, %v2341
        %2343 = vmatmul.f32.gmra.mxu0 %v2232
        %v2344 = vpop.f32.mrf.mxu0
        %v2345 = vadd.f32 0.0, %v2344
        %2346 = vmatmul.f32.gmra.mxu0 %v2235
        %v2347 = vpop.f32.mrf.mxu0
        %v2348 = vadd.f32 0.0, %v2347
        %2349 = vmatmul.f32.gmra.mxu0 %v2238
        %v2350 = vpop.f32.mrf.mxu0
        %v2351 = vadd.f32 0.0, %v2350
        %2352 = vmatmul.f32.gmra.mxu0 %v2241
        %v2353 = vpop.f32.mrf.mxu0
        %v2354 = vadd.f32 0.0, %v2353
        %2355 = vmatmul.f32.gmra.mxu0 %v2244
        %v2356 = vpop.f32.mrf.mxu0
        %v2357 = vadd.f32 0.0, %v2356
        %2358 = vdwg.mxu0
        %v2359 = vadd.f32 %v2081, %v2264
        %v2360 = vadd.f32 %v2082, %v2267
        %v2361 = vadd.f32 %v2083, %v2270
        %v2362 = vadd.f32 %v2084, %v2273
        %v2363 = vadd.f32 %v2085, %v2276
        %v2364 = vadd.f32 %v2086, %v2279
        %v2365 = vadd.f32 %v2087, %v2282
        %v2366 = vadd.f32 %v2088, %v2285
        %v2367 = vadd.f32 %v2089, %v2288
        %v2368 = vadd.f32 %v2090, %v2291
        %v2369 = vadd.f32 %v2091, %v2294
        %v2370 = vadd.f32 %v2092, %v2297
        %v2371 = vadd.f32 %v2093, %v2300
        %v2372 = vadd.f32 %v2094, %v2303
        %v2373 = vadd.f32 %v2095, %v2306
        %v2374 = vadd.f32 %v2096, %v2309
        %v2375 = vadd.f32 %v2097, %v2312
        %v2376 = vadd.f32 %v2098, %v2315
        %v2377 = vadd.f32 %v2099, %v2318
        %v2378 = vadd.f32 %v2100, %v2321
        %v2379 = vadd.f32 %v2101, %v2324
        %v2380 = vadd.f32 %v2102, %v2327
        %v2381 = vadd.f32 %v2103, %v2330
        %v2382 = vadd.f32 %v2104, %v2333
        %v2383 = vadd.f32 %v2105, %v2336
        %v2384 = vadd.f32 %v2106, %v2339
        %v2385 = vadd.f32 %v2107, %v2342
        %v2386 = vadd.f32 %v2108, %v2345
        %v2387 = vadd.f32 %v2109, %v2348
        %v2388 = vadd.f32 %v2110, %v2351
        %v2389 = vadd.f32 %v2111, %v2354
        %v2390 = vadd.f32 %v2112, %v2357
        %s2391 = scalar_lea.vmem [#allocation2], 48
        %v2392 = vld [vmem:[%s2391] sm:$0xff]
        %v2393 = vld [vmem:[%s2391 + $0x8] sm:$0xff]
        %v2394 = vld [vmem:[%s2391 + $0x18] sm:$0xff]
        %v2395 = vld [vmem:[%s2391 + $0x20] sm:$0xff]
        %v2396 = vld [vmem:[%s2391 + $0x30] sm:$0xff]
        %v2397 = vld [vmem:[%s2391 + $0x38] sm:$0xff]
        %v2398 = vld [vmem:[%s2391 + $0x48] sm:$0xff]
        %v2399 = vld [vmem:[%s2391 + $0x50] sm:$0xff]
        %v2400 = vld [vmem:[%s2391 + $0x60] sm:$0xff]
        %v2401 = vld [vmem:[%s2391 + $0x68] sm:$0xff]
        %v2402 = vld [vmem:[%s2391 + $0x78] sm:$0xff]
        %v2403 = vld [vmem:[%s2391 + $0x80] sm:$0xff]
        %v2404 = vld [vmem:[%s2391 + $0x90] sm:$0xff]
        %v2405 = vld [vmem:[%s2391 + $0x98] sm:$0xff]
        %v2406 = vld [vmem:[%s2391 + $0xa8] sm:$0xff]
        %v2407 = vld [vmem:[%s2391 + $0xb0] sm:$0xff]
        %v2408 = vld [vmem:[%s2391 + $0xc0] sm:$0xff]
        %v2409 = vld [vmem:[%s2391 + $0xc8] sm:$0xff]
        %v2410 = vld [vmem:[%s2391 + $0xd8] sm:$0xff]
        %v2411 = vld [vmem:[%s2391 + $0xe0] sm:$0xff]
        %v2412 = vld [vmem:[%s2391 + $0xf0] sm:$0xff]
        %v2413 = vld [vmem:[%s2391 + $0xf8] sm:$0xff]
        %v2414 = vld [vmem:[%s2391 + $0x108] sm:$0xff]
        %v2415 = vld [vmem:[%s2391 + $0x110] sm:$0xff]
        %v2416 = vld [vmem:[%s2391 + $0x120] sm:$0xff]
        %v2417 = vld [vmem:[%s2391 + $0x128] sm:$0xff]
        %v2418 = vld [vmem:[%s2391 + $0x138] sm:$0xff]
        %v2419 = vld [vmem:[%s2391 + $0x140] sm:$0xff]
        %v2420 = vld [vmem:[%s2391 + $0x150] sm:$0xff]
        %v2421 = vld [vmem:[%s2391 + $0x158] sm:$0xff]
        %v2422 = vld [vmem:[%s2391 + $0x168] sm:$0xff]
        %v2423 = vld [vmem:[%s2391 + $0x170] sm:$0xff]
        %s2424 = scalar_lea.vmem [#allocation6], 192
        %v2425 = vld [vmem:[%s2424] sm:$0xff]
        %v2426 = vld [vmem:[%s2424 + $0x8] sm:$0xff]
        %v2427 = vld [vmem:[%s2424 + $0x10] sm:$0xff]
        %v2428 = vld [vmem:[%s2424 + $0x18] sm:$0xff]
        %v2430 = vsel %vm699, %v2392, 0
        %v2433 = vsel %vm699, %v2393, 0
        %v2436 = vsel %vm699, %v2394, 0
        %v2439 = vsel %vm699, %v2395, 0
        %v2442 = vsel %vm699, %v2396, 0
        %v2445 = vsel %vm699, %v2397, 0
        %v2448 = vsel %vm699, %v2398, 0
        %v2451 = vsel %vm699, %v2399, 0
        %v2454 = vsel %vm699, %v2400, 0
        %v2457 = vsel %vm699, %v2401, 0
        %v2460 = vsel %vm699, %v2402, 0
        %v2463 = vsel %vm699, %v2403, 0
        %v2466 = vsel %vm699, %v2404, 0
        %v2469 = vsel %vm699, %v2405, 0
        %v2472 = vsel %vm699, %v2406, 0
        %v2475 = vsel %vm699, %v2407, 0
        %v2478 = vsel %vm699, %v2408, 0
        %v2481 = vsel %vm699, %v2409, 0
        %v2484 = vsel %vm699, %v2410, 0
        %v2487 = vsel %vm699, %v2411, 0
        %v2490 = vsel %vm699, %v2412, 0
        %v2493 = vsel %vm699, %v2413, 0
        %v2496 = vsel %vm699, %v2414, 0
        %v2499 = vsel %vm699, %v2415, 0
        %v2502 = vsel %vm699, %v2416, 0
        %v2505 = vsel %vm699, %v2417, 0
        %v2508 = vsel %vm699, %v2418, 0
        %v2511 = vsel %vm699, %v2419, 0
        %v2514 = vsel %vm699, %v2420, 0
        %v2517 = vsel %vm699, %v2421, 0
        %v2520 = vsel %vm699, %v2422, 0
        %v2523 = vsel %vm699, %v2423, 0
        %2525 = vmatpush.msra.mxu0 0.0
        %2526 = vmatpush.msra.mxu0 0.0
        %2527 = vmatpush.msra.mxu0 0.0
        %2528 = vmatpush.msra.mxu0 0.0
        %2529 = vmatpush.msra.mxu0 0.0
        %2530 = vmatpush.msra.mxu0 0.0
        %2531 = vmatpush.msra.mxu0 0.0
        %2532 = vmatpush.msra.mxu0 0.0
        %2533 = vmatpush.msra.mxu0 0.0
        %2534 = vmatpush.msra.mxu0 0.0
        %2535 = vmatpush.msra.mxu0 0.0
        %2536 = vmatpush.msra.mxu0 0.0
        %2537 = vmatpush.msra.mxu0 %v2428
        %2538 = vmatpush.msra.mxu0 %v2427
        %2539 = vmatpush.msra.mxu0 %v2426
        %2540 = vmatpush.msra.mxu0 %v2425
        %2541 = vmatmul.f32.gmra.mxu0 %v2430
        %v2542 = vpop.f32.mrf.mxu0
        %v2543 = vadd.f32 0.0, %v2542
        %2544 = vmatmul.f32.gmra.mxu0 %v2433
        %v2545 = vpop.f32.mrf.mxu0
        %v2546 = vadd.f32 0.0, %v2545
        %2547 = vmatmul.f32.gmra.mxu0 %v2436
        %v2548 = vpop.f32.mrf.mxu0
        %v2549 = vadd.f32 0.0, %v2548
        %2550 = vmatmul.f32.gmra.mxu0 %v2439
        %v2551 = vpop.f32.mrf.mxu0
        %v2552 = vadd.f32 0.0, %v2551
        %2553 = vmatmul.f32.gmra.mxu0 %v2442
        %v2554 = vpop.f32.mrf.mxu0
        %v2555 = vadd.f32 0.0, %v2554
        %2556 = vmatmul.f32.gmra.mxu0 %v2445
        %v2557 = vpop.f32.mrf.mxu0
        %v2558 = vadd.f32 0.0, %v2557
        %2559 = vmatmul.f32.gmra.mxu0 %v2448
        %v2560 = vpop.f32.mrf.mxu0
        %v2561 = vadd.f32 0.0, %v2560
        %2562 = vmatmul.f32.gmra.mxu0 %v2451
        %v2563 = vpop.f32.mrf.mxu0
        %v2564 = vadd.f32 0.0, %v2563
        %2565 = vmatmul.f32.gmra.mxu0 %v2454
        %v2566 = vpop.f32.mrf.mxu0
        %v2567 = vadd.f32 0.0, %v2566
        %2568 = vmatmul.f32.gmra.mxu0 %v2457
        %v2569 = vpop.f32.mrf.mxu0
        %v2570 = vadd.f32 0.0, %v2569
        %2571 = vmatmul.f32.gmra.mxu0 %v2460
        %v2572 = vpop.f32.mrf.mxu0
        %v2573 = vadd.f32 0.0, %v2572
        %2574 = vmatmul.f32.gmra.mxu0 %v2463
        %v2575 = vpop.f32.mrf.mxu0
        %v2576 = vadd.f32 0.0, %v2575
        %2577 = vmatmul.f32.gmra.mxu0 %v2466
        %v2578 = vpop.f32.mrf.mxu0
        %v2579 = vadd.f32 0.0, %v2578
        %2580 = vmatmul.f32.gmra.mxu0 %v2469
        %v2581 = vpop.f32.mrf.mxu0
        %v2582 = vadd.f32 0.0, %v2581
        %2583 = vmatmul.f32.gmra.mxu0 %v2472
        %v2584 = vpop.f32.mrf.mxu0
        %v2585 = vadd.f32 0.0, %v2584
        %2586 = vmatmul.f32.gmra.mxu0 %v2475
        %v2587 = vpop.f32.mrf.mxu0
        %v2588 = vadd.f32 0.0, %v2587
        %2589 = vmatmul.f32.gmra.mxu0 %v2478
        %v2590 = vpop.f32.mrf.mxu0
        %v2591 = vadd.f32 0.0, %v2590
        %2592 = vmatmul.f32.gmra.mxu0 %v2481
        %v2593 = vpop.f32.mrf.mxu0
        %v2594 = vadd.f32 0.0, %v2593
        %2595 = vmatmul.f32.gmra.mxu0 %v2484
        %v2596 = vpop.f32.mrf.mxu0
        %v2597 = vadd.f32 0.0, %v2596
        %2598 = vmatmul.f32.gmra.mxu0 %v2487
        %v2599 = vpop.f32.mrf.mxu0
        %v2600 = vadd.f32 0.0, %v2599
        %2601 = vmatmul.f32.gmra.mxu0 %v2490
        %v2602 = vpop.f32.mrf.mxu0
        %v2603 = vadd.f32 0.0, %v2602
        %2604 = vmatmul.f32.gmra.mxu0 %v2493
        %v2605 = vpop.f32.mrf.mxu0
        %v2606 = vadd.f32 0.0, %v2605
        %2607 = vmatmul.f32.gmra.mxu0 %v2496
        %v2608 = vpop.f32.mrf.mxu0
        %v2609 = vadd.f32 0.0, %v2608
        %2610 = vmatmul.f32.gmra.mxu0 %v2499
        %v2611 = vpop.f32.mrf.mxu0
        %v2612 = vadd.f32 0.0, %v2611
        %2613 = vmatmul.f32.gmra.mxu0 %v2502
        %v2614 = vpop.f32.mrf.mxu0
        %v2615 = vadd.f32 0.0, %v2614
        %2616 = vmatmul.f32.gmra.mxu0 %v2505
        %v2617 = vpop.f32.mrf.mxu0
        %v2618 = vadd.f32 0.0, %v2617
        %2619 = vmatmul.f32.gmra.mxu0 %v2508
        %v2620 = vpop.f32.mrf.mxu0
        %v2621 = vadd.f32 0.0, %v2620
        %2622 = vmatmul.f32.gmra.mxu0 %v2511
        %v2623 = vpop.f32.mrf.mxu0
        %v2624 = vadd.f32 0.0, %v2623
        %2625 = vmatmul.f32.gmra.mxu0 %v2514
        %v2626 = vpop.f32.mrf.mxu0
        %v2627 = vadd.f32 0.0, %v2626
        %2628 = vmatmul.f32.gmra.mxu0 %v2517
        %v2629 = vpop.f32.mrf.mxu0
        %v2630 = vadd.f32 0.0, %v2629
        %2631 = vmatmul.f32.gmra.mxu0 %v2520
        %v2632 = vpop.f32.mrf.mxu0
        %v2633 = vadd.f32 0.0, %v2632
        %2634 = vmatmul.f32.gmra.mxu0 %v2523
        %v2635 = vpop.f32.mrf.mxu0
        %v2636 = vadd.f32 0.0, %v2635
        %2637 = vdwg.mxu0
        %v2638 = vadd.f32 %v2359, %v2543
        %v2639 = vadd.f32 %v2360, %v2546
        %v2640 = vadd.f32 %v2361, %v2549
        %v2641 = vadd.f32 %v2362, %v2552
        %v2642 = vadd.f32 %v2363, %v2555
        %v2643 = vadd.f32 %v2364, %v2558
        %v2644 = vadd.f32 %v2365, %v2561
        %v2645 = vadd.f32 %v2366, %v2564
        %v2646 = vadd.f32 %v2367, %v2567
        %v2647 = vadd.f32 %v2368, %v2570
        %v2648 = vadd.f32 %v2369, %v2573
        %v2649 = vadd.f32 %v2370, %v2576
        %v2650 = vadd.f32 %v2371, %v2579
        %v2651 = vadd.f32 %v2372, %v2582
        %v2652 = vadd.f32 %v2373, %v2585
        %v2653 = vadd.f32 %v2374, %v2588
        %v2654 = vadd.f32 %v2375, %v2591
        %v2655 = vadd.f32 %v2376, %v2594
        %v2656 = vadd.f32 %v2377, %v2597
        %v2657 = vadd.f32 %v2378, %v2600
        %v2658 = vadd.f32 %v2379, %v2603
        %v2659 = vadd.f32 %v2380, %v2606
        %v2660 = vadd.f32 %v2381, %v2609
        %v2661 = vadd.f32 %v2382, %v2612
        %v2662 = vadd.f32 %v2383, %v2615
        %v2663 = vadd.f32 %v2384, %v2618
        %v2664 = vadd.f32 %v2385, %v2621
        %v2665 = vadd.f32 %v2386, %v2624
        %v2666 = vadd.f32 %v2387, %v2627
        %v2667 = vadd.f32 %v2388, %v2630
        %v2668 = vadd.f32 %v2389, %v2633
        %v2669 = vadd.f32 %v2390, %v2636
        %v2670 = vld [vmem:[%s2391 + $0x1] sm:$0xff]
        %v2671 = vld [vmem:[%s2391 + $0x9] sm:$0xff]
        %v2672 = vld [vmem:[%s2391 + $0x19] sm:$0xff]
        %v2673 = vld [vmem:[%s2391 + $0x21] sm:$0xff]
        %v2674 = vld [vmem:[%s2391 + $0x31] sm:$0xff]
        %v2675 = vld [vmem:[%s2391 + $0x39] sm:$0xff]
        %v2676 = vld [vmem:[%s2391 + $0x49] sm:$0xff]
        %v2677 = vld [vmem:[%s2391 + $0x51] sm:$0xff]
        %v2678 = vld [vmem:[%s2391 + $0x61] sm:$0xff]
        %v2679 = vld [vmem:[%s2391 + $0x69] sm:$0xff]
        %v2680 = vld [vmem:[%s2391 + $0x79] sm:$0xff]
        %v2681 = vld [vmem:[%s2391 + $0x81] sm:$0xff]
        %v2682 = vld [vmem:[%s2391 + $0x91] sm:$0xff]
        %v2683 = vld [vmem:[%s2391 + $0x99] sm:$0xff]
        %v2684 = vld [vmem:[%s2391 + $0xa9] sm:$0xff]
        %v2685 = vld [vmem:[%s2391 + $0xb1] sm:$0xff]
        %v2686 = vld [vmem:[%s2391 + $0xc1] sm:$0xff]
        %v2687 = vld [vmem:[%s2391 + $0xc9] sm:$0xff]
        %v2688 = vld [vmem:[%s2391 + $0xd9] sm:$0xff]
        %v2689 = vld [vmem:[%s2391 + $0xe1] sm:$0xff]
        %v2690 = vld [vmem:[%s2391 + $0xf1] sm:$0xff]
        %v2691 = vld [vmem:[%s2391 + $0xf9] sm:$0xff]
        %v2692 = vld [vmem:[%s2391 + $0x109] sm:$0xff]
        %v2693 = vld [vmem:[%s2391 + $0x111] sm:$0xff]
        %v2694 = vld [vmem:[%s2391 + $0x121] sm:$0xff]
        %v2695 = vld [vmem:[%s2391 + $0x129] sm:$0xff]
        %v2696 = vld [vmem:[%s2391 + $0x139] sm:$0xff]
        %v2697 = vld [vmem:[%s2391 + $0x141] sm:$0xff]
        %v2698 = vld [vmem:[%s2391 + $0x151] sm:$0xff]
        %v2699 = vld [vmem:[%s2391 + $0x159] sm:$0xff]
        %v2700 = vld [vmem:[%s2391 + $0x169] sm:$0xff]
        %v2701 = vld [vmem:[%s2391 + $0x171] sm:$0xff]
        %s2702 = scalar_lea.vmem [#allocation6], 224
        %v2703 = vld [vmem:[%s2702] sm:$0xff]
        %v2704 = vld [vmem:[%s2702 + $0x8] sm:$0xff]
        %v2705 = vld [vmem:[%s2702 + $0x10] sm:$0xff]
        %v2706 = vld [vmem:[%s2702 + $0x18] sm:$0xff]
        %v2708 = vsel %vm699, %v2670, 0
        %v2711 = vsel %vm699, %v2671, 0
        %v2714 = vsel %vm699, %v2672, 0
        %v2717 = vsel %vm699, %v2673, 0
        %v2720 = vsel %vm699, %v2674, 0
        %v2723 = vsel %vm699, %v2675, 0
        %v2726 = vsel %vm699, %v2676, 0
        %v2729 = vsel %vm699, %v2677, 0
        %v2732 = vsel %vm699, %v2678, 0
        %v2735 = vsel %vm699, %v2679, 0
        %v2738 = vsel %vm699, %v2680, 0
        %v2741 = vsel %vm699, %v2681, 0
        %v2744 = vsel %vm699, %v2682, 0
        %v2747 = vsel %vm699, %v2683, 0
        %v2750 = vsel %vm699, %v2684, 0
        %v2753 = vsel %vm699, %v2685, 0
        %v2756 = vsel %vm699, %v2686, 0
        %v2759 = vsel %vm699, %v2687, 0
        %v2762 = vsel %vm699, %v2688, 0
        %v2765 = vsel %vm699, %v2689, 0
        %v2768 = vsel %vm699, %v2690, 0
        %v2771 = vsel %vm699, %v2691, 0
        %v2774 = vsel %vm699, %v2692, 0
        %v2777 = vsel %vm699, %v2693, 0
        %v2780 = vsel %vm699, %v2694, 0
        %v2783 = vsel %vm699, %v2695, 0
        %v2786 = vsel %vm699, %v2696, 0
        %v2789 = vsel %vm699, %v2697, 0
        %v2792 = vsel %vm699, %v2698, 0
        %v2795 = vsel %vm699, %v2699, 0
        %v2798 = vsel %vm699, %v2700, 0
        %v2801 = vsel %vm699, %v2701, 0
        %2803 = vmatpush.msra.mxu0 0.0
        %2804 = vmatpush.msra.mxu0 0.0
        %2805 = vmatpush.msra.mxu0 0.0
        %2806 = vmatpush.msra.mxu0 0.0
        %2807 = vmatpush.msra.mxu0 0.0
        %2808 = vmatpush.msra.mxu0 0.0
        %2809 = vmatpush.msra.mxu0 0.0
        %2810 = vmatpush.msra.mxu0 0.0
        %2811 = vmatpush.msra.mxu0 0.0
        %2812 = vmatpush.msra.mxu0 0.0
        %2813 = vmatpush.msra.mxu0 0.0
        %2814 = vmatpush.msra.mxu0 0.0
        %2815 = vmatpush.msra.mxu0 %v2706
        %2816 = vmatpush.msra.mxu0 %v2705
        %2817 = vmatpush.msra.mxu0 %v2704
        %2818 = vmatpush.msra.mxu0 %v2703
        %2819 = vmatmul.f32.gmra.mxu0 %v2708
        %v2820 = vpop.f32.mrf.mxu0
        %v2821 = vadd.f32 0.0, %v2820
        %2822 = vmatmul.f32.gmra.mxu0 %v2711
        %v2823 = vpop.f32.mrf.mxu0
        %v2824 = vadd.f32 0.0, %v2823
        %2825 = vmatmul.f32.gmra.mxu0 %v2714
        %v2826 = vpop.f32.mrf.mxu0
        %v2827 = vadd.f32 0.0, %v2826
        %2828 = vmatmul.f32.gmra.mxu0 %v2717
        %v2829 = vpop.f32.mrf.mxu0
        %v2830 = vadd.f32 0.0, %v2829
        %2831 = vmatmul.f32.gmra.mxu0 %v2720
        %v2832 = vpop.f32.mrf.mxu0
        %v2833 = vadd.f32 0.0, %v2832
        %2834 = vmatmul.f32.gmra.mxu0 %v2723
        %v2835 = vpop.f32.mrf.mxu0
        %v2836 = vadd.f32 0.0, %v2835
        %2837 = vmatmul.f32.gmra.mxu0 %v2726
        %v2838 = vpop.f32.mrf.mxu0
        %v2839 = vadd.f32 0.0, %v2838
        %2840 = vmatmul.f32.gmra.mxu0 %v2729
        %v2841 = vpop.f32.mrf.mxu0
        %v2842 = vadd.f32 0.0, %v2841
        %2843 = vmatmul.f32.gmra.mxu0 %v2732
        %v2844 = vpop.f32.mrf.mxu0
        %v2845 = vadd.f32 0.0, %v2844
        %2846 = vmatmul.f32.gmra.mxu0 %v2735
        %v2847 = vpop.f32.mrf.mxu0
        %v2848 = vadd.f32 0.0, %v2847
        %2849 = vmatmul.f32.gmra.mxu0 %v2738
        %v2850 = vpop.f32.mrf.mxu0
        %v2851 = vadd.f32 0.0, %v2850
        %2852 = vmatmul.f32.gmra.mxu0 %v2741
        %v2853 = vpop.f32.mrf.mxu0
        %v2854 = vadd.f32 0.0, %v2853
        %2855 = vmatmul.f32.gmra.mxu0 %v2744
        %v2856 = vpop.f32.mrf.mxu0
        %v2857 = vadd.f32 0.0, %v2856
        %2858 = vmatmul.f32.gmra.mxu0 %v2747
        %v2859 = vpop.f32.mrf.mxu0
        %v2860 = vadd.f32 0.0, %v2859
        %2861 = vmatmul.f32.gmra.mxu0 %v2750
        %v2862 = vpop.f32.mrf.mxu0
        %v2863 = vadd.f32 0.0, %v2862
        %2864 = vmatmul.f32.gmra.mxu0 %v2753
        %v2865 = vpop.f32.mrf.mxu0
        %v2866 = vadd.f32 0.0, %v2865
        %2867 = vmatmul.f32.gmra.mxu0 %v2756
        %v2868 = vpop.f32.mrf.mxu0
        %v2869 = vadd.f32 0.0, %v2868
        %2870 = vmatmul.f32.gmra.mxu0 %v2759
        %v2871 = vpop.f32.mrf.mxu0
        %v2872 = vadd.f32 0.0, %v2871
        %2873 = vmatmul.f32.gmra.mxu0 %v2762
        %v2874 = vpop.f32.mrf.mxu0
        %v2875 = vadd.f32 0.0, %v2874
        %2876 = vmatmul.f32.gmra.mxu0 %v2765
        %v2877 = vpop.f32.mrf.mxu0
        %v2878 = vadd.f32 0.0, %v2877
        %2879 = vmatmul.f32.gmra.mxu0 %v2768
        %v2880 = vpop.f32.mrf.mxu0
        %v2881 = vadd.f32 0.0, %v2880
        %2882 = vmatmul.f32.gmra.mxu0 %v2771
        %v2883 = vpop.f32.mrf.mxu0
        %v2884 = vadd.f32 0.0, %v2883
        %2885 = vmatmul.f32.gmra.mxu0 %v2774
        %v2886 = vpop.f32.mrf.mxu0
        %v2887 = vadd.f32 0.0, %v2886
        %2888 = vmatmul.f32.gmra.mxu0 %v2777
        %v2889 = vpop.f32.mrf.mxu0
        %v2890 = vadd.f32 0.0, %v2889
        %2891 = vmatmul.f32.gmra.mxu0 %v2780
        %v2892 = vpop.f32.mrf.mxu0
        %v2893 = vadd.f32 0.0, %v2892
        %2894 = vmatmul.f32.gmra.mxu0 %v2783
        %v2895 = vpop.f32.mrf.mxu0
        %v2896 = vadd.f32 0.0, %v2895
        %2897 = vmatmul.f32.gmra.mxu0 %v2786
        %v2898 = vpop.f32.mrf.mxu0
        %v2899 = vadd.f32 0.0, %v2898
        %2900 = vmatmul.f32.gmra.mxu0 %v2789
        %v2901 = vpop.f32.mrf.mxu0
        %v2902 = vadd.f32 0.0, %v2901
        %2903 = vmatmul.f32.gmra.mxu0 %v2792
        %v2904 = vpop.f32.mrf.mxu0
        %v2905 = vadd.f32 0.0, %v2904
        %2906 = vmatmul.f32.gmra.mxu0 %v2795
        %v2907 = vpop.f32.mrf.mxu0
        %v2908 = vadd.f32 0.0, %v2907
        %2909 = vmatmul.f32.gmra.mxu0 %v2798
        %v2910 = vpop.f32.mrf.mxu0
        %v2911 = vadd.f32 0.0, %v2910
        %2912 = vmatmul.f32.gmra.mxu0 %v2801
        %v2913 = vpop.f32.mrf.mxu0
        %v2914 = vadd.f32 0.0, %v2913
        %2915 = vdwg.mxu0
        %v2916 = vadd.f32 %v2638, %v2821
        %v2917 = vadd.f32 %v2639, %v2824
        %v2918 = vadd.f32 %v2640, %v2827
        %v2919 = vadd.f32 %v2641, %v2830
        %v2920 = vadd.f32 %v2642, %v2833
        %v2921 = vadd.f32 %v2643, %v2836
        %v2922 = vadd.f32 %v2644, %v2839
        %v2923 = vadd.f32 %v2645, %v2842
        %v2924 = vadd.f32 %v2646, %v2845
        %v2925 = vadd.f32 %v2647, %v2848
        %v2926 = vadd.f32 %v2648, %v2851
        %v2927 = vadd.f32 %v2649, %v2854
        %v2928 = vadd.f32 %v2650, %v2857
        %v2929 = vadd.f32 %v2651, %v2860
        %v2930 = vadd.f32 %v2652, %v2863
        %v2931 = vadd.f32 %v2653, %v2866
        %v2932 = vadd.f32 %v2654, %v2869
        %v2933 = vadd.f32 %v2655, %v2872
        %v2934 = vadd.f32 %v2656, %v2875
        %v2935 = vadd.f32 %v2657, %v2878
        %v2936 = vadd.f32 %v2658, %v2881
        %v2937 = vadd.f32 %v2659, %v2884
        %v2938 = vadd.f32 %v2660, %v2887
        %v2939 = vadd.f32 %v2661, %v2890
        %v2940 = vadd.f32 %v2662, %v2893
        %v2941 = vadd.f32 %v2663, %v2896
        %v2942 = vadd.f32 %v2664, %v2899
        %v2943 = vadd.f32 %v2665, %v2902
        %v2944 = vadd.f32 %v2666, %v2905
        %v2945 = vadd.f32 %v2667, %v2908
        %v2946 = vadd.f32 %v2668, %v2911
        %v2947 = vadd.f32 %v2669, %v2914
        %v2948 = vld [vmem:[%s2391 + $0x2] sm:$0xff]
        %v2949 = vld [vmem:[%s2391 + $0xa] sm:$0xff]
        %v2950 = vld [vmem:[%s2391 + $0x1a] sm:$0xff]
        %v2951 = vld [vmem:[%s2391 + $0x22] sm:$0xff]
        %v2952 = vld [vmem:[%s2391 + $0x32] sm:$0xff]
        %v2953 = vld [vmem:[%s2391 + $0x3a] sm:$0xff]
        %v2954 = vld [vmem:[%s2391 + $0x4a] sm:$0xff]
        %v2955 = vld [vmem:[%s2391 + $0x52] sm:$0xff]
        %v2956 = vld [vmem:[%s2391 + $0x62] sm:$0xff]
        %v2957 = vld [vmem:[%s2391 + $0x6a] sm:$0xff]
        %v2958 = vld [vmem:[%s2391 + $0x7a] sm:$0xff]
        %v2959 = vld [vmem:[%s2391 + $0x82] sm:$0xff]
        %v2960 = vld [vmem:[%s2391 + $0x92] sm:$0xff]
        %v2961 = vld [vmem:[%s2391 + $0x9a] sm:$0xff]
        %v2962 = vld [vmem:[%s2391 + $0xaa] sm:$0xff]
        %v2963 = vld [vmem:[%s2391 + $0xb2] sm:$0xff]
        %v2964 = vld [vmem:[%s2391 + $0xc2] sm:$0xff]
        %v2965 = vld [vmem:[%s2391 + $0xca] sm:$0xff]
        %v2966 = vld [vmem:[%s2391 + $0xda] sm:$0xff]
        %v2967 = vld [vmem:[%s2391 + $0xe2] sm:$0xff]
        %v2968 = vld [vmem:[%s2391 + $0xf2] sm:$0xff]
        %v2969 = vld [vmem:[%s2391 + $0xfa] sm:$0xff]
        %v2970 = vld [vmem:[%s2391 + $0x10a] sm:$0xff]
        %v2971 = vld [vmem:[%s2391 + $0x112] sm:$0xff]
        %v2972 = vld [vmem:[%s2391 + $0x122] sm:$0xff]
        %v2973 = vld [vmem:[%s2391 + $0x12a] sm:$0xff]
        %v2974 = vld [vmem:[%s2391 + $0x13a] sm:$0xff]
        %v2975 = vld [vmem:[%s2391 + $0x142] sm:$0xff]
        %v2976 = vld [vmem:[%s2391 + $0x152] sm:$0xff]
        %v2977 = vld [vmem:[%s2391 + $0x15a] sm:$0xff]
        %v2978 = vld [vmem:[%s2391 + $0x16a] sm:$0xff]
        %v2979 = vld [vmem:[%s2391 + $0x172] sm:$0xff]
        %s2980 = scalar_lea.vmem [#allocation6], 256
        %v2981 = vld [vmem:[%s2980] sm:$0xff]
        %v2982 = vld [vmem:[%s2980 + $0x8] sm:$0xff]
        %v2983 = vld [vmem:[%s2980 + $0x10] sm:$0xff]
        %v2984 = vld [vmem:[%s2980 + $0x18] sm:$0xff]
        %v2986 = vsel %vm699, %v2948, 0
        %v2989 = vsel %vm699, %v2949, 0
        %v2992 = vsel %vm699, %v2950, 0
        %v2995 = vsel %vm699, %v2951, 0
        %v2998 = vsel %vm699, %v2952, 0
        %v3001 = vsel %vm699, %v2953, 0
        %v3004 = vsel %vm699, %v2954, 0
        %v3007 = vsel %vm699, %v2955, 0
        %v3010 = vsel %vm699, %v2956, 0
        %v3013 = vsel %vm699, %v2957, 0
        %v3016 = vsel %vm699, %v2958, 0
        %v3019 = vsel %vm699, %v2959, 0
        %v3022 = vsel %vm699, %v2960, 0
        %v3025 = vsel %vm699, %v2961, 0
        %v3028 = vsel %vm699, %v2962, 0
        %v3031 = vsel %vm699, %v2963, 0
        %v3034 = vsel %vm699, %v2964, 0
        %v3037 = vsel %vm699, %v2965, 0
        %v3040 = vsel %vm699, %v2966, 0
        %v3043 = vsel %vm699, %v2967, 0
        %v3046 = vsel %vm699, %v2968, 0
        %v3049 = vsel %vm699, %v2969, 0
        %v3052 = vsel %vm699, %v2970, 0
        %v3055 = vsel %vm699, %v2971, 0
        %v3058 = vsel %vm699, %v2972, 0
        %v3061 = vsel %vm699, %v2973, 0
        %v3064 = vsel %vm699, %v2974, 0
        %v3067 = vsel %vm699, %v2975, 0
        %v3070 = vsel %vm699, %v2976, 0
        %v3073 = vsel %vm699, %v2977, 0
        %v3076 = vsel %vm699, %v2978, 0
        %v3079 = vsel %vm699, %v2979, 0
        %3081 = vmatpush.msra.mxu0 0.0
        %3082 = vmatpush.msra.mxu0 0.0
        %3083 = vmatpush.msra.mxu0 0.0
        %3084 = vmatpush.msra.mxu0 0.0
        %3085 = vmatpush.msra.mxu0 0.0
        %3086 = vmatpush.msra.mxu0 0.0
        %3087 = vmatpush.msra.mxu0 0.0
        %3088 = vmatpush.msra.mxu0 0.0
        %3089 = vmatpush.msra.mxu0 0.0
        %3090 = vmatpush.msra.mxu0 0.0
        %3091 = vmatpush.msra.mxu0 0.0
        %3092 = vmatpush.msra.mxu0 0.0
        %3093 = vmatpush.msra.mxu0 %v2984
        %3094 = vmatpush.msra.mxu0 %v2983
        %3095 = vmatpush.msra.mxu0 %v2982
        %3096 = vmatpush.msra.mxu0 %v2981
        %3097 = vmatmul.f32.gmra.mxu0 %v2986
        %v3098 = vpop.f32.mrf.mxu0
        %v3099 = vadd.f32 0.0, %v3098
        %3100 = vmatmul.f32.gmra.mxu0 %v2989
        %v3101 = vpop.f32.mrf.mxu0
        %v3102 = vadd.f32 0.0, %v3101
        %3103 = vmatmul.f32.gmra.mxu0 %v2992
        %v3104 = vpop.f32.mrf.mxu0
        %v3105 = vadd.f32 0.0, %v3104
        %3106 = vmatmul.f32.gmra.mxu0 %v2995
        %v3107 = vpop.f32.mrf.mxu0
        %v3108 = vadd.f32 0.0, %v3107
        %3109 = vmatmul.f32.gmra.mxu0 %v2998
        %v3110 = vpop.f32.mrf.mxu0
        %v3111 = vadd.f32 0.0, %v3110
        %3112 = vmatmul.f32.gmra.mxu0 %v3001
        %v3113 = vpop.f32.mrf.mxu0
        %v3114 = vadd.f32 0.0, %v3113
        %3115 = vmatmul.f32.gmra.mxu0 %v3004
        %v3116 = vpop.f32.mrf.mxu0
        %v3117 = vadd.f32 0.0, %v3116
        %3118 = vmatmul.f32.gmra.mxu0 %v3007
        %v3119 = vpop.f32.mrf.mxu0
        %v3120 = vadd.f32 0.0, %v3119
        %3121 = vmatmul.f32.gmra.mxu0 %v3010
        %v3122 = vpop.f32.mrf.mxu0
        %v3123 = vadd.f32 0.0, %v3122
        %3124 = vmatmul.f32.gmra.mxu0 %v3013
        %v3125 = vpop.f32.mrf.mxu0
        %v3126 = vadd.f32 0.0, %v3125
        %3127 = vmatmul.f32.gmra.mxu0 %v3016
        %v3128 = vpop.f32.mrf.mxu0
        %v3129 = vadd.f32 0.0, %v3128
        %3130 = vmatmul.f32.gmra.mxu0 %v3019
        %v3131 = vpop.f32.mrf.mxu0
        %v3132 = vadd.f32 0.0, %v3131
        %3133 = vmatmul.f32.gmra.mxu0 %v3022
        %v3134 = vpop.f32.mrf.mxu0
        %v3135 = vadd.f32 0.0, %v3134
        %3136 = vmatmul.f32.gmra.mxu0 %v3025
        %v3137 = vpop.f32.mrf.mxu0
        %v3138 = vadd.f32 0.0, %v3137
        %3139 = vmatmul.f32.gmra.mxu0 %v3028
        %v3140 = vpop.f32.mrf.mxu0
        %v3141 = vadd.f32 0.0, %v3140
        %3142 = vmatmul.f32.gmra.mxu0 %v3031
        %v3143 = vpop.f32.mrf.mxu0
        %v3144 = vadd.f32 0.0, %v3143
        %3145 = vmatmul.f32.gmra.mxu0 %v3034
        %v3146 = vpop.f32.mrf.mxu0
        %v3147 = vadd.f32 0.0, %v3146
        %3148 = vmatmul.f32.gmra.mxu0 %v3037
        %v3149 = vpop.f32.mrf.mxu0
        %v3150 = vadd.f32 0.0, %v3149
        %3151 = vmatmul.f32.gmra.mxu0 %v3040
        %v3152 = vpop.f32.mrf.mxu0
        %v3153 = vadd.f32 0.0, %v3152
        %3154 = vmatmul.f32.gmra.mxu0 %v3043
        %v3155 = vpop.f32.mrf.mxu0
        %v3156 = vadd.f32 0.0, %v3155
        %3157 = vmatmul.f32.gmra.mxu0 %v3046
        %v3158 = vpop.f32.mrf.mxu0
        %v3159 = vadd.f32 0.0, %v3158
        %3160 = vmatmul.f32.gmra.mxu0 %v3049
        %v3161 = vpop.f32.mrf.mxu0
        %v3162 = vadd.f32 0.0, %v3161
        %3163 = vmatmul.f32.gmra.mxu0 %v3052
        %v3164 = vpop.f32.mrf.mxu0
        %v3165 = vadd.f32 0.0, %v3164
        %3166 = vmatmul.f32.gmra.mxu0 %v3055
        %v3167 = vpop.f32.mrf.mxu0
        %v3168 = vadd.f32 0.0, %v3167
        %3169 = vmatmul.f32.gmra.mxu0 %v3058
        %v3170 = vpop.f32.mrf.mxu0
        %v3171 = vadd.f32 0.0, %v3170
        %3172 = vmatmul.f32.gmra.mxu0 %v3061
        %v3173 = vpop.f32.mrf.mxu0
        %v3174 = vadd.f32 0.0, %v3173
        %3175 = vmatmul.f32.gmra.mxu0 %v3064
        %v3176 = vpop.f32.mrf.mxu0
        %v3177 = vadd.f32 0.0, %v3176
        %3178 = vmatmul.f32.gmra.mxu0 %v3067
        %v3179 = vpop.f32.mrf.mxu0
        %v3180 = vadd.f32 0.0, %v3179
        %3181 = vmatmul.f32.gmra.mxu0 %v3070
        %v3182 = vpop.f32.mrf.mxu0
        %v3183 = vadd.f32 0.0, %v3182
        %3184 = vmatmul.f32.gmra.mxu0 %v3073
        %v3185 = vpop.f32.mrf.mxu0
        %v3186 = vadd.f32 0.0, %v3185
        %3187 = vmatmul.f32.gmra.mxu0 %v3076
        %v3188 = vpop.f32.mrf.mxu0
        %v3189 = vadd.f32 0.0, %v3188
        %3190 = vmatmul.f32.gmra.mxu0 %v3079
        %v3191 = vpop.f32.mrf.mxu0
        %v3192 = vadd.f32 0.0, %v3191
        %3193 = vdwg.mxu0
        %v3194 = vadd.f32 %v2916, %v3099
        %v3195 = vadd.f32 %v2917, %v3102
        %v3196 = vadd.f32 %v2918, %v3105
        %v3197 = vadd.f32 %v2919, %v3108
        %v3198 = vadd.f32 %v2920, %v3111
        %v3199 = vadd.f32 %v2921, %v3114
        %v3200 = vadd.f32 %v2922, %v3117
        %v3201 = vadd.f32 %v2923, %v3120
        %v3202 = vadd.f32 %v2924, %v3123
        %v3203 = vadd.f32 %v2925, %v3126
        %v3204 = vadd.f32 %v2926, %v3129
        %v3205 = vadd.f32 %v2927, %v3132
        %v3206 = vadd.f32 %v2928, %v3135
        %v3207 = vadd.f32 %v2929, %v3138
        %v3208 = vadd.f32 %v2930, %v3141
        %v3209 = vadd.f32 %v2931, %v3144
        %v3210 = vadd.f32 %v2932, %v3147
        %v3211 = vadd.f32 %v2933, %v3150
        %v3212 = vadd.f32 %v2934, %v3153
        %v3213 = vadd.f32 %v2935, %v3156
        %v3214 = vadd.f32 %v2936, %v3159
        %v3215 = vadd.f32 %v2937, %v3162
        %v3216 = vadd.f32 %v2938, %v3165
        %v3217 = vadd.f32 %v2939, %v3168
        %v3218 = vadd.f32 %v2940, %v3171
        %v3219 = vadd.f32 %v2941, %v3174
        %v3220 = vadd.f32 %v2942, %v3177
        %v3221 = vadd.f32 %v2943, %v3180
        %v3222 = vadd.f32 %v2944, %v3183
        %v3223 = vadd.f32 %v2945, %v3186
        %v3224 = vadd.f32 %v2946, %v3189
        %v3225 = vadd.f32 %v2947, %v3192
        %v3226 = vld [vmem:[%s4] sm:$0x1]
        %v3228 = vperm.slane %v3226, 0
        %v3230 = vadd.f32 %v3194, %v3228
        %v3231 = vadd.f32 %v3195, %v3228
        %v3232 = vadd.f32 %v3196, %v3228
        %v3233 = vadd.f32 %v3197, %v3228
        %v3234 = vadd.f32 %v3198, %v3228
        %v3235 = vadd.f32 %v3199, %v3228
        %v3236 = vadd.f32 %v3200, %v3228
        %v3237 = vadd.f32 %v3201, %v3228
        %v3238 = vadd.f32 %v3202, %v3228
        %v3239 = vadd.f32 %v3203, %v3228
        %v3240 = vadd.f32 %v3204, %v3228
        %v3241 = vadd.f32 %v3205, %v3228
        %v3242 = vadd.f32 %v3206, %v3228
        %v3243 = vadd.f32 %v3207, %v3228
        %v3244 = vadd.f32 %v3208, %v3228
        %v3245 = vadd.f32 %v3209, %v3228
        %v3246 = vadd.f32 %v3210, %v3228
        %v3247 = vadd.f32 %v3211, %v3228
        %v3248 = vadd.f32 %v3212, %v3228
        %v3249 = vadd.f32 %v3213, %v3228
        %v3250 = vadd.f32 %v3214, %v3228
        %v3251 = vadd.f32 %v3215, %v3228
        %v3252 = vadd.f32 %v3216, %v3228
        %v3253 = vadd.f32 %v3217, %v3228
        %v3254 = vadd.f32 %v3218, %v3228
        %v3255 = vadd.f32 %v3219, %v3228
        %v3256 = vadd.f32 %v3220, %v3228
        %v3257 = vadd.f32 %v3221, %v3228
        %v3258 = vadd.f32 %v3222, %v3228
        %v3259 = vadd.f32 %v3223, %v3228
        %v3260 = vadd.f32 %v3224, %v3228
        %v3261 = vadd.f32 %v3225, %v3228
        %v3262 = vmax.f32 %v3230, 0.0
        %v3263 = vmax.f32 %v3231, 0.0
        %v3264 = vmax.f32 %v3232, 0.0
        %v3265 = vmax.f32 %v3233, 0.0
        %v3266 = vmax.f32 %v3234, 0.0
        %v3267 = vmax.f32 %v3235, 0.0
        %v3268 = vmax.f32 %v3236, 0.0
        %v3269 = vmax.f32 %v3237, 0.0
        %v3270 = vmax.f32 %v3238, 0.0
        %v3271 = vmax.f32 %v3239, 0.0
        %v3272 = vmax.f32 %v3240, 0.0
        %v3273 = vmax.f32 %v3241, 0.0
        %v3274 = vmax.f32 %v3242, 0.0
        %v3275 = vmax.f32 %v3243, 0.0
        %v3276 = vmax.f32 %v3244, 0.0
        %v3277 = vmax.f32 %v3245, 0.0
        %v3278 = vmax.f32 %v3246, 0.0
        %v3279 = vmax.f32 %v3247, 0.0
        %v3280 = vmax.f32 %v3248, 0.0
        %v3281 = vmax.f32 %v3249, 0.0
        %v3282 = vmax.f32 %v3250, 0.0
        %v3283 = vmax.f32 %v3251, 0.0
        %v3284 = vmax.f32 %v3252, 0.0
        %v3285 = vmax.f32 %v3253, 0.0
        %v3286 = vmax.f32 %v3254, 0.0
        %v3287 = vmax.f32 %v3255, 0.0
        %v3288 = vmax.f32 %v3256, 0.0
        %v3289 = vmax.f32 %v3257, 0.0
        %v3290 = vmax.f32 %v3258, 0.0
        %v3291 = vmax.f32 %v3259, 0.0
        %v3292 = vmax.f32 %v3260, 0.0
        %v3293 = vmax.f32 %v3261, 0.0
        %v3294 = vld [vmem:[#allocation8] sm:$0xff]
        %v3295 = vld [vmem:[#allocation8 + $0x8] sm:$0xff]
        %v3296 = vld [vmem:[#allocation8 + $0x10] sm:$0xff]
        %v3297 = vld [vmem:[#allocation8 + $0x18] sm:$0xff]
        %v3298 = vld [vmem:[#allocation8 + $0x20] sm:$0xff]
        %v3299 = vld [vmem:[#allocation8 + $0x28] sm:$0xff]
        %v3300 = vld [vmem:[#allocation8 + $0x30] sm:$0xff]
        %v3301 = vld [vmem:[#allocation8 + $0x38] sm:$0xff]
        %v3302 = vld [vmem:[#allocation8 + $0x40] sm:$0xff]
        %v3303 = vld [vmem:[#allocation8 + $0x48] sm:$0xff]
        %v3304 = vld [vmem:[#allocation8 + $0x50] sm:$0xff]
        %v3305 = vld [vmem:[#allocation8 + $0x58] sm:$0xff]
        %v3306 = vld [vmem:[#allocation8 + $0x60] sm:$0xff]
        %v3307 = vld [vmem:[#allocation8 + $0x68] sm:$0xff]
        %v3308 = vld [vmem:[#allocation8 + $0x70] sm:$0xff]
        %v3309 = vld [vmem:[#allocation8 + $0x78] sm:$0xff]
        %3310 = vmatpush.msra.mxu0 %v3277
        %3311 = vmatpush.msra.mxu0 %v3276
        %3312 = vmatpush.msra.mxu0 %v3275
        %3313 = vmatpush.msra.mxu0 %v3274
        %3314 = vmatpush.msra.mxu0 %v3273
        %3315 = vmatpush.msra.mxu0 %v3272
        %3316 = vmatpush.msra.mxu0 %v3271
        %3317 = vmatpush.msra.mxu0 %v3270
        %3318 = vmatpush.msra.mxu0 %v3269
        %3319 = vmatpush.msra.mxu0 %v3268
        %3320 = vmatpush.msra.mxu0 %v3267
        %3321 = vmatpush.msra.mxu0 %v3266
        %3322 = vmatpush.msra.mxu0 %v3265
        %3323 = vmatpush.msra.mxu0 %v3264
        %3324 = vmatpush.msra.mxu0 %v3263
        %3325 = vmatpush.msra.mxu0 %v3262
        %3326 = vmatmul.f32.gmra.mxu0 %v3294
        %v3327 = vpop.f32.mrf.mxu0
        %v3328 = vadd.f32 0.0, %v3327
        %3329 = vmatmul.f32.gmra.mxu0 %v3296
        %v3330 = vpop.f32.mrf.mxu0
        %v3331 = vadd.f32 0.0, %v3330
        %3332 = vmatmul.f32.gmra.mxu0 %v3298
        %v3333 = vpop.f32.mrf.mxu0
        %v3334 = vadd.f32 0.0, %v3333
        %3335 = vmatmul.f32.gmra.mxu0 %v3300
        %v3336 = vpop.f32.mrf.mxu0
        %v3337 = vadd.f32 0.0, %v3336
        %3338 = vmatmul.f32.gmra.mxu0 %v3302
        %v3339 = vpop.f32.mrf.mxu0
        %v3340 = vadd.f32 0.0, %v3339
        %3341 = vmatmul.f32.gmra.mxu0 %v3304
        %v3342 = vpop.f32.mrf.mxu0
        %v3343 = vadd.f32 0.0, %v3342
        %3344 = vmatmul.f32.gmra.mxu0 %v3306
        %v3345 = vpop.f32.mrf.mxu0
        %v3346 = vadd.f32 0.0, %v3345
        %3347 = vmatmul.f32.gmra.mxu0 %v3308
        %v3348 = vpop.f32.mrf.mxu0
        %v3349 = vadd.f32 0.0, %v3348
        %3350 = vdwg.mxu0
        %3351 = vmatpush.msra.mxu0 %v3293
        %3352 = vmatpush.msra.mxu0 %v3292
        %3353 = vmatpush.msra.mxu0 %v3291
        %3354 = vmatpush.msra.mxu0 %v3290
        %3355 = vmatpush.msra.mxu0 %v3289
        %3356 = vmatpush.msra.mxu0 %v3288
        %3357 = vmatpush.msra.mxu0 %v3287
        %3358 = vmatpush.msra.mxu0 %v3286
        %3359 = vmatpush.msra.mxu0 %v3285
        %3360 = vmatpush.msra.mxu0 %v3284
        %3361 = vmatpush.msra.mxu0 %v3283
        %3362 = vmatpush.msra.mxu0 %v3282
        %3363 = vmatpush.msra.mxu0 %v3281
        %3364 = vmatpush.msra.mxu0 %v3280
        %3365 = vmatpush.msra.mxu0 %v3279
        %3366 = vmatpush.msra.mxu0 %v3278
        %3367 = vmatmul.f32.gmra.mxu0 %v3295
        %v3368 = vpop.f32.mrf.mxu0
        %v3369 = vadd.f32 %v3328, %v3368
        %3370 = vmatmul.f32.gmra.mxu0 %v3297
        %v3371 = vpop.f32.mrf.mxu0
        %v3372 = vadd.f32 %v3331, %v3371
        %3373 = vmatmul.f32.gmra.mxu0 %v3299
        %v3374 = vpop.f32.mrf.mxu0
        %v3375 = vadd.f32 %v3334, %v3374
        %3376 = vmatmul.f32.gmra.mxu0 %v3301
        %v3377 = vpop.f32.mrf.mxu0
        %v3378 = vadd.f32 %v3337, %v3377
        %3379 = vmatmul.f32.gmra.mxu0 %v3303
        %v3380 = vpop.f32.mrf.mxu0
        %v3381 = vadd.f32 %v3340, %v3380
        %3382 = vmatmul.f32.gmra.mxu0 %v3305
        %v3383 = vpop.f32.mrf.mxu0
        %v3384 = vadd.f32 %v3343, %v3383
        %3385 = vmatmul.f32.gmra.mxu0 %v3307
        %v3386 = vpop.f32.mrf.mxu0
        %v3387 = vadd.f32 %v3346, %v3386
        %3388 = vmatmul.f32.gmra.mxu0 %v3309
        %v3389 = vpop.f32.mrf.mxu0
        %v3390 = vadd.f32 %v3349, %v3389
        %3391 = vdwg.mxu0
        %v3392 = vld [vmem:[%s6] sm:$0xff]
        %v3393 = vld [vmem:[%s6 + $0x8] sm:$0xff]
        %v3394 = vld [vmem:[%s6 + $0x10] sm:$0xff]
        %v3395 = vld [vmem:[%s6 + $0x18] sm:$0xff]
        %v3396 = vld [vmem:[%s7] sm:$0x1]
        %v3398 = vperm.slane %v3396, 0
        %v3401 = vsel %vm699, %v3369, 0
        %v3404 = vsel %vm699, %v3372, 0
        %v3407 = vsel %vm699, %v3375, 0
        %v3410 = vsel %vm699, %v3378, 0
        %v3413 = vsel %vm699, %v3381, 0
        %v3416 = vsel %vm699, %v3384, 0
        %v3419 = vsel %vm699, %v3387, 0
        %v3422 = vsel %vm699, %v3390, 0
        %3424 = vmatpush.msra.mxu0 0.0
        %3425 = vmatpush.msra.mxu0 0.0
        %3426 = vmatpush.msra.mxu0 0.0
        %3427 = vmatpush.msra.mxu0 0.0
        %3428 = vmatpush.msra.mxu0 0.0
        %3429 = vmatpush.msra.mxu0 0.0
        %3430 = vmatpush.msra.mxu0 0.0
        %3431 = vmatpush.msra.mxu0 0.0
        %3432 = vmatpush.msra.mxu0 0.0
        %3433 = vmatpush.msra.mxu0 0.0
        %3434 = vmatpush.msra.mxu0 0.0
        %3435 = vmatpush.msra.mxu0 0.0
        %3436 = vmatpush.msra.mxu0 %v3395
        %3437 = vmatpush.msra.mxu0 %v3394
        %3438 = vmatpush.msra.mxu0 %v3393
        %3439 = vmatpush.msra.mxu0 %v3392
        %3440 = vmatmul.f32.gmra.mxu0 %v3401
        %v3441 = vpop.f32.mrf.mxu0
        %v3442 = vadd.f32 %v3398, %v3441
        %3443 = vmatmul.f32.gmra.mxu0 %v3404
        %v3444 = vpop.f32.mrf.mxu0
        %v3445 = vadd.f32 %v3398, %v3444
        %3446 = vmatmul.f32.gmra.mxu0 %v3407
        %v3447 = vpop.f32.mrf.mxu0
        %v3448 = vadd.f32 %v3398, %v3447
        %3449 = vmatmul.f32.gmra.mxu0 %v3410
        %v3450 = vpop.f32.mrf.mxu0
        %v3451 = vadd.f32 %v3398, %v3450
        %3452 = vmatmul.f32.gmra.mxu0 %v3413
        %v3453 = vpop.f32.mrf.mxu0
        %v3454 = vadd.f32 %v3398, %v3453
        %3455 = vmatmul.f32.gmra.mxu0 %v3416
        %v3456 = vpop.f32.mrf.mxu0
        %v3457 = vadd.f32 %v3398, %v3456
        %3458 = vmatmul.f32.gmra.mxu0 %v3419
        %v3459 = vpop.f32.mrf.mxu0
        %v3460 = vadd.f32 %v3398, %v3459
        %3461 = vmatmul.f32.gmra.mxu0 %v3422
        %v3462 = vpop.f32.mrf.mxu0
        %v3463 = vadd.f32 %v3398, %v3462
        %3464 = vdwg.mxu0
        %3465 = vmatpush.msra.mxu0 %v428
        %3466 = vmatpush.msra.mxu0 %v427
        %3467 = vmatpush.msra.mxu0 %v426
        %3468 = vmatpush.msra.mxu0 %v425
        %3469 = vmatpush.msra.mxu0 %v424
        %3470 = vmatpush.msra.mxu0 %v423
        %3471 = vmatpush.msra.mxu0 %v422
        %3472 = vmatpush.msra.mxu0 %v421
        %3473 = vmatpush.msra.mxu0 %v420
        %3474 = vmatpush.msra.mxu0 %v419
        %3475 = vmatpush.msra.mxu0 %v418
        %3476 = vmatpush.msra.mxu0 %v417
        %3477 = vmatpush.msra.mxu0 %v416
        %3478 = vmatpush.msra.mxu0 %v415
        %3479 = vmatpush.msra.mxu0 %v414
        %3480 = vmatpush.msra.mxu0 %v413
        %3481 = vmatmul.f32.gmra.mxu0 %v3294
        %v3482 = vpop.f32.mrf.mxu0
        %v3483 = vadd.f32 0.0, %v3482
        %3484 = vmatmul.f32.gmra.mxu0 %v3296
        %v3485 = vpop.f32.mrf.mxu0
        %v3486 = vadd.f32 0.0, %v3485
        %3487 = vmatmul.f32.gmra.mxu0 %v3298
        %v3488 = vpop.f32.mrf.mxu0
        %v3489 = vadd.f32 0.0, %v3488
        %3490 = vmatmul.f32.gmra.mxu0 %v3300
        %v3491 = vpop.f32.mrf.mxu0
        %v3492 = vadd.f32 0.0, %v3491
        %3493 = vmatmul.f32.gmra.mxu0 %v3302
        %v3494 = vpop.f32.mrf.mxu0
        %v3495 = vadd.f32 0.0, %v3494
        %3496 = vmatmul.f32.gmra.mxu0 %v3304
        %v3497 = vpop.f32.mrf.mxu0
        %v3498 = vadd.f32 0.0, %v3497
        %3499 = vmatmul.f32.gmra.mxu0 %v3306
        %v3500 = vpop.f32.mrf.mxu0
        %v3501 = vadd.f32 0.0, %v3500
        %3502 = vmatmul.f32.gmra.mxu0 %v3308
        %v3503 = vpop.f32.mrf.mxu0
        %v3504 = vadd.f32 0.0, %v3503
        %3505 = vdwg.mxu0
        %3506 = vmatpush.msra.mxu0 %v444
        %3507 = vmatpush.msra.mxu0 %v443
        %3508 = vmatpush.msra.mxu0 %v442
        %3509 = vmatpush.msra.mxu0 %v441
        %3510 = vmatpush.msra.mxu0 %v440
        %3511 = vmatpush.msra.mxu0 %v439
        %3512 = vmatpush.msra.mxu0 %v438
        %3513 = vmatpush.msra.mxu0 %v437
        %3514 = vmatpush.msra.mxu0 %v436
        %3515 = vmatpush.msra.mxu0 %v435
        %3516 = vmatpush.msra.mxu0 %v434
        %3517 = vmatpush.msra.mxu0 %v433
        %3518 = vmatpush.msra.mxu0 %v432
        %3519 = vmatpush.msra.mxu0 %v431
        %3520 = vmatpush.msra.mxu0 %v430
        %3521 = vmatpush.msra.mxu0 %v429
        %3522 = vmatmul.f32.gmra.mxu0 %v3295
        %v3523 = vpop.f32.mrf.mxu0
        %v3524 = vadd.f32 %v3483, %v3523
        %3525 = vmatmul.f32.gmra.mxu0 %v3297
        %v3526 = vpop.f32.mrf.mxu0
        %v3527 = vadd.f32 %v3486, %v3526
        %3528 = vmatmul.f32.gmra.mxu0 %v3299
        %v3529 = vpop.f32.mrf.mxu0
        %v3530 = vadd.f32 %v3489, %v3529
        %3531 = vmatmul.f32.gmra.mxu0 %v3301
        %v3532 = vpop.f32.mrf.mxu0
        %v3533 = vadd.f32 %v3492, %v3532
        %3534 = vmatmul.f32.gmra.mxu0 %v3303
        %v3535 = vpop.f32.mrf.mxu0
        %v3536 = vadd.f32 %v3495, %v3535
        %3537 = vmatmul.f32.gmra.mxu0 %v3305
        %v3538 = vpop.f32.mrf.mxu0
        %v3539 = vadd.f32 %v3498, %v3538
        %3540 = vmatmul.f32.gmra.mxu0 %v3307
        %v3541 = vpop.f32.mrf.mxu0
        %v3542 = vadd.f32 %v3501, %v3541
        %3543 = vmatmul.f32.gmra.mxu0 %v3309
        %v3544 = vpop.f32.mrf.mxu0
        %v3545 = vadd.f32 %v3504, %v3544
        %3546 = vdwg.mxu0
        %v3547 = vld [vmem:[%s8] sm:$0xff]
        %v3548 = vld [vmem:[%s8 + $0x8] sm:$0xff]
        %v3549 = vld [vmem:[%s8 + $0x10] sm:$0xff]
        %v3550 = vld [vmem:[%s8 + $0x18] sm:$0xff]
        %v3551 = vld [vmem:[%s8 + $0x20] sm:$0xff]
        %v3552 = vld [vmem:[%s8 + $0x28] sm:$0xff]
        %v3553 = vld [vmem:[%s8 + $0x30] sm:$0xff]
        %v3554 = vld [vmem:[%s8 + $0x38] sm:$0xff]
        %v3555 = vld [vmem:[%s9] sm:$0x1]
        %v3557 = vperm.slane %v3555, 0
        %v3560 = vsel %vm457, %v3524, 0
        %v3563 = vsel %vm457, %v3527, 0
        %v3566 = vsel %vm457, %v3530, 0
        %v3569 = vsel %vm457, %v3533, 0
        %v3572 = vsel %vm457, %v3536, 0
        %v3575 = vsel %vm457, %v3539, 0
        %v3578 = vsel %vm457, %v3542, 0
        %v3581 = vsel %vm457, %v3545, 0
        %3583 = vmatpush.msra.mxu0 0.0
        %3584 = vmatpush.msra.mxu0 0.0
        %3585 = vmatpush.msra.mxu0 0.0
        %3586 = vmatpush.msra.mxu0 0.0
        %3587 = vmatpush.msra.mxu0 0.0
        %3588 = vmatpush.msra.mxu0 0.0
        %3589 = vmatpush.msra.mxu0 0.0
        %3590 = vmatpush.msra.mxu0 0.0
        %3591 = vmatpush.msra.mxu0 %v3554
        %3592 = vmatpush.msra.mxu0 %v3553
        %3593 = vmatpush.msra.mxu0 %v3552
        %3594 = vmatpush.msra.mxu0 %v3551
        %3595 = vmatpush.msra.mxu0 %v3550
        %3596 = vmatpush.msra.mxu0 %v3549
        %3597 = vmatpush.msra.mxu0 %v3548
        %3598 = vmatpush.msra.mxu0 %v3547
        %3599 = vmatmul.f32.gmra.mxu0 %v3560
        %v3600 = vpop.f32.mrf.mxu0
        %v3601 = vadd.f32 %v3557, %v3600
        %3602 = vmatmul.f32.gmra.mxu0 %v3563
        %v3603 = vpop.f32.mrf.mxu0
        %v3604 = vadd.f32 %v3557, %v3603
        %3605 = vmatmul.f32.gmra.mxu0 %v3566
        %v3606 = vpop.f32.mrf.mxu0
        %v3607 = vadd.f32 %v3557, %v3606
        %3608 = vmatmul.f32.gmra.mxu0 %v3569
        %v3609 = vpop.f32.mrf.mxu0
        %v3610 = vadd.f32 %v3557, %v3609
        %3611 = vmatmul.f32.gmra.mxu0 %v3572
        %v3612 = vpop.f32.mrf.mxu0
        %v3613 = vadd.f32 %v3557, %v3612
        %3614 = vmatmul.f32.gmra.mxu0 %v3575
        %v3615 = vpop.f32.mrf.mxu0
        %v3616 = vadd.f32 %v3557, %v3615
        %3617 = vmatmul.f32.gmra.mxu0 %v3578
        %v3618 = vpop.f32.mrf.mxu0
        %v3619 = vadd.f32 %v3557, %v3618
        %3620 = vmatmul.f32.gmra.mxu0 %v3581
        %v3621 = vpop.f32.mrf.mxu0
        %v3622 = vadd.f32 %v3557, %v3621
        %3623 = vdwg.mxu0
        %v3624 = vadd.f32 %v3442, %v3601
        %v3625 = vadd.f32 %v3445, %v3604
        %v3626 = vadd.f32 %v3448, %v3607
        %v3627 = vadd.f32 %v3451, %v3610
        %v3628 = vadd.f32 %v3454, %v3613
        %v3629 = vadd.f32 %v3457, %v3616
        %v3630 = vadd.f32 %v3460, %v3619
        %v3631 = vadd.f32 %v3463, %v3622
        %v3632 = vmax.f32 %v3624, 0.0
        %v3633 = vmax.f32 %v3625, 0.0
        %v3634 = vmax.f32 %v3626, 0.0
        %v3635 = vmax.f32 %v3627, 0.0
        %v3636 = vmax.f32 %v3628, 0.0
        %v3637 = vmax.f32 %v3629, 0.0
        %v3638 = vmax.f32 %v3630, 0.0
        %v3639 = vmax.f32 %v3631, 0.0
        %3640 = vst [vmem:[%s412] sm:$0xff] %v3632
        %3641 = vst [vmem:[%s412 + $0x8] sm:$0xff] %v3633
        %3642 = vst [vmem:[%s412 + $0x10] sm:$0xff] %v3634
        %3643 = vst [vmem:[%s412 + $0x18] sm:$0xff] %v3635
        %3644 = vst [vmem:[%s412 + $0x20] sm:$0xff] %v3636
        %3645 = vst [vmem:[%s412 + $0x28] sm:$0xff] %v3637
        %3646 = vst [vmem:[%s412 + $0x30] sm:$0xff] %v3638
        %3647 = vst [vmem:[%s412 + $0x38] sm:$0xff] %v3639
        %s3648 = sand.u32 %s251, 1
        %s3649 = scalar_lea.sflag [#allocation5], %s3648
        %s3650 = sand.u32 %s251, 1
        %s3651 = smul.addr %s3650, 64
        %s3652 = scalar_lea.vmem [#allocation9], %s3651
        // Predicated region
        $region73: #{bottleneck_forward.1} parent=59 // pred_check
          %p3653 = pneg %p261
        $region74: #{bottleneck_forward.1} parent=59 // pred_check_branch
          %3655 = sbr.rel (%p3653) target = $region76
        $region75: #{bottleneck_forward.1} parent=59 // pred_region
          %3657 = vsyncadd %s3649, 0
          %s3658 = smul.addr %s28, 8
          %s3659 = smul.addr %s3658, 8
          %s3660 = scalar_lea.hbm %s10, %s3659
          %s3661 = sshll.u32 %s3652, 4
          %s3662 = int_to_ptr.vmem [resolvable:$true] %s3661
          %s3663 = sshll.u32 %s3660, 4
          %s3664 = int_to_ptr.hbm [resolvable:$true] %s3663
          %3669 = dma.vmem_to_hbm [thread:$0]  %s3662, 1024, %s3664, %s3649, 128, 128, 8
        $region76: #{bottleneck_forward.1} parent=59 // pred_fallthru
          _
      $region60: #{bottleneck_forward.1} parent=5 // pred_fallthru
        _
      %p3670 = scmp.le.s32.totalorder 2, %s23
      // Predicated region
      $region77: #{bottleneck_forward.1} parent=5 // pred_check
        %p3671 = pneg %p3670
      $region78: #{bottleneck_forward.1} parent=5 // pred_check_branch
        %3673 = sbr.rel (%p3671) target = $region80
      $region79: #{bottleneck_forward.1} parent=5 // pred_region
        %s3674 = ssub.s32 %s23, 2
        // Predicated region
        $region81: #{bottleneck_forward.1} parent=79 // pred_check
          %p3675 = pneg %p267
        $region82: #{bottleneck_forward.1} parent=79 // pred_check_branch
          %3677 = sbr.rel (%p3675) target = $region84
        $region83: #{bottleneck_forward.1} parent=79 // pred_region
          %s3678 = sand.u32 %s252, 1
          %s3679 = scalar_lea.sflag [#allocation5], %s3678
          %s3680 = sand.u32 %s252, 1
          %s3681 = smul.addr %s3680, 64
          %s3682 = scalar_lea.vmem [#allocation9], %s3681
          %3684 = dma.done %s3679, 1024
        $region84: #{bottleneck_forward.1} parent=79 // pred_fallthru
          _
      $region80: #{bottleneck_forward.1} parent=5 // pred_fallthru
        _
    $region6: #{bottleneck_forward.1} parent=1 // loop_footer
      %s27 = sadd.s32 1, %s23
    $region7: #{bottleneck_forward.1} parent=1 // loop_footer_branch
      %22 = sbr.rel target = $region3
    $region8: #{bottleneck_forward.1} parent=1 // loop_exit
      _
    %3685 = vsyncpa [#allocation4], 1
    %s3686 = scalar_lea.sflag [#allocation4], 1
    %3687 = vsyncpa %s3686, 1
    %3688 = vsyncpa [#allocation7], 1
    %3689 = vsyncpa [#allocation5], 1
    %s3690 = scalar_lea.sflag [#allocation5], 1
    %3691 = vsyncpa %s3690, 1

</llo_original>
